<compile_context>
chip_gen: v6e
topology: v6e:2x2x1
jax: 0.10.0
libtpu: 0.0.40
codegen_flags: <defaults>
</compile_context>

<pallas_src>
import jax
import jax.numpy as jnp
from jax.experimental import pallas as pl
from jax.experimental.pallas import tpu as pltpu


def _round_up(x, m):
    return ((x + m - 1) // m) * m


def state_action_kernel(x_ref, a_ref,
                        w_obs_ref, b_obs_ref,
                        w_act_ref, b_act_ref,
                        w_main_s_ref, w_main_a_ref, b_main_ref,
                        o_ref):
    """One batch tile of the fused StateActionNet forward.

    x_ref        : [block_bs, T, Fin]   state tile (streamed)
    a_ref        : [block_bs, Fa]       action tile (streamed)
    w_obs_ref    : [Fin, Fobs]          observation_net Linear (resident)
    b_obs_ref    : [1, Fobs]            f32
    w_act_ref    : [Fa, Fact]           action_net Linear (resident)
    b_act_ref    : [1, Fact]            f32
    w_main_s_ref : [T, Fobs, Rpad]      main_net weight rows for the state part
    w_main_a_ref : [Fact, Rpad]         main_net weight rows for the action part
    b_main_ref   : [1, Rpad]            f32
    o_ref        : [block_bs, Rpad]
    """
    T = x_ref.shape[1]

    # --- action branch: Linear + ReLU, then its slice of main_net --------------
    act = jnp.dot(a_ref[...], w_act_ref[...], preferred_element_type=jnp.float32)
    act = jnp.maximum(act + b_act_ref[...], 0.0).astype(a_ref.dtype)
    out = jnp.dot(act, w_main_a_ref[...], preferred_element_type=jnp.float32)
    out = out + b_main_ref[...]

    # --- state branch: per-timestep obs encoder + main_net accumulation --------
    # TemporalConcatPooling followed by Linear == sum over t of
    # relu(x_t @ W_obs + b_obs) @ W_main_s[t]; accumulating per timestep avoids
    # the (bs*T, Fobs) -> (bs, T*Fobs) cross-tile relayout entirely.
    w_obs = w_obs_ref[...]          # hoisted out of the unrolled loop
    b_obs = b_obs_ref[...]
    for t in range(T):              # statically unrolled; T is small
        x_t = x_ref[:, t, :]                                     # (block_bs, Fin)
        obs_t = jnp.dot(x_t, w_obs, preferred_element_type=jnp.float32)
        obs_t = jnp.maximum(obs_t + b_obs, 0.0).astype(x_ref.dtype)
        out = out + jnp.dot(obs_t, w_main_s_ref[t],               # (Fobs, Rpad) free slice
                            preferred_element_type=jnp.float32)

    o_ref[...] = jnp.maximum(out, 0.0).astype(o_ref.dtype)        # main_net ReLU


def state_action_forward(state, action,
                         w_obs, b_obs,
                         w_act, b_act,
                         w_main, b_main,
                         *, block_bs=None, compute_dtype=None):
    """StateActionNet forward.

    state  : [bs, T, Fin]         action : [bs, Fa]
    w_obs  : [Fin, Fobs]          b_obs  : [Fobs]
    w_act  : [Fa, Fact]           b_act  : [Fact]
    w_main : [T*Fobs + Fact, R]   b_main : [R]
    returns: [bs, R]
    """
    bs, T, fin = state.shape
    fa = action.shape[1]
    fobs = w_obs.shape[1]
    fact = w_act.shape[1]
    rep = w_main.shape[1]
    assert w_main.shape[0] == T * fobs + fact
    assert action.shape[0] == bs

    out_dtype = state.dtype

    # Optional bf16 streaming (f32 accumulation stays inside the kernel).
    if compute_dtype is not None:
        state = state.astype(compute_dtype)
        action = action.astype(compute_dtype)
        w_obs = w_obs.astype(compute_dtype)
        w_act = w_act.astype(compute_dtype)
        w_main = w_main.astype(compute_dtype)
    # Biases are added to the f32 accumulator -> keep them f32.
    b_obs = b_obs.astype(jnp.float32)
    b_act = b_act.astype(jnp.float32)
    b_main = b_main.astype(jnp.float32)

    # --- batch tiling: 8-aligned tile, padded batch, >=2 grid steps if possible.
    if block_bs is None:
        target = bs if bs < 16 else (bs + 1) // 2   # keep >=2 steps for v7x megacore
        block_bs = min(512, _round_up(target, 8))
    else:
        block_bs = _round_up(max(1, block_bs), 8)
    assert block_bs % 8 == 0
    bs_pad = _round_up(bs, block_bs)
    if bs_pad != bs:
        state = jnp.pad(state, ((0, bs_pad - bs), (0, 0), (0, 0)))
        action = jnp.pad(action, ((0, bs_pad - bs), (0, 0)))
    grid = (bs_pad // block_bs,)

    # --- lane-dense, MXU-friendly output: pad representation to a multiple of 256.
    rep_pad = _round_up(rep, 256)
    if rep_pad != rep:
        w_main = jnp.pad(w_main, ((0, 0), (0, rep_pad - rep)))
        b_main = jnp.pad(b_main, (0, rep_pad - rep))

    # concat([state_, action_]) @ W == sum of split matmuls.  The state part is
    # reshaped to (T, Fobs, Rpad) so the kernel picks the per-timestep slab with
    # a free leading-dim index.
    w_main_s = w_main[: T * fobs].reshape(T, fobs, rep_pad)
    w_main_a = w_main[T * fobs:]
    b_obs2 = b_obs.reshape(1, fobs)
    b_act2 = b_act.reshape(1, fact)
    b_main2 = b_main.reshape(1, rep_pad)

    def _run(single_buffer_weights):
        def resident(shape):
            kwargs = {}
            if single_buffer_weights:
                kwargs["pipeline_mode"] = pl.Buffered(1)   # grid-invariant block
            return pl.BlockSpec(shape, lambda i: (0,) * len(shape), **kwargs)

        return pl.pallas_call(
            state_action_kernel,
            out_shape=jax.ShapeDtypeStruct((bs_pad, rep_pad), out_dtype),
            grid=grid,
            in_specs=[
                pl.BlockSpec((block_bs, T, fin), lambda i: (i, 0, 0)),  # state tile
                pl.BlockSpec((block_bs, fa), lambda i: (i, 0)),         # action tile
                resident((fin, fobs)),                                  # resident weights
                resident((1, fobs)),
                resident((fa, fact)),
                resident((1, fact)),
                resident((T, fobs, rep_pad)),
                resident((fact, rep_pad)),
                resident((1, rep_pad)),
            ],
            out_specs=pl.BlockSpec((block_bs, rep_pad), lambda i: (i, 0)),
            compiler_params=pltpu.CompilerParams(
                dimension_semantics=("parallel",),
                vmem_limit_bytes=48 * 1024 * 1024),
        )(state, action, w_obs, b_obs2, w_act, b_act2, w_main_s, w_main_a, b_main2)

    try:
        out_padded = _run(True)     # single-buffered invariant weights
    except Exception:
        # TODO(synk): pipeline_mode=pl.Buffered(1) unsupported on this jax/libtpu;
        # fall back to default double-buffered resident weights.
        out_padded = _run(False)

    out = out_padded
    if rep_pad != rep:
        out = out[:, :rep]
    if bs_pad != bs:
        out = out[:bs]
    return out


def _reference(state, action, w_obs, b_obs, w_act, b_act, w_main, b_main):
    bs, T, fin = state.shape
    obs = jax.nn.relu(jnp.einsum('bti,io->bto', state, w_obs) + b_obs[None, None, :])
    flat = obs.reshape(bs, -1)                        # TemporalConcatPooling
    act = jax.nn.relu(action @ w_act + b_act)         # action_net
    x = jnp.concatenate([flat, act], axis=1)          # torch.cat(..., dim=1)
    return jax.nn.relu(x @ w_main + b_main)           # main_net


if __name__ == "__main__":
    # Small shapes consistent with the module:
    #   state [bs; history_len; in_features], action [bs; action_dim]
    bs, T, fin, fobs = 16, 8, 16, 32
    fa, fact, rep = 8, 32, 32

    key = jax.random.PRNGKey(0)
    k0, k1, k2, k3, k4, k5, k6, k7 = jax.random.split(key, 8)
    state = jax.random.normal(k0, (bs, T, fin), dtype=jnp.float32)
    action = jax.random.normal(k1, (bs, fa), dtype=jnp.float32)
    w_obs = jax.random.normal(k2, (fin, fobs), dtype=jnp.float32) * 0.1
    b_obs = jax.random.normal(k3, (fobs,), dtype=jnp.float32) * 0.1
    w_act = jax.random.normal(k4, (fa, fact), dtype=jnp.float32) * 0.1
    b_act = jax.random.normal(k5, (fact,), dtype=jnp.float32) * 0.1
    w_main = jax.random.normal(k6, (T * fobs + fact, rep), dtype=jnp.float32) * 0.05
    b_main = jax.random.normal(k7, (rep,), dtype=jnp.float32) * 0.1

    ref = _reference(state, action, w_obs, b_obs, w_act, b_act, w_main, b_main)

    # f32 path: block_bs=8 -> 2 pipelined grid steps over the batch.
    out = state_action_forward(state, action, w_obs, b_obs, w_act, b_act,
                               w_main, b_main, block_bs=8)
    out = jax.block_until_ready(out)
    assert out.shape == (bs, rep)
    assert jnp.allclose(out, ref, atol=1e-4, rtol=1e-4), "f32 mismatch vs reference"

    # bf16-streamed path (the v6e/v7x MXU-throughput configuration): operands
    # bf16, accumulation f32, output f32; looser tolerance vs the f32 reference.
    out_bf16 = state_action_forward(state, action, w_obs, b_obs, w_act, b_act,
                                    w_main, b_main, block_bs=8,
                                    compute_dtype=jnp.bfloat16)
    out_bf16 = jax.block_until_ready(out_bf16)
    assert out_bf16.shape == (bs, rep)
    assert jnp.allclose(out_bf16.astype(jnp.float32), ref, atol=5e-2, rtol=5e-2), \
        "bf16 mismatch vs reference"

    print("KERNEL_OK")
</pallas_src>

<mosaic_0001>
module attributes {stable_mosaic.version = 11 : i64} {
  func.func @state_action_kernel(%arg0: i32, %arg1: memref<8x8x16xf32, #tpu.memory_space<vmem>>, %arg2: memref<8x8xf32, #tpu.memory_space<vmem>>, %arg3: memref<16x32xf32, #tpu.memory_space<vmem>>, %arg4: memref<1x32xf32, #tpu.memory_space<vmem>>, %arg5: memref<8x32xf32, #tpu.memory_space<vmem>>, %arg6: memref<1x32xf32, #tpu.memory_space<vmem>>, %arg7: memref<8x32x256xf32, #tpu.memory_space<vmem>>, %arg8: memref<32x256xf32, #tpu.memory_space<vmem>>, %arg9: memref<1x256xf32, #tpu.memory_space<vmem>>, %arg10: memref<8x256xf32, #tpu.memory_space<vmem>>) attributes {dimension_semantics = [#tpu.dimension_semantics<parallel>], iteration_bounds = array<i64: 2>, scalar_prefetch = 0 : i64, scratch_operands = 0 : i64, tpu.core_type = #tpu.core_type<tc>, window_params = [{transform_indices = @transform_0, window_bounds = array<i64: 8, 8, 16>}, {transform_indices = @transform_1, window_bounds = array<i64: 8, 8>}, {pipeline_mode = #tpu.pipeline_mode<synchronous>, transform_indices = @transform_2, window_bounds = array<i64: 16, 32>}, {pipeline_mode = #tpu.pipeline_mode<synchronous>, transform_indices = @transform_3, window_bounds = array<i64: 1, 32>}, {pipeline_mode = #tpu.pipeline_mode<synchronous>, transform_indices = @transform_4, window_bounds = array<i64: 8, 32>}, {pipeline_mode = #tpu.pipeline_mode<synchronous>, transform_indices = @transform_5, window_bounds = array<i64: 1, 32>}, {pipeline_mode = #tpu.pipeline_mode<synchronous>, transform_indices = @transform_6, window_bounds = array<i64: 8, 32, 256>}, {pipeline_mode = #tpu.pipeline_mode<synchronous>, transform_indices = @transform_7, window_bounds = array<i64: 32, 256>}, {pipeline_mode = #tpu.pipeline_mode<synchronous>, transform_indices = @transform_8, window_bounds = array<i64: 1, 256>}, {transform_indices = @transform_9, window_bounds = array<i64: 8, 256>}]} {
    %c0 = arith.constant 0 : index
    %c0_0 = arith.constant 0 : index
    %0 = vector.load %arg2[%c0, %c0_0] : memref<8x8xf32, #tpu.memory_space<vmem>>, vector<8x8xf32>
    %c0_1 = arith.constant 0 : index
    %c0_2 = arith.constant 0 : index
    %1 = vector.load %arg5[%c0_1, %c0_2] : memref<8x32xf32, #tpu.memory_space<vmem>>, vector<8x32xf32>
    %cst = arith.constant dense<0.000000e+00> : vector<8x32xf32>
    %2 = tpu.matmul %0, %1, %cst {dimension_numbers = #tpu.dot_dimension_numbers<[1], [0], [0], [1], [0, 0, 1, 1], [], []>} : vector<8x8xf32>, vector<8x32xf32>, vector<8x32xf32> -> vector<8x32xf32>
    %c0_3 = arith.constant 0 : index
    %c0_4 = arith.constant 0 : index
    %3 = vector.load %arg6[%c0_3, %c0_4] : memref<1x32xf32, #tpu.memory_space<vmem>>, vector<1x32xf32>
    %4 = vector.broadcast %3 : vector<1x32xf32> to vector<8x32xf32>
    %5 = arith.addf %2, %4 : vector<8x32xf32>
    %cst_5 = arith.constant 0.000000e+00 : f32
    %6 = vector.broadcast %cst_5 : f32 to vector<8x32xf32>
    %7 = arith.maximumf %5, %6 : vector<8x32xf32>
    %c0_6 = arith.constant 0 : index
    %c0_7 = arith.constant 0 : index
    %8 = vector.load %arg8[%c0_6, %c0_7] : memref<32x256xf32, #tpu.memory_space<vmem>>, vector<32x256xf32>
    %cst_8 = arith.constant dense<0.000000e+00> : vector<8x256xf32>
    %9 = tpu.matmul %7, %8, %cst_8 {dimension_numbers = #tpu.dot_dimension_numbers<[1], [0], [0], [1], [0, 0, 1, 1], [], []>} : vector<8x32xf32>, vector<32x256xf32>, vector<8x256xf32> -> vector<8x256xf32>
    %c0_9 = arith.constant 0 : index
    %c0_10 = arith.constant 0 : index
    %10 = vector.load %arg9[%c0_9, %c0_10] : memref<1x256xf32, #tpu.memory_space<vmem>>, vector<1x256xf32>
    %11 = vector.broadcast %10 : vector<1x256xf32> to vector<8x256xf32>
    %12 = arith.addf %9, %11 : vector<8x256xf32>
    %c0_11 = arith.constant 0 : index
    %c0_12 = arith.constant 0 : index
    %13 = vector.load %arg3[%c0_11, %c0_12] : memref<16x32xf32, #tpu.memory_space<vmem>>, vector<16x32xf32>
    %c0_13 = arith.constant 0 : index
    %c0_14 = arith.constant 0 : index
    %14 = vector.load %arg4[%c0_13, %c0_14] : memref<1x32xf32, #tpu.memory_space<vmem>>, vector<1x32xf32>
    %c0_15 = arith.constant 0 : index
    %c0_16 = arith.constant 0 : index
    %c0_17 = arith.constant 0 : index
    %15 = vector.load %arg1[%c0_15, %c0_16, %c0_17] : memref<8x8x16xf32, #tpu.memory_space<vmem>>, vector<8x1x16xf32>
    %16 = vector.shape_cast %15 : vector<8x1x16xf32> to vector<8x16xf32>
    %cst_18 = arith.constant dense<0.000000e+00> : vector<8x32xf32>
    %17 = tpu.matmul %16, %13, %cst_18 {dimension_numbers = #tpu.dot_dimension_numbers<[1], [0], [0], [1], [0, 0, 1, 1], [], []>} : vector<8x16xf32>, vector<16x32xf32>, vector<8x32xf32> -> vector<8x32xf32>
    %18 = vector.broadcast %14 : vector<1x32xf32> to vector<8x32xf32>
    %19 = arith.addf %17, %18 : vector<8x32xf32>
    %cst_19 = arith.constant 0.000000e+00 : f32
    %20 = vector.broadcast %cst_19 : f32 to vector<8x32xf32>
    %21 = arith.maximumf %19, %20 : vector<8x32xf32>
    %c0_20 = arith.constant 0 : index
    %c0_21 = arith.constant 0 : index
    %c0_22 = arith.constant 0 : index
    %22 = vector.load %arg7[%c0_20, %c0_21, %c0_22] : memref<8x32x256xf32, #tpu.memory_space<vmem>>, vector<1x32x256xf32>
    %23 = vector.shape_cast %22 : vector<1x32x256xf32> to vector<32x256xf32>
    %cst_23 = arith.constant dense<0.000000e+00> : vector<8x256xf32>
    %24 = tpu.matmul %21, %23, %cst_23 {dimension_numbers = #tpu.dot_dimension_numbers<[1], [0], [0], [1], [0, 0, 1, 1], [], []>} : vector<8x32xf32>, vector<32x256xf32>, vector<8x256xf32> -> vector<8x256xf32>
    %25 = arith.addf %12, %24 : vector<8x256xf32>
    %c0_24 = arith.constant 0 : index
    %c1 = arith.constant 1 : index
    %c0_25 = arith.constant 0 : index
    %26 = vector.load %arg1[%c0_24, %c1, %c0_25] : memref<8x8x16xf32, #tpu.memory_space<vmem>>, vector<8x1x16xf32>
    %27 = vector.shape_cast %26 : vector<8x1x16xf32> to vector<8x16xf32>
    %cst_26 = arith.constant dense<0.000000e+00> : vector<8x32xf32>
    %28 = tpu.matmul %27, %13, %cst_26 {dimension_numbers = #tpu.dot_dimension_numbers<[1], [0], [0], [1], [0, 0, 1, 1], [], []>} : vector<8x16xf32>, vector<16x32xf32>, vector<8x32xf32> -> vector<8x32xf32>
    %29 = vector.broadcast %14 : vector<1x32xf32> to vector<8x32xf32>
    %30 = arith.addf %28, %29 : vector<8x32xf32>
    %cst_27 = arith.constant 0.000000e+00 : f32
    %31 = vector.broadcast %cst_27 : f32 to vector<8x32xf32>
    %32 = arith.maximumf %30, %31 : vector<8x32xf32>
    %c1_28 = arith.constant 1 : index
    %c0_29 = arith.constant 0 : index
    %c0_30 = arith.constant 0 : index
    %33 = vector.load %arg7[%c1_28, %c0_29, %c0_30] : memref<8x32x256xf32, #tpu.memory_space<vmem>>, vector<1x32x256xf32>
    %34 = vector.shape_cast %33 : vector<1x32x256xf32> to vector<32x256xf32>
    %cst_31 = arith.constant dense<0.000000e+00> : vector<8x256xf32>
    %35 = tpu.matmul %32, %34, %cst_31 {dimension_numbers = #tpu.dot_dimension_numbers<[1], [0], [0], [1], [0, 0, 1, 1], [], []>} : vector<8x32xf32>, vector<32x256xf32>, vector<8x256xf32> -> vector<8x256xf32>
    %36 = arith.addf %25, %35 : vector<8x256xf32>
    %c0_32 = arith.constant 0 : index
    %c2 = arith.constant 2 : index
    %c0_33 = arith.constant 0 : index
    %37 = vector.load %arg1[%c0_32, %c2, %c0_33] : memref<8x8x16xf32, #tpu.memory_space<vmem>>, vector<8x1x16xf32>
    %38 = vector.shape_cast %37 : vector<8x1x16xf32> to vector<8x16xf32>
    %cst_34 = arith.constant dense<0.000000e+00> : vector<8x32xf32>
    %39 = tpu.matmul %38, %13, %cst_34 {dimension_numbers = #tpu.dot_dimension_numbers<[1], [0], [0], [1], [0, 0, 1, 1], [], []>} : vector<8x16xf32>, vector<16x32xf32>, vector<8x32xf32> -> vector<8x32xf32>
    %40 = vector.broadcast %14 : vector<1x32xf32> to vector<8x32xf32>
    %41 = arith.addf %39, %40 : vector<8x32xf32>
    %cst_35 = arith.constant 0.000000e+00 : f32
    %42 = vector.broadcast %cst_35 : f32 to vector<8x32xf32>
    %43 = arith.maximumf %41, %42 : vector<8x32xf32>
    %c2_36 = arith.constant 2 : index
    %c0_37 = arith.constant 0 : index
    %c0_38 = arith.constant 0 : index
    %44 = vector.load %arg7[%c2_36, %c0_37, %c0_38] : memref<8x32x256xf32, #tpu.memory_space<vmem>>, vector<1x32x256xf32>
    %45 = vector.shape_cast %44 : vector<1x32x256xf32> to vector<32x256xf32>
    %cst_39 = arith.constant dense<0.000000e+00> : vector<8x256xf32>
    %46 = tpu.matmul %43, %45, %cst_39 {dimension_numbers = #tpu.dot_dimension_numbers<[1], [0], [0], [1], [0, 0, 1, 1], [], []>} : vector<8x32xf32>, vector<32x256xf32>, vector<8x256xf32> -> vector<8x256xf32>
    %47 = arith.addf %36, %46 : vector<8x256xf32>
    %c0_40 = arith.constant 0 : index
    %c3 = arith.constant 3 : index
    %c0_41 = arith.constant 0 : index
    %48 = vector.load %arg1[%c0_40, %c3, %c0_41] : memref<8x8x16xf32, #tpu.memory_space<vmem>>, vector<8x1x16xf32>
    %49 = vector.shape_cast %48 : vector<8x1x16xf32> to vector<8x16xf32>
    %cst_42 = arith.constant dense<0.000000e+00> : vector<8x32xf32>
    %50 = tpu.matmul %49, %13, %cst_42 {dimension_numbers = #tpu.dot_dimension_numbers<[1], [0], [0], [1], [0, 0, 1, 1], [], []>} : vector<8x16xf32>, vector<16x32xf32>, vector<8x32xf32> -> vector<8x32xf32>
    %51 = vector.broadcast %14 : vector<1x32xf32> to vector<8x32xf32>
    %52 = arith.addf %50, %51 : vector<8x32xf32>
    %cst_43 = arith.constant 0.000000e+00 : f32
    %53 = vector.broadcast %cst_43 : f32 to vector<8x32xf32>
    %54 = arith.maximumf %52, %53 : vector<8x32xf32>
    %c3_44 = arith.constant 3 : index
    %c0_45 = arith.constant 0 : index
    %c0_46 = arith.constant 0 : index
    %55 = vector.load %arg7[%c3_44, %c0_45, %c0_46] : memref<8x32x256xf32, #tpu.memory_space<vmem>>, vector<1x32x256xf32>
    %56 = vector.shape_cast %55 : vector<1x32x256xf32> to vector<32x256xf32>
    %cst_47 = arith.constant dense<0.000000e+00> : vector<8x256xf32>
    %57 = tpu.matmul %54, %56, %cst_47 {dimension_numbers = #tpu.dot_dimension_numbers<[1], [0], [0], [1], [0, 0, 1, 1], [], []>} : vector<8x32xf32>, vector<32x256xf32>, vector<8x256xf32> -> vector<8x256xf32>
    %58 = arith.addf %47, %57 : vector<8x256xf32>
    %c0_48 = arith.constant 0 : index
    %c4 = arith.constant 4 : index
    %c0_49 = arith.constant 0 : index
    %59 = vector.load %arg1[%c0_48, %c4, %c0_49] : memref<8x8x16xf32, #tpu.memory_space<vmem>>, vector<8x1x16xf32>
    %60 = vector.shape_cast %59 : vector<8x1x16xf32> to vector<8x16xf32>
    %cst_50 = arith.constant dense<0.000000e+00> : vector<8x32xf32>
    %61 = tpu.matmul %60, %13, %cst_50 {dimension_numbers = #tpu.dot_dimension_numbers<[1], [0], [0], [1], [0, 0, 1, 1], [], []>} : vector<8x16xf32>, vector<16x32xf32>, vector<8x32xf32> -> vector<8x32xf32>
    %62 = vector.broadcast %14 : vector<1x32xf32> to vector<8x32xf32>
    %63 = arith.addf %61, %62 : vector<8x32xf32>
    %cst_51 = arith.constant 0.000000e+00 : f32
    %64 = vector.broadcast %cst_51 : f32 to vector<8x32xf32>
    %65 = arith.maximumf %63, %64 : vector<8x32xf32>
    %c4_52 = arith.constant 4 : index
    %c0_53 = arith.constant 0 : index
    %c0_54 = arith.constant 0 : index
    %66 = vector.load %arg7[%c4_52, %c0_53, %c0_54] : memref<8x32x256xf32, #tpu.memory_space<vmem>>, vector<1x32x256xf32>
    %67 = vector.shape_cast %66 : vector<1x32x256xf32> to vector<32x256xf32>
    %cst_55 = arith.constant dense<0.000000e+00> : vector<8x256xf32>
    %68 = tpu.matmul %65, %67, %cst_55 {dimension_numbers = #tpu.dot_dimension_numbers<[1], [0], [0], [1], [0, 0, 1, 1], [], []>} : vector<8x32xf32>, vector<32x256xf32>, vector<8x256xf32> -> vector<8x256xf32>
    %69 = arith.addf %58, %68 : vector<8x256xf32>
    %c0_56 = arith.constant 0 : index
    %c5 = arith.constant 5 : index
    %c0_57 = arith.constant 0 : index
    %70 = vector.load %arg1[%c0_56, %c5, %c0_57] : memref<8x8x16xf32, #tpu.memory_space<vmem>>, vector<8x1x16xf32>
    %71 = vector.shape_cast %70 : vector<8x1x16xf32> to vector<8x16xf32>
    %cst_58 = arith.constant dense<0.000000e+00> : vector<8x32xf32>
    %72 = tpu.matmul %71, %13, %cst_58 {dimension_numbers = #tpu.dot_dimension_numbers<[1], [0], [0], [1], [0, 0, 1, 1], [], []>} : vector<8x16xf32>, vector<16x32xf32>, vector<8x32xf32> -> vector<8x32xf32>
    %73 = vector.broadcast %14 : vector<1x32xf32> to vector<8x32xf32>
    %74 = arith.addf %72, %73 : vector<8x32xf32>
    %cst_59 = arith.constant 0.000000e+00 : f32
    %75 = vector.broadcast %cst_59 : f32 to vector<8x32xf32>
    %76 = arith.maximumf %74, %75 : vector<8x32xf32>
    %c5_60 = arith.constant 5 : index
    %c0_61 = arith.constant 0 : index
    %c0_62 = arith.constant 0 : index
    %77 = vector.load %arg7[%c5_60, %c0_61, %c0_62] : memref<8x32x256xf32, #tpu.memory_space<vmem>>, vector<1x32x256xf32>
    %78 = vector.shape_cast %77 : vector<1x32x256xf32> to vector<32x256xf32>
    %cst_63 = arith.constant dense<0.000000e+00> : vector<8x256xf32>
    %79 = tpu.matmul %76, %78, %cst_63 {dimension_numbers = #tpu.dot_dimension_numbers<[1], [0], [0], [1], [0, 0, 1, 1], [], []>} : vector<8x32xf32>, vector<32x256xf32>, vector<8x256xf32> -> vector<8x256xf32>
    %80 = arith.addf %69, %79 : vector<8x256xf32>
    %c0_64 = arith.constant 0 : index
    %c6 = arith.constant 6 : index
    %c0_65 = arith.constant 0 : index
    %81 = vector.load %arg1[%c0_64, %c6, %c0_65] : memref<8x8x16xf32, #tpu.memory_space<vmem>>, vector<8x1x16xf32>
    %82 = vector.shape_cast %81 : vector<8x1x16xf32> to vector<8x16xf32>
    %cst_66 = arith.constant dense<0.000000e+00> : vector<8x32xf32>
    %83 = tpu.matmul %82, %13, %cst_66 {dimension_numbers = #tpu.dot_dimension_numbers<[1], [0], [0], [1], [0, 0, 1, 1], [], []>} : vector<8x16xf32>, vector<16x32xf32>, vector<8x32xf32> -> vector<8x32xf32>
    %84 = vector.broadcast %14 : vector<1x32xf32> to vector<8x32xf32>
    %85 = arith.addf %83, %84 : vector<8x32xf32>
    %cst_67 = arith.constant 0.000000e+00 : f32
    %86 = vector.broadcast %cst_67 : f32 to vector<8x32xf32>
    %87 = arith.maximumf %85, %86 : vector<8x32xf32>
    %c6_68 = arith.constant 6 : index
    %c0_69 = arith.constant 0 : index
    %c0_70 = arith.constant 0 : index
    %88 = vector.load %arg7[%c6_68, %c0_69, %c0_70] : memref<8x32x256xf32, #tpu.memory_space<vmem>>, vector<1x32x256xf32>
    %89 = vector.shape_cast %88 : vector<1x32x256xf32> to vector<32x256xf32>
    %cst_71 = arith.constant dense<0.000000e+00> : vector<8x256xf32>
    %90 = tpu.matmul %87, %89, %cst_71 {dimension_numbers = #tpu.dot_dimension_numbers<[1], [0], [0], [1], [0, 0, 1, 1], [], []>} : vector<8x32xf32>, vector<32x256xf32>, vector<8x256xf32> -> vector<8x256xf32>
    %91 = arith.addf %80, %90 : vector<8x256xf32>
    %c0_72 = arith.constant 0 : index
    %c7 = arith.constant 7 : index
    %c0_73 = arith.constant 0 : index
    %92 = vector.load %arg1[%c0_72, %c7, %c0_73] : memref<8x8x16xf32, #tpu.memory_space<vmem>>, vector<8x1x16xf32>
    %93 = vector.shape_cast %92 : vector<8x1x16xf32> to vector<8x16xf32>
    %cst_74 = arith.constant dense<0.000000e+00> : vector<8x32xf32>
    %94 = tpu.matmul %93, %13, %cst_74 {dimension_numbers = #tpu.dot_dimension_numbers<[1], [0], [0], [1], [0, 0, 1, 1], [], []>} : vector<8x16xf32>, vector<16x32xf32>, vector<8x32xf32> -> vector<8x32xf32>
    %95 = vector.broadcast %14 : vector<1x32xf32> to vector<8x32xf32>
    %96 = arith.addf %94, %95 : vector<8x32xf32>
    %cst_75 = arith.constant 0.000000e+00 : f32
    %97 = vector.broadcast %cst_75 : f32 to vector<8x32xf32>
    %98 = arith.maximumf %96, %97 : vector<8x32xf32>
    %c7_76 = arith.constant 7 : index
    %c0_77 = arith.constant 0 : index
    %c0_78 = arith.constant 0 : index
    %99 = vector.load %arg7[%c7_76, %c0_77, %c0_78] : memref<8x32x256xf32, #tpu.memory_space<vmem>>, vector<1x32x256xf32>
    %100 = vector.shape_cast %99 : vector<1x32x256xf32> to vector<32x256xf32>
    %cst_79 = arith.constant dense<0.000000e+00> : vector<8x256xf32>
    %101 = tpu.matmul %98, %100, %cst_79 {dimension_numbers = #tpu.dot_dimension_numbers<[1], [0], [0], [1], [0, 0, 1, 1], [], []>} : vector<8x32xf32>, vector<32x256xf32>, vector<8x256xf32> -> vector<8x256xf32>
    %102 = arith.addf %91, %101 : vector<8x256xf32>
    %cst_80 = arith.constant 0.000000e+00 : f32
    %103 = vector.broadcast %cst_80 : f32 to vector<8x256xf32>
    %104 = arith.maximumf %102, %103 : vector<8x256xf32>
    %c0_81 = arith.constant 0 : index
    %c0_82 = arith.constant 0 : index
    %105 = vector.load %arg10[%c0_81, %c0_82] : memref<8x256xf32, #tpu.memory_space<vmem>>, vector<8x256xf32>
    tpu.vector_store %arg10[%c0_81, %c0_82], %104 {strides = array<i32>} : memref<8x256xf32, #tpu.memory_space<vmem>>, vector<8x256xf32>,
    return
  }
  func.func @transform_0(%arg0: i32) -> (i32, i32, i32) {
    %c0_i32 = arith.constant 0 : i32
    %c0_i32_0 = arith.constant 0 : i32
    %c0_i32_1 = arith.constant 0 : i32
    return %arg0, %c0_i32, %c0_i32_0 : i32, i32, i32
  }
  func.func @transform_1(%arg0: i32) -> (i32, i32) {
    %c0_i32 = arith.constant 0 : i32
    %c0_i32_0 = arith.constant 0 : i32
    return %arg0, %c0_i32 : i32, i32
  }
  func.func @transform_2(%arg0: i32) -> (i32, i32) {
    %c0_i32 = arith.constant 0 : i32
    %c0_i32_0 = arith.constant 0 : i32
    %c0_i32_1 = arith.constant 0 : i32
    return %c0_i32, %c0_i32_0 : i32, i32
  }
  func.func @transform_3(%arg0: i32) -> (i32, i32) {
    %c0_i32 = arith.constant 0 : i32
    %c0_i32_0 = arith.constant 0 : i32
    %c0_i32_1 = arith.constant 0 : i32
    return %c0_i32, %c0_i32_0 : i32, i32
  }
  func.func @transform_4(%arg0: i32) -> (i32, i32) {
    %c0_i32 = arith.constant 0 : i32
    %c0_i32_0 = arith.constant 0 : i32
    %c0_i32_1 = arith.constant 0 : i32
    return %c0_i32, %c0_i32_0 : i32, i32
  }
  func.func @transform_5(%arg0: i32) -> (i32, i32) {
    %c0_i32 = arith.constant 0 : i32
    %c0_i32_0 = arith.constant 0 : i32
    %c0_i32_1 = arith.constant 0 : i32
    return %c0_i32, %c0_i32_0 : i32, i32
  }
  func.func @transform_6(%arg0: i32) -> (i32, i32, i32) {
    %c0_i32 = arith.constant 0 : i32
    %c0_i32_0 = arith.constant 0 : i32
    %c0_i32_1 = arith.constant 0 : i32
    %c0_i32_2 = arith.constant 0 : i32
    return %c0_i32, %c0_i32_0, %c0_i32_1 : i32, i32, i32
  }
  func.func @transform_7(%arg0: i32) -> (i32, i32) {
    %c0_i32 = arith.constant 0 : i32
    %c0_i32_0 = arith.constant 0 : i32
    %c0_i32_1 = arith.constant 0 : i32
    return %c0_i32, %c0_i32_0 : i32, i32
  }
  func.func @transform_8(%arg0: i32) -> (i32, i32) {
    %c0_i32 = arith.constant 0 : i32
    %c0_i32_0 = arith.constant 0 : i32
    %c0_i32_1 = arith.constant 0 : i32
    return %c0_i32, %c0_i32_0 : i32, i32
  }
  func.func @transform_9(%arg0: i32) -> (i32, i32) {
    %c0_i32 = arith.constant 0 : i32
    %c0_i32_0 = arith.constant 0 : i32
    return %arg0, %c0_i32 : i32, i32
  }
}

module attributes {stable_mosaic.version = 11 : i64} {
  func.func @state_action_kernel(%arg0: i32, %arg1: memref<8x8x16xf32, #tpu.memory_space<vmem>>, %arg2: memref<8x8xf32, #tpu.memory_space<vmem>>, %arg3: memref<16x32xf32, #tpu.memory_space<vmem>>, %arg4: memref<1x32xf32, #tpu.memory_space<vmem>>, %arg5: memref<8x32xf32, #tpu.memory_space<vmem>>, %arg6: memref<1x32xf32, #tpu.memory_space<vmem>>, %arg7: memref<8x32x256xf32, #tpu.memory_space<vmem>>, %arg8: memref<32x256xf32, #tpu.memory_space<vmem>>, %arg9: memref<1x256xf32, #tpu.memory_space<vmem>>, %arg10: memref<8x256xf32, #tpu.memory_space<vmem>>) attributes {dimension_semantics = [#tpu.dimension_semantics<parallel>], iteration_bounds = array<i64: 2>, scalar_prefetch = 0 : i64, scratch_operands = 0 : i64, tpu.core_type = #tpu.core_type<tc>, window_params = [{transform_indices = @transform_0, window_bounds = array<i64: 8, 8, 16>}, {transform_indices = @transform_1, window_bounds = array<i64: 8, 8>}, {pipeline_mode = #tpu.pipeline_mode<synchronous>, transform_indices = @transform_2, window_bounds = array<i64: 16, 32>}, {pipeline_mode = #tpu.pipeline_mode<synchronous>, transform_indices = @transform_3, window_bounds = array<i64: 1, 32>}, {pipeline_mode = #tpu.pipeline_mode<synchronous>, transform_indices = @transform_4, window_bounds = array<i64: 8, 32>}, {pipeline_mode = #tpu.pipeline_mode<synchronous>, transform_indices = @transform_5, window_bounds = array<i64: 1, 32>}, {pipeline_mode = #tpu.pipeline_mode<synchronous>, transform_indices = @transform_6, window_bounds = array<i64: 8, 32, 256>}, {pipeline_mode = #tpu.pipeline_mode<synchronous>, transform_indices = @transform_7, window_bounds = array<i64: 32, 256>}, {pipeline_mode = #tpu.pipeline_mode<synchronous>, transform_indices = @transform_8, window_bounds = array<i64: 1, 256>}, {transform_indices = @transform_9, window_bounds = array<i64: 8, 256>}]} {
    %c0 = arith.constant 0 : index
    %c0_0 = arith.constant 0 : index
    %0 = vector.load %arg2[%c0, %c0_0] : memref<8x8xf32, #tpu.memory_space<vmem>>, vector<8x8xf32>
    %c0_1 = arith.constant 0 : index
    %c0_2 = arith.constant 0 : index
    %1 = vector.load %arg5[%c0_1, %c0_2] : memref<8x32xf32, #tpu.memory_space<vmem>>, vector<8x32xf32>
    %cst = arith.constant dense<0.000000e+00> : vector<8x32xf32>
    %2 = tpu.matmul %0, %1, %cst {dimension_numbers = #tpu.dot_dimension_numbers<[1], [0], [0], [1], [0, 0, 1, 1], [], []>} : vector<8x8xf32>, vector<8x32xf32>, vector<8x32xf32> -> vector<8x32xf32>
    %c0_3 = arith.constant 0 : index
    %c0_4 = arith.constant 0 : index
    %3 = vector.load %arg6[%c0_3, %c0_4] : memref<1x32xf32, #tpu.memory_space<vmem>>, vector<1x32xf32>
    %4 = vector.broadcast %3 : vector<1x32xf32> to vector<8x32xf32>
    %5 = arith.addf %2, %4 : vector<8x32xf32>
    %cst_5 = arith.constant 0.000000e+00 : f32
    %6 = vector.broadcast %cst_5 : f32 to vector<8x32xf32>
    %7 = arith.maximumf %5, %6 : vector<8x32xf32>
    %c0_6 = arith.constant 0 : index
    %c0_7 = arith.constant 0 : index
    %8 = vector.load %arg8[%c0_6, %c0_7] : memref<32x256xf32, #tpu.memory_space<vmem>>, vector<32x256xf32>
    %cst_8 = arith.constant dense<0.000000e+00> : vector<8x256xf32>
    %9 = tpu.matmul %7, %8, %cst_8 {dimension_numbers = #tpu.dot_dimension_numbers<[1], [0], [0], [1], [0, 0, 1, 1], [], []>} : vector<8x32xf32>, vector<32x256xf32>, vector<8x256xf32> -> vector<8x256xf32>
    %c0_9 = arith.constant 0 : index
    %c0_10 = arith.constant 0 : index
    %10 = vector.load %arg9[%c0_9, %c0_10] : memref<1x256xf32, #tpu.memory_space<vmem>>, vector<1x256xf32>
    %11 = vector.broadcast %10 : vector<1x256xf32> to vector<8x256xf32>
    %12 = arith.addf %9, %11 : vector<8x256xf32>
    %c0_11 = arith.constant 0 : index
    %c0_12 = arith.constant 0 : index
    %13 = vector.load %arg3[%c0_11, %c0_12] : memref<16x32xf32, #tpu.memory_space<vmem>>, vector<16x32xf32>
    %c0_13 = arith.constant 0 : index
    %c0_14 = arith.constant 0 : index
    %14 = vector.load %arg4[%c0_13, %c0_14] : memref<1x32xf32, #tpu.memory_space<vmem>>, vector<1x32xf32>
    %c0_15 = arith.constant 0 : index
    %c0_16 = arith.constant 0 : index
    %c0_17 = arith.constant 0 : index
    %15 = vector.load %arg1[%c0_15, %c0_16, %c0_17] : memref<8x8x16xf32, #tpu.memory_space<vmem>>, vector<8x1x16xf32>
    %16 = vector.shape_cast %15 : vector<8x1x16xf32> to vector<8x16xf32>
    %cst_18 = arith.constant dense<0.000000e+00> : vector<8x32xf32>
    %17 = tpu.matmul %16, %13, %cst_18 {dimension_numbers = #tpu.dot_dimension_numbers<[1], [0], [0], [1], [0, 0, 1, 1], [], []>} : vector<8x16xf32>, vector<16x32xf32>, vector<8x32xf32> -> vector<8x32xf32>
    %18 = vector.broadcast %14 : vector<1x32xf32> to vector<8x32xf32>
    %19 = arith.addf %17, %18 : vector<8x32xf32>
    %cst_19 = arith.constant 0.000000e+00 : f32
    %20 = vector.broadcast %cst_19 : f32 to vector<8x32xf32>
    %21 = arith.maximumf %19, %20 : vector<8x32xf32>
    %c0_20 = arith.constant 0 : index
    %c0_21 = arith.constant 0 : index
    %c0_22 = arith.constant 0 : index
    %22 = vector.load %arg7[%c0_20, %c0_21, %c0_22] : memref<8x32x256xf32, #tpu.memory_space<vmem>>, vector<1x32x256xf32>
    %23 = vector.shape_cast %22 : vector<1x32x256xf32> to vector<32x256xf32>
    %cst_23 = arith.constant dense<0.000000e+00> : vector<8x256xf32>
    %24 = tpu.matmul %21, %23, %cst_23 {dimension_numbers = #tpu.dot_dimension_numbers<[1], [0], [0], [1], [0, 0, 1, 1], [], []>} : vector<8x32xf32>, vector<32x256xf32>, vector<8x256xf32> -> vector<8x256xf32>
    %25 = arith.addf %12, %24 : vector<8x256xf32>
    %c0_24 = arith.constant 0 : index
    %c1 = arith.constant 1 : index
    %c0_25 = arith.constant 0 : index
    %26 = vector.load %arg1[%c0_24, %c1, %c0_25] : memref<8x8x16xf32, #tpu.memory_space<vmem>>, vector<8x1x16xf32>
    %27 = vector.shape_cast %26 : vector<8x1x16xf32> to vector<8x16xf32>
    %cst_26 = arith.constant dense<0.000000e+00> : vector<8x32xf32>
    %28 = tpu.matmul %27, %13, %cst_26 {dimension_numbers = #tpu.dot_dimension_numbers<[1], [0], [0], [1], [0, 0, 1, 1], [], []>} : vector<8x16xf32>, vector<16x32xf32>, vector<8x32xf32> -> vector<8x32xf32>
    %29 = vector.broadcast %14 : vector<1x32xf32> to vector<8x32xf32>
    %30 = arith.addf %28, %29 : vector<8x32xf32>
    %cst_27 = arith.constant 0.000000e+00 : f32
    %31 = vector.broadcast %cst_27 : f32 to vector<8x32xf32>
    %32 = arith.maximumf %30, %31 : vector<8x32xf32>
    %c1_28 = arith.constant 1 : index
    %c0_29 = arith.constant 0 : index
    %c0_30 = arith.constant 0 : index
    %33 = vector.load %arg7[%c1_28, %c0_29, %c0_30] : memref<8x32x256xf32, #tpu.memory_space<vmem>>, vector<1x32x256xf32>
    %34 = vector.shape_cast %33 : vector<1x32x256xf32> to vector<32x256xf32>
    %cst_31 = arith.constant dense<0.000000e+00> : vector<8x256xf32>
    %35 = tpu.matmul %32, %34, %cst_31 {dimension_numbers = #tpu.dot_dimension_numbers<[1], [0], [0], [1], [0, 0, 1, 1], [], []>} : vector<8x32xf32>, vector<32x256xf32>, vector<8x256xf32> -> vector<8x256xf32>
    %36 = arith.addf %25, %35 : vector<8x256xf32>
    %c0_32 = arith.constant 0 : index
    %c2 = arith.constant 2 : index
    %c0_33 = arith.constant 0 : index
    %37 = vector.load %arg1[%c0_32, %c2, %c0_33] : memref<8x8x16xf32, #tpu.memory_space<vmem>>, vector<8x1x16xf32>
    %38 = vector.shape_cast %37 : vector<8x1x16xf32> to vector<8x16xf32>
    %cst_34 = arith.constant dense<0.000000e+00> : vector<8x32xf32>
    %39 = tpu.matmul %38, %13, %cst_34 {dimension_numbers = #tpu.dot_dimension_numbers<[1], [0], [0], [1], [0, 0, 1, 1], [], []>} : vector<8x16xf32>, vector<16x32xf32>, vector<8x32xf32> -> vector<8x32xf32>
    %40 = vector.broadcast %14 : vector<1x32xf32> to vector<8x32xf32>
    %41 = arith.addf %39, %40 : vector<8x32xf32>
    %cst_35 = arith.constant 0.000000e+00 : f32
    %42 = vector.broadcast %cst_35 : f32 to vector<8x32xf32>
    %43 = arith.maximumf %41, %42 : vector<8x32xf32>
    %c2_36 = arith.constant 2 : index
    %c0_37 = arith.constant 0 : index
    %c0_38 = arith.constant 0 : index
    %44 = vector.load %arg7[%c2_36, %c0_37, %c0_38] : memref<8x32x256xf32, #tpu.memory_space<vmem>>, vector<1x32x256xf32>
    %45 = vector.shape_cast %44 : vector<1x32x256xf32> to vector<32x256xf32>
    %cst_39 = arith.constant dense<0.000000e+00> : vector<8x256xf32>
    %46 = tpu.matmul %43, %45, %cst_39 {dimension_numbers = #tpu.dot_dimension_numbers<[1], [0], [0], [1], [0, 0, 1, 1], [], []>} : vector<8x32xf32>, vector<32x256xf32>, vector<8x256xf32> -> vector<8x256xf32>
    %47 = arith.addf %36, %46 : vector<8x256xf32>
    %c0_40 = arith.constant 0 : index
    %c3 = arith.constant 3 : index
    %c0_41 = arith.constant 0 : index
    %48 = vector.load %arg1[%c0_40, %c3, %c0_41] : memref<8x8x16xf32, #tpu.memory_space<vmem>>, vector<8x1x16xf32>
    %49 = vector.shape_cast %48 : vector<8x1x16xf32> to vector<8x16xf32>
    %cst_42 = arith.constant dense<0.000000e+00> : vector<8x32xf32>
    %50 = tpu.matmul %49, %13, %cst_42 {dimension_numbers = #tpu.dot_dimension_numbers<[1], [0], [0], [1], [0, 0, 1, 1], [], []>} : vector<8x16xf32>, vector<16x32xf32>, vector<8x32xf32> -> vector<8x32xf32>
    %51 = vector.broadcast %14 : vector<1x32xf32> to vector<8x32xf32>
    %52 = arith.addf %50, %51 : vector<8x32xf32>
    %cst_43 = arith.constant 0.000000e+00 : f32
    %53 = vector.broadcast %cst_43 : f32 to vector<8x32xf32>
    %54 = arith.maximumf %52, %53 : vector<8x32xf32>
    %c3_44 = arith.constant 3 : index
    %c0_45 = arith.constant 0 : index
    %c0_46 = arith.constant 0 : index
    %55 = vector.load %arg7[%c3_44, %c0_45, %c0_46] : memref<8x32x256xf32, #tpu.memory_space<vmem>>, vector<1x32x256xf32>
    %56 = vector.shape_cast %55 : vector<1x32x256xf32> to vector<32x256xf32>
    %cst_47 = arith.constant dense<0.000000e+00> : vector<8x256xf32>
    %57 = tpu.matmul %54, %56, %cst_47 {dimension_numbers = #tpu.dot_dimension_numbers<[1], [0], [0], [1], [0, 0, 1, 1], [], []>} : vector<8x32xf32>, vector<32x256xf32>, vector<8x256xf32> -> vector<8x256xf32>
    %58 = arith.addf %47, %57 : vector<8x256xf32>
    %c0_48 = arith.constant 0 : index
    %c4 = arith.constant 4 : index
    %c0_49 = arith.constant 0 : index
    %59 = vector.load %arg1[%c0_48, %c4, %c0_49] : memref<8x8x16xf32, #tpu.memory_space<vmem>>, vector<8x1x16xf32>
    %60 = vector.shape_cast %59 : vector<8x1x16xf32> to vector<8x16xf32>
    %cst_50 = arith.constant dense<0.000000e+00> : vector<8x32xf32>
    %61 = tpu.matmul %60, %13, %cst_50 {dimension_numbers = #tpu.dot_dimension_numbers<[1], [0], [0], [1], [0, 0, 1, 1], [], []>} : vector<8x16xf32>, vector<16x32xf32>, vector<8x32xf32> -> vector<8x32xf32>
    %62 = vector.broadcast %14 : vector<1x32xf32> to vector<8x32xf32>
    %63 = arith.addf %61, %62 : vector<8x32xf32>
    %cst_51 = arith.constant 0.000000e+00 : f32
    %64 = vector.broadcast %cst_51 : f32 to vector<8x32xf32>
    %65 = arith.maximumf %63, %64 : vector<8x32xf32>
    %c4_52 = arith.constant 4 : index
    %c0_53 = arith.constant 0 : index
    %c0_54 = arith.constant 0 : index
    %66 = vector.load %arg7[%c4_52, %c0_53, %c0_54] : memref<8x32x256xf32, #tpu.memory_space<vmem>>, vector<1x32x256xf32>
    %67 = vector.shape_cast %66 : vector<1x32x256xf32> to vector<32x256xf32>
    %cst_55 = arith.constant dense<0.000000e+00> : vector<8x256xf32>
    %68 = tpu.matmul %65, %67, %cst_55 {dimension_numbers = #tpu.dot_dimension_numbers<[1], [0], [0], [1], [0, 0, 1, 1], [], []>} : vector<8x32xf32>, vector<32x256xf32>, vector<8x256xf32> -> vector<8x256xf32>
    %69 = arith.addf %58, %68 : vector<8x256xf32>
    %c0_56 = arith.constant 0 : index
    %c5 = arith.constant 5 : index
    %c0_57 = arith.constant 0 : index
    %70 = vector.load %arg1[%c0_56, %c5, %c0_57] : memref<8x8x16xf32, #tpu.memory_space<vmem>>, vector<8x1x16xf32>
    %71 = vector.shape_cast %70 : vector<8x1x16xf32> to vector<8x16xf32>
    %cst_58 = arith.constant dense<0.000000e+00> : vector<8x32xf32>
    %72 = tpu.matmul %71, %13, %cst_58 {dimension_numbers = #tpu.dot_dimension_numbers<[1], [0], [0], [1], [0, 0, 1, 1], [], []>} : vector<8x16xf32>, vector<16x32xf32>, vector<8x32xf32> -> vector<8x32xf32>
    %73 = vector.broadcast %14 : vector<1x32xf32> to vector<8x32xf32>
    %74 = arith.addf %72, %73 : vector<8x32xf32>
    %cst_59 = arith.constant 0.000000e+00 : f32
    %75 = vector.broadcast %cst_59 : f32 to vector<8x32xf32>
    %76 = arith.maximumf %74, %75 : vector<8x32xf32>
    %c5_60 = arith.constant 5 : index
    %c0_61 = arith.constant 0 : index
    %c0_62 = arith.constant 0 : index
    %77 = vector.load %arg7[%c5_60, %c0_61, %c0_62] : memref<8x32x256xf32, #tpu.memory_space<vmem>>, vector<1x32x256xf32>
    %78 = vector.shape_cast %77 : vector<1x32x256xf32> to vector<32x256xf32>
    %cst_63 = arith.constant dense<0.000000e+00> : vector<8x256xf32>
    %79 = tpu.matmul %76, %78, %cst_63 {dimension_numbers = #tpu.dot_dimension_numbers<[1], [0], [0], [1], [0, 0, 1, 1], [], []>} : vector<8x32xf32>, vector<32x256xf32>, vector<8x256xf32> -> vector<8x256xf32>
    %80 = arith.addf %69, %79 : vector<8x256xf32>
    %c0_64 = arith.constant 0 : index
    %c6 = arith.constant 6 : index
    %c0_65 = arith.constant 0 : index
    %81 = vector.load %arg1[%c0_64, %c6, %c0_65] : memref<8x8x16xf32, #tpu.memory_space<vmem>>, vector<8x1x16xf32>
    %82 = vector.shape_cast %81 : vector<8x1x16xf32> to vector<8x16xf32>
    %cst_66 = arith.constant dense<0.000000e+00> : vector<8x32xf32>
    %83 = tpu.matmul %82, %13, %cst_66 {dimension_numbers = #tpu.dot_dimension_numbers<[1], [0], [0], [1], [0, 0, 1, 1], [], []>} : vector<8x16xf32>, vector<16x32xf32>, vector<8x32xf32> -> vector<8x32xf32>
    %84 = vector.broadcast %14 : vector<1x32xf32> to vector<8x32xf32>
    %85 = arith.addf %83, %84 : vector<8x32xf32>
    %cst_67 = arith.constant 0.000000e+00 : f32
    %86 = vector.broadcast %cst_67 : f32 to vector<8x32xf32>
    %87 = arith.maximumf %85, %86 : vector<8x32xf32>
    %c6_68 = arith.constant 6 : index
    %c0_69 = arith.constant 0 : index
    %c0_70 = arith.constant 0 : index
    %88 = vector.load %arg7[%c6_68, %c0_69, %c0_70] : memref<8x32x256xf32, #tpu.memory_space<vmem>>, vector<1x32x256xf32>
    %89 = vector.shape_cast %88 : vector<1x32x256xf32> to vector<32x256xf32>
    %cst_71 = arith.constant dense<0.000000e+00> : vector<8x256xf32>
    %90 = tpu.matmul %87, %89, %cst_71 {dimension_numbers = #tpu.dot_dimension_numbers<[1], [0], [0], [1], [0, 0, 1, 1], [], []>} : vector<8x32xf32>, vector<32x256xf32>, vector<8x256xf32> -> vector<8x256xf32>
    %91 = arith.addf %80, %90 : vector<8x256xf32>
    %c0_72 = arith.constant 0 : index
    %c7 = arith.constant 7 : index
    %c0_73 = arith.constant 0 : index
    %92 = vector.load %arg1[%c0_72, %c7, %c0_73] : memref<8x8x16xf32, #tpu.memory_space<vmem>>, vector<8x1x16xf32>
    %93 = vector.shape_cast %92 : vector<8x1x16xf32> to vector<8x16xf32>
    %cst_74 = arith.constant dense<0.000000e+00> : vector<8x32xf32>
    %94 = tpu.matmul %93, %13, %cst_74 {dimension_numbers = #tpu.dot_dimension_numbers<[1], [0], [0], [1], [0, 0, 1, 1], [], []>} : vector<8x16xf32>, vector<16x32xf32>, vector<8x32xf32> -> vector<8x32xf32>
    %95 = vector.broadcast %14 : vector<1x32xf32> to vector<8x32xf32>
    %96 = arith.addf %94, %95 : vector<8x32xf32>
    %cst_75 = arith.constant 0.000000e+00 : f32
    %97 = vector.broadcast %cst_75 : f32 to vector<8x32xf32>
    %98 = arith.maximumf %96, %97 : vector<8x32xf32>
    %c7_76 = arith.constant 7 : index
    %c0_77 = arith.constant 0 : index
    %c0_78 = arith.constant 0 : index
    %99 = vector.load %arg7[%c7_76, %c0_77, %c0_78] : memref<8x32x256xf32, #tpu.memory_space<vmem>>, vector<1x32x256xf32>
    %100 = vector.shape_cast %99 : vector<1x32x256xf32> to vector<32x256xf32>
    %cst_79 = arith.constant dense<0.000000e+00> : vector<8x256xf32>
    %101 = tpu.matmul %98, %100, %cst_79 {dimension_numbers = #tpu.dot_dimension_numbers<[1], [0], [0], [1], [0, 0, 1, 1], [], []>} : vector<8x32xf32>, vector<32x256xf32>, vector<8x256xf32> -> vector<8x256xf32>
    %102 = arith.addf %91, %101 : vector<8x256xf32>
    %cst_80 = arith.constant 0.000000e+00 : f32
    %103 = vector.broadcast %cst_80 : f32 to vector<8x256xf32>
    %104 = arith.maximumf %102, %103 : vector<8x256xf32>
    %c0_81 = arith.constant 0 : index
    %c0_82 = arith.constant 0 : index
    %105 = vector.load %arg10[%c0_81, %c0_82] : memref<8x256xf32, #tpu.memory_space<vmem>>, vector<8x256xf32>
    tpu.vector_store %arg10[%c0_81, %c0_82], %104 {strides = array<i32>} : memref<8x256xf32, #tpu.memory_space<vmem>>, vector<8x256xf32>,
    return
  }
  func.func @transform_0(%arg0: i32) -> (i32, i32, i32) {
    %c0_i32 = arith.constant 0 : i32
    %c0_i32_0 = arith.constant 0 : i32
    %c0_i32_1 = arith.constant 0 : i32
    return %arg0, %c0_i32, %c0_i32_0 : i32, i32, i32
  }
  func.func @transform_1(%arg0: i32) -> (i32, i32) {
    %c0_i32 = arith.constant 0 : i32
    %c0_i32_0 = arith.constant 0 : i32
    return %arg0, %c0_i32 : i32, i32
  }
  func.func @transform_2(%arg0: i32) -> (i32, i32) {
    %c0_i32 = arith.constant 0 : i32
    %c0_i32_0 = arith.constant 0 : i32
    %c0_i32_1 = arith.constant 0 : i32
    return %c0_i32, %c0_i32_0 : i32, i32
  }
  func.func @transform_3(%arg0: i32) -> (i32, i32) {
    %c0_i32 = arith.constant 0 : i32
    %c0_i32_0 = arith.constant 0 : i32
    %c0_i32_1 = arith.constant 0 : i32
    return %c0_i32, %c0_i32_0 : i32, i32
  }
  func.func @transform_4(%arg0: i32) -> (i32, i32) {
    %c0_i32 = arith.constant 0 : i32
    %c0_i32_0 = arith.constant 0 : i32
    %c0_i32_1 = arith.constant 0 : i32
    return %c0_i32, %c0_i32_0 : i32, i32
  }
  func.func @transform_5(%arg0: i32) -> (i32, i32) {
    %c0_i32 = arith.constant 0 : i32
    %c0_i32_0 = arith.constant 0 : i32
    %c0_i32_1 = arith.constant 0 : i32
    return %c0_i32, %c0_i32_0 : i32, i32
  }
  func.func @transform_6(%arg0: i32) -> (i32, i32, i32) {
    %c0_i32 = arith.constant 0 : i32
    %c0_i32_0 = arith.constant 0 : i32
    %c0_i32_1 = arith.constant 0 : i32
    %c0_i32_2 = arith.constant 0 : i32
    return %c0_i32, %c0_i32_0, %c0_i32_1 : i32, i32, i32
  }
  func.func @transform_7(%arg0: i32) -> (i32, i32) {
    %c0_i32 = arith.constant 0 : i32
    %c0_i32_0 = arith.constant 0 : i32
    %c0_i32_1 = arith.constant 0 : i32
    return %c0_i32, %c0_i32_0 : i32, i32
  }
  func.func @transform_8(%arg0: i32) -> (i32, i32) {
    %c0_i32 = arith.constant 0 : i32
    %c0_i32_0 = arith.constant 0 : i32
    %c0_i32_1 = arith.constant 0 : i32
    return %c0_i32, %c0_i32_0 : i32, i32
  }
  func.func @transform_9(%arg0: i32) -> (i32, i32) {
    %c0_i32 = arith.constant 0 : i32
    %c0_i32_0 = arith.constant 0 : i32
    return %arg0, %c0_i32 : i32, i32
  }
}

</mosaic_0001>

<llo_original>
// kernel: tpu_custom_call.1
$region0: #{tpu_custom_call.1}
  #allocation0 [shape = 'u32[]', space=smem, size = 0x4, offset = 0x4, fixed_abs, tag = 'smem constant byte address 0x4 - core index']
  #allocation1 [shape = 'u32[144,128]{1,0:T(1,128)}', space=vmem, size = 0x12000, scoped, tag = 'internal scratch']
  %s0 = inlined_call_operand.hbm [shape: f32[16,8,16], index: 0, kind: input, shape index: {}]
  %s1 = inlined_call_operand.vmem [shape: f32[16,8], index: 1, kind: input, shape index: {}]
  %s2 = inlined_call_operand.vmem [shape: f32[16,32], index: 2, kind: input, shape index: {}]
  %s3 = inlined_call_operand.vmem [shape: f32[1,32], index: 3, kind: input, shape index: {}]
  %s4 = inlined_call_operand.vmem [shape: f32[8,32], index: 4, kind: input, shape index: {}]
  %s5 = inlined_call_operand.vmem [shape: f32[1,32], index: 5, kind: input, shape index: {}]
  %s6 = inlined_call_operand.hbm [shape: f32[8,32,256], index: 6, kind: input, shape index: {}]
  %s7 = inlined_call_operand.hbm [shape: f32[32,256], index: 7, kind: input, shape index: {}]
  %s8 = inlined_call_operand.vmem [shape: f32[1,256], index: 8, kind: input, shape index: {}]
  %s9 = inlined_call_operand.hbm [shape: f32[16,256], index: 9, kind: output, shape index: {}]
  %s10 = sld [smem:[#allocation0]]
  $region81: #{tpu_custom_call.1} parent=0
    _
  %s12 = ssub.s32 1, %s10
  %s13 = scalar_select 0, %s12, %s10
  $region1: #{tpu_custom_call.1} parent=0
    #allocation2 [shape = 'u8[65536]{0}', space=vmem, size = 0x10000, scoped, tag = 'input window, operand 0']
    #allocation3 [shape = 's32[2]{0}', space=sflag, size = 0x8, scoped, tag = 'scoped memory for tpu_custom_call.1']
    #allocation4 [shape = 's32[2]{0}', space=sflag, size = 0x8, scoped, tag = 'scoped memory for tpu_custom_call.1']
    #allocation5 [shape = 'u8[262144]{0}', space=vmem, size = 0x40000, scoped, tag = 'input window, operand 6, single buffered']
    #allocation6 [shape = 's32[1]{0}', space=sflag, size = 0x4, scoped, tag = 'scoped memory for tpu_custom_call.1']
    #allocation7 [shape = 'u8[32768]{0}', space=vmem, size = 0x8000, scoped, tag = 'input window, operand 7, single buffered']
    #allocation8 [shape = 'u8[16384]{0}', space=vmem, size = 0x4000, scoped, tag = 'output window, operand 0']
    %14 = vsyncpa [#allocation3], 0
    %s15 = scalar_lea.sflag [#allocation3], 1
    %16 = vsyncpa %s15, 0
    %17 = vsyncpa [#allocation6], 0
    %18 = vsyncpa [#allocation4], 0
    %s19 = scalar_lea.sflag [#allocation4], 1
    %20 = vsyncpa %s19, 0
    loop: start=0, step=1, limit=4
    $region2: #{tpu_custom_call.1} parent=1 // loop_pre_header
      _
    $region3: #{tpu_custom_call.1} parent=1 // loop_header
      %s22 = sphi 0, %s26
      %p23 = scmp.ge.s32.totalorder %s22, 4
      %s32 = sphi 0, %s34
      %s35 = sphi 0, %s32
      %s36 = sphi 0, %s35
      %s52 = sphi 0, %s36
      %s58 = sphi 0, %s60
      %s61 = sphi 0, %s58
      %s62 = sphi 0, %s61
      %s78 = sphi 0, %s62
      %s82 = sphi 0, %s82
      %s84 = sphi 0, %s82
      %s85 = sphi 0, %s84
      %s99 = sphi 0, %s85
      %s103 = sphi 0, %s103
      %s105 = sphi 0, %s103
      %s106 = sphi 0, %s105
      %s120 = sphi 0, %s106
      %s124 = sphi 0, %s124
      %s126 = sphi 0, %s124
      %s127 = sphi 0, %s126
      %s141 = sphi 0, %s127
      %s145 = sphi 0, %s145
      %s147 = sphi 0, %s145
      %s148 = sphi 0, %s147
      %s162 = sphi 0, %s148
      %s166 = sphi 0, %s166
      %s168 = sphi 0, %s166
      %s169 = sphi 0, %s168
      %s183 = sphi 0, %s169
      %s187 = sphi 0, %s187
      %s189 = sphi 0, %s187
      %s190 = sphi 0, %s189
      %s204 = sphi 0, %s190
      %s208 = sphi 0, %s208
      %s210 = sphi 0, %s208
      %s211 = sphi 0, %s210
      %s225 = sphi 0, %s211
      %s231 = sphi 0, %s233
      %s234 = sphi 0, %s231
      %s235 = sphi 0, %s234
      %s251 = sphi 0, %s235
    $region4: #{tpu_custom_call.1} parent=1 // loop_header_branch
      %25 = sbr.rel (%p23) target = $region8
    $region5: #{tpu_custom_call.1} parent=1 // loop_body
      %s27 = ssub.s32 %s22, 1
      %s28 = ssub.s32 %s22, 2
      %s29 = sadd.s32 %s22, 1
      %s30 = ssub.s32 %s22, %s29
      %p31 = scmp.eq.s32.totalorder %s30, 0
      %s33 = sadd.s32 %s32, 1
      %s34 = scalar_select %p31, %s32, %s33
      %p37 = pneg %p31
      %p38 = scmp.eq.s32.totalorder %s22, 1
      %p39 = por %p37, %p38
      %p40 = scmp.ne.s32.totalorder %s32, %s35
      %p41 = scmp.eq.s32.totalorder %s22, 0
      %p42 = por %p40, %p41
      %p43 = scmp.ne.s32.totalorder %s32, %s35
      %p44 = scmp.eq.s32.totalorder %s27, 1
      %p45 = por %p43, %p44
      %p46 = scmp.ne.s32.totalorder %s35, %s36
      %p47 = scmp.eq.s32.totalorder %s27, 0
      %p48 = por %p46, %p47
      %p49 = scmp.ne.s32.totalorder %s35, %s36
      %p50 = scmp.eq.s32.totalorder %s28, 1
      %p51 = por %p49, %p50
      %p53 = scmp.ne.s32.totalorder %s36, %s52
      %p54 = scmp.eq.s32.totalorder %s28, 0
      %p55 = por %p53, %p54
      %s56 = ssub.s32 %s22, %s29
      %p57 = scmp.eq.s32.totalorder %s56, 0
      %s59 = sadd.s32 %s58, 1
      %s60 = scalar_select %p57, %s58, %s59
      %p63 = pneg %p57
      %p64 = scmp.eq.s32.totalorder %s22, 1
      %p65 = por %p63, %p64
      %p66 = scmp.ne.s32.totalorder %s58, %s61
      %p67 = scmp.eq.s32.totalorder %s22, 0
      %p68 = por %p66, %p67
      %p69 = scmp.ne.s32.totalorder %s58, %s61
      %p70 = scmp.eq.s32.totalorder %s27, 1
      %p71 = por %p69, %p70
      %p72 = scmp.ne.s32.totalorder %s61, %s62
      %p73 = scmp.eq.s32.totalorder %s27, 0
      %p74 = por %p72, %p73
      %p75 = scmp.ne.s32.totalorder %s61, %s62
      %p76 = scmp.eq.s32.totalorder %s28, 1
      %p77 = por %p75, %p76
      %p79 = scmp.ne.s32.totalorder %s62, %s78
      %p80 = scmp.eq.s32.totalorder %s28, 0
      %p81 = por %p79, %p80
      %s83 = sadd.s32 %s82, 1
      %p86 = scmp.eq.s32.totalorder %s22, 1
      %p87 = scmp.ne.s32.totalorder %s82, %s84
      %p88 = scmp.eq.s32.totalorder %s22, 0
      %p89 = por %p87, %p88
      %p90 = scmp.ne.s32.totalorder %s82, %s84
      %p91 = scmp.eq.s32.totalorder %s27, 1
      %p92 = por %p90, %p91
      %p93 = scmp.ne.s32.totalorder %s84, %s85
      %p94 = scmp.eq.s32.totalorder %s27, 0
      %p95 = por %p93, %p94
      %p96 = scmp.ne.s32.totalorder %s84, %s85
      %p97 = scmp.eq.s32.totalorder %s28, 1
      %p98 = por %p96, %p97
      %p100 = scmp.ne.s32.totalorder %s85, %s99
      %p101 = scmp.eq.s32.totalorder %s28, 0
      %p102 = por %p100, %p101
      %s104 = sadd.s32 %s103, 1
      %p107 = scmp.eq.s32.totalorder %s22, 1
      %p108 = scmp.ne.s32.totalorder %s103, %s105
      %p109 = scmp.eq.s32.totalorder %s22, 0
      %p110 = por %p108, %p109
      %p111 = scmp.ne.s32.totalorder %s103, %s105
      %p112 = scmp.eq.s32.totalorder %s27, 1
      %p113 = por %p111, %p112
      %p114 = scmp.ne.s32.totalorder %s105, %s106
      %p115 = scmp.eq.s32.totalorder %s27, 0
      %p116 = por %p114, %p115
      %p117 = scmp.ne.s32.totalorder %s105, %s106
      %p118 = scmp.eq.s32.totalorder %s28, 1
      %p119 = por %p117, %p118
      %p121 = scmp.ne.s32.totalorder %s106, %s120
      %p122 = scmp.eq.s32.totalorder %s28, 0
      %p123 = por %p121, %p122
      %s125 = sadd.s32 %s124, 1
      %p128 = scmp.eq.s32.totalorder %s22, 1
      %p129 = scmp.ne.s32.totalorder %s124, %s126
      %p130 = scmp.eq.s32.totalorder %s22, 0
      %p131 = por %p129, %p130
      %p132 = scmp.ne.s32.totalorder %s124, %s126
      %p133 = scmp.eq.s32.totalorder %s27, 1
      %p134 = por %p132, %p133
      %p135 = scmp.ne.s32.totalorder %s126, %s127
      %p136 = scmp.eq.s32.totalorder %s27, 0
      %p137 = por %p135, %p136
      %p138 = scmp.ne.s32.totalorder %s126, %s127
      %p139 = scmp.eq.s32.totalorder %s28, 1
      %p140 = por %p138, %p139
      %p142 = scmp.ne.s32.totalorder %s127, %s141
      %p143 = scmp.eq.s32.totalorder %s28, 0
      %p144 = por %p142, %p143
      %s146 = sadd.s32 %s145, 1
      %p149 = scmp.eq.s32.totalorder %s22, 1
      %p150 = scmp.ne.s32.totalorder %s145, %s147
      %p151 = scmp.eq.s32.totalorder %s22, 0
      %p152 = por %p150, %p151
      %p153 = scmp.ne.s32.totalorder %s145, %s147
      %p154 = scmp.eq.s32.totalorder %s27, 1
      %p155 = por %p153, %p154
      %p156 = scmp.ne.s32.totalorder %s147, %s148
      %p157 = scmp.eq.s32.totalorder %s27, 0
      %p158 = por %p156, %p157
      %p159 = scmp.ne.s32.totalorder %s147, %s148
      %p160 = scmp.eq.s32.totalorder %s28, 1
      %p161 = por %p159, %p160
      %p163 = scmp.ne.s32.totalorder %s148, %s162
      %p164 = scmp.eq.s32.totalorder %s28, 0
      %p165 = por %p163, %p164
      %s167 = sadd.s32 %s166, 1
      %p170 = scmp.eq.s32.totalorder %s22, 1
      %p171 = scmp.ne.s32.totalorder %s166, %s168
      %p172 = scmp.eq.s32.totalorder %s22, 0
      %p173 = por %p171, %p172
      %p174 = scmp.ne.s32.totalorder %s166, %s168
      %p175 = scmp.eq.s32.totalorder %s27, 1
      %p176 = por %p174, %p175
      %p177 = scmp.ne.s32.totalorder %s168, %s169
      %p178 = scmp.eq.s32.totalorder %s27, 0
      %p179 = por %p177, %p178
      %p180 = scmp.ne.s32.totalorder %s168, %s169
      %p181 = scmp.eq.s32.totalorder %s28, 1
      %p182 = por %p180, %p181
      %p184 = scmp.ne.s32.totalorder %s169, %s183
      %p185 = scmp.eq.s32.totalorder %s28, 0
      %p186 = por %p184, %p185
      %s188 = sadd.s32 %s187, 1
      %p191 = scmp.eq.s32.totalorder %s22, 1
      %p192 = scmp.ne.s32.totalorder %s187, %s189
      %p193 = scmp.eq.s32.totalorder %s22, 0
      %p194 = por %p192, %p193
      %p195 = scmp.ne.s32.totalorder %s187, %s189
      %p196 = scmp.eq.s32.totalorder %s27, 1
      %p197 = por %p195, %p196
      %p198 = scmp.ne.s32.totalorder %s189, %s190
      %p199 = scmp.eq.s32.totalorder %s27, 0
      %p200 = por %p198, %p199
      %p201 = scmp.ne.s32.totalorder %s189, %s190
      %p202 = scmp.eq.s32.totalorder %s28, 1
      %p203 = por %p201, %p202
      %p205 = scmp.ne.s32.totalorder %s190, %s204
      %p206 = scmp.eq.s32.totalorder %s28, 0
      %p207 = por %p205, %p206
      %s209 = sadd.s32 %s208, 1
      %p212 = scmp.eq.s32.totalorder %s22, 1
      %p213 = scmp.ne.s32.totalorder %s208, %s210
      %p214 = scmp.eq.s32.totalorder %s22, 0
      %p215 = por %p213, %p214
      %p216 = scmp.ne.s32.totalorder %s208, %s210
      %p217 = scmp.eq.s32.totalorder %s27, 1
      %p218 = por %p216, %p217
      %p219 = scmp.ne.s32.totalorder %s210, %s211
      %p220 = scmp.eq.s32.totalorder %s27, 0
      %p221 = por %p219, %p220
      %p222 = scmp.ne.s32.totalorder %s210, %s211
      %p223 = scmp.eq.s32.totalorder %s28, 1
      %p224 = por %p222, %p223
      %p226 = scmp.ne.s32.totalorder %s211, %s225
      %p227 = scmp.eq.s32.totalorder %s28, 0
      %p228 = por %p226, %p227
      %s229 = ssub.s32 %s22, %s29
      %p230 = scmp.eq.s32.totalorder %s229, 0
      %s232 = sadd.s32 %s231, 1
      %s233 = scalar_select %p230, %s231, %s232
      %p236 = pneg %p230
      %p237 = scmp.eq.s32.totalorder %s22, 1
      %p238 = por %p236, %p237
      %p239 = scmp.ne.s32.totalorder %s231, %s234
      %p240 = scmp.eq.s32.totalorder %s22, 0
      %p241 = por %p239, %p240
      %p242 = scmp.ne.s32.totalorder %s231, %s234
      %p243 = scmp.eq.s32.totalorder %s27, 1
      %p244 = por %p242, %p243
      %p245 = scmp.ne.s32.totalorder %s234, %s235
      %p246 = scmp.eq.s32.totalorder %s27, 0
      %p247 = por %p245, %p246
      %p248 = scmp.ne.s32.totalorder %s234, %s235
      %p249 = scmp.eq.s32.totalorder %s28, 1
      %p250 = por %p248, %p249
      %p252 = scmp.ne.s32.totalorder %s235, %s251
      %p253 = scmp.eq.s32.totalorder %s28, 0
      %p254 = por %p252, %p253
      %p255 = scmp.le.s32.totalorder 1, %s22
      %p256 = scmp.lt.s32.totalorder %s22, 3
      %p257 = pnand %p255, %p256
      %p258 = pneg %p257
      // Predicated region
      $region9: #{tpu_custom_call.1} parent=5 // pred_check
        _
      $region10: #{tpu_custom_call.1} parent=5 // pred_check_branch
        %260 = sbr.rel (%p257) target = $region12
      $region11: #{tpu_custom_call.1} parent=5 // pred_region
        %s261 = ssub.s32 %s22, 1
        // Predicated region
        $region13: #{tpu_custom_call.1} parent=11 // pred_check
          %p262 = pneg %p95
        $region14: #{tpu_custom_call.1} parent=11 // pred_check_branch
          %264 = sbr.rel (%p262) target = $region16
        $region15: #{tpu_custom_call.1} parent=11 // pred_region
          _
        $region16: #{tpu_custom_call.1} parent=11 // pred_fallthru
          _
        // Predicated region
        $region17: #{tpu_custom_call.1} parent=11 // pred_check
          %p265 = pneg %p116
        $region18: #{tpu_custom_call.1} parent=11 // pred_check_branch
          %267 = sbr.rel (%p265) target = $region20
        $region19: #{tpu_custom_call.1} parent=11 // pred_region
          _
        $region20: #{tpu_custom_call.1} parent=11 // pred_fallthru
          _
        // Predicated region
        $region21: #{tpu_custom_call.1} parent=11 // pred_check
          %p268 = pneg %p137
        $region22: #{tpu_custom_call.1} parent=11 // pred_check_branch
          %270 = sbr.rel (%p268) target = $region24
        $region23: #{tpu_custom_call.1} parent=11 // pred_region
          _
        $region24: #{tpu_custom_call.1} parent=11 // pred_fallthru
          _
        // Predicated region
        $region25: #{tpu_custom_call.1} parent=11 // pred_check
          %p271 = pneg %p158
        $region26: #{tpu_custom_call.1} parent=11 // pred_check_branch
          %273 = sbr.rel (%p271) target = $region28
        $region27: #{tpu_custom_call.1} parent=11 // pred_region
          _
        $region28: #{tpu_custom_call.1} parent=11 // pred_fallthru
          _
        // Predicated region
        $region29: #{tpu_custom_call.1} parent=11 // pred_check
          %p274 = pneg %p179
        $region30: #{tpu_custom_call.1} parent=11 // pred_check_branch
          %276 = sbr.rel (%p274) target = $region32
        $region31: #{tpu_custom_call.1} parent=11 // pred_region
          %s278 = ssub.s32 8192, 8192
          %279 = vsyncadd [#allocation6], %s278
          %s280 = sshll.u32 [#allocation5], 4
          %s281 = int_to_ptr.vmem [resolvable:$true] %s280
          %286 = dma.hbm_to_vmem [thread:$0]  %s6, 8192, %s281, [#allocation6], 256, 256, 16
        $region32: #{tpu_custom_call.1} parent=11 // pred_fallthru
          _
        // Predicated region
        $region33: #{tpu_custom_call.1} parent=11 // pred_check
          %p287 = pneg %p200
        $region34: #{tpu_custom_call.1} parent=11 // pred_check_branch
          %289 = sbr.rel (%p287) target = $region36
        $region35: #{tpu_custom_call.1} parent=11 // pred_region
          %s291 = ssub.s32 1024, 1024
          %292 = vsyncadd [#allocation6], %s291
          %s293 = sshll.u32 [#allocation7], 4
          %s294 = int_to_ptr.vmem [resolvable:$true] %s293
          %299 = dma.hbm_to_vmem [thread:$0]  %s7, 1024, %s294, [#allocation6], 256, 256, 16
        $region36: #{tpu_custom_call.1} parent=11 // pred_fallthru
          _
        // Predicated region
        $region37: #{tpu_custom_call.1} parent=11 // pred_check
          %p300 = pneg %p221
        $region38: #{tpu_custom_call.1} parent=11 // pred_check_branch
          %302 = sbr.rel (%p300) target = $region40
        $region39: #{tpu_custom_call.1} parent=11 // pred_region
          _
        $region40: #{tpu_custom_call.1} parent=11 // pred_fallthru
          _
      $region12: #{tpu_custom_call.1} parent=5 // pred_fallthru
        _
      %p303 = scmp.lt.s32.totalorder %s22, 2
      // Predicated region
      $region41: #{tpu_custom_call.1} parent=5 // pred_check
        %p304 = pneg %p303
      $region42: #{tpu_custom_call.1} parent=5 // pred_check_branch
        %306 = sbr.rel (%p304) target = $region44
      $region43: #{tpu_custom_call.1} parent=5 // pred_region
        // Predicated region
        $region45: #{tpu_custom_call.1} parent=43 // pred_check
          %p307 = pneg %p42
        $region46: #{tpu_custom_call.1} parent=43 // pred_check_branch
          %309 = sbr.rel (%p307) target = $region48
        $region47: #{tpu_custom_call.1} parent=43 // pred_region
          %s310 = sand.u32 %s32, 1
          %s311 = scalar_lea.sflag [#allocation3], %s310
          %s312 = sand.u32 %s32, 1
          %s313 = smul.addr %s312, 64
          %s314 = scalar_lea.vmem [#allocation2], %s313
          %s315 = smul.u32 8, %s22
          %s317 = ssub.s32 1024, 1024
          %318 = vsyncadd %s311, %s317
          %s319 = smul.addr %s315, 128
          %s320 = scalar_lea.hbm %s0, %s319
          %s321 = sshll.u32 %s314, 4
          %s322 = int_to_ptr.vmem [resolvable:$true] %s321
          %327 = dma.hbm_to_vmem [thread:$0]  %s320, 1024, %s322, %s311, 128, 128, 8
        $region48: #{tpu_custom_call.1} parent=43 // pred_fallthru
          _
        // Predicated region
        $region49: #{tpu_custom_call.1} parent=43 // pred_check
          %p328 = pneg %p68
        $region50: #{tpu_custom_call.1} parent=43 // pred_check_branch
          %330 = sbr.rel (%p328) target = $region52
        $region51: #{tpu_custom_call.1} parent=43 // pred_region
          %p331 = scmp.lt.s32.totalorder %s22, 1
          %s332 = scalar_select %p331, %s22, 1
          %s333 = smul.addr %s332, 8
          %s334 = scalar_lea.vmem %s1, %s333
        $region52: #{tpu_custom_call.1} parent=43 // pred_fallthru
          _
      $region44: #{tpu_custom_call.1} parent=5 // pred_fallthru
        _
      %p335 = scmp.le.s32.totalorder 1, %s22
      %p336 = scmp.lt.s32.totalorder %s22, 3
      %p337 = pnand %p335, %p336
      %p338 = pneg %p337
      // Predicated region
      $region53: #{tpu_custom_call.1} parent=5 // pred_check
        _
      $region54: #{tpu_custom_call.1} parent=5 // pred_check_branch
        %340 = sbr.rel (%p337) target = $region56
      $region55: #{tpu_custom_call.1} parent=5 // pred_region
        %s341 = ssub.s32 %s22, 1
        %s342 = sand.u32 %s35, 1
        %s343 = scalar_lea.sflag [#allocation3], %s342
        %s344 = sand.u32 %s35, 1
        %s345 = smul.addr %s344, 64
        %s346 = scalar_lea.vmem [#allocation2], %s345
        // Predicated region
        $region57: #{tpu_custom_call.1} parent=55 // pred_check
          %p347 = pneg %p48
        $region58: #{tpu_custom_call.1} parent=55 // pred_check_branch
          %349 = sbr.rel (%p347) target = $region60
        $region59: #{tpu_custom_call.1} parent=55 // pred_region
          %350 = dma.done %s343, 1024
        $region60: #{tpu_custom_call.1} parent=55 // pred_fallthru
          _
        // Predicated region
        $region61: #{tpu_custom_call.1} parent=55 // pred_check
          %p351 = pneg %p179
        $region62: #{tpu_custom_call.1} parent=55 // pred_check_branch
          %353 = sbr.rel (%p351) target = $region64
        $region63: #{tpu_custom_call.1} parent=55 // pred_region
          %354 = dma.done [#allocation6], 8192
        $region64: #{tpu_custom_call.1} parent=55 // pred_fallthru
          _
        // Predicated region
        $region65: #{tpu_custom_call.1} parent=55 // pred_check
          %p355 = pneg %p200
        $region66: #{tpu_custom_call.1} parent=55 // pred_check_branch
          %357 = sbr.rel (%p355) target = $region68
        $region67: #{tpu_custom_call.1} parent=55 // pred_region
          %358 = dma.done [#allocation6], 1024
        $region68: #{tpu_custom_call.1} parent=55 // pred_fallthru
          _
        %s359 = sand.u32 %s35, 1
        %s360 = scalar_lea.sflag [#allocation3], %s359
        %s361 = sand.u32 %s35, 1
        %s362 = smul.addr %s361, 64
        %s363 = scalar_lea.vmem [#allocation2], %s362
        %p364 = pneg %p48
        %p365 = pneg %p45
        %p366 = scmp.lt.s32.totalorder %s27, 1
        %s367 = scalar_select %p366, %s27, 1
        %s368 = smul.addr %s367, 8
        %s369 = scalar_lea.vmem %s1, %s368
        %p370 = pneg %p74
        %p371 = pneg %p71
        %p372 = pneg %p95
        %p373 = pneg %p92
        %p374 = pneg %p116
        %p375 = pneg %p113
        %p376 = pneg %p137
        %p377 = pneg %p134
        %p378 = pneg %p158
        %p379 = pneg %p155
        %p380 = pneg %p179
        %p381 = pneg %p176
        %p382 = pneg %p200
        %p383 = pneg %p197
        %p384 = pneg %p221
        %p385 = pneg %p218
        %p386 = pneg %p247
        %p387 = pneg %p244
        %s388 = sand.u32 %s234, 1
        %s389 = scalar_lea.sflag [#allocation4], %s388
        %s390 = sand.u32 %s234, 1
        %s391 = smul.addr %s390, 16
        %s392 = scalar_lea.vmem [#allocation8], %s391
        %s393 = smul.u32 8, %s27
        %p394 = scmp.lt.s32.totalorder %s27, 1
        %s395 = scalar_select %p394, %s27, 1
        %s396 = smul.addr %s395, 8
        %s397 = scalar_lea.vmem %s1, %s396
        %v398 = vld [vmem:[%s397] sm:$0xff]
        %v399 = vld [vmem:[%s4] sm:$0xff]
        %v400 = vld [vmem:[%s5] sm:$0x1]
        %v402 = vlaneseq
        %v403 = vshrl.u32 %v402, 7
        %v404 = vsub.s32 0, %v403
        %v405 = vrot.slane %v400, %v404
        %vm407 = vcmask 64512
        %v409 = vsel %vm407, %v398, 0
        %411 = vmatprep.subr.mxu0 0.0
        %412 = vmatpush1.msra.mxu0 0.0
        %413 = vmatprep.subr.mxu0 0.0
        %414 = vmatpush1.msra.mxu0 0.0
        %415 = vmatprep.subr.mxu0 0.0
        %416 = vmatpush1.msra.mxu0 0.0
        %417 = vmatprep.subr.mxu0 0.0
        %418 = vmatpush1.msra.mxu0 0.0
        %419 = vmatprep.subr.mxu0 0.0
        %420 = vmatpush1.msra.mxu0 0.0
        %421 = vmatprep.subr.mxu0 0.0
        %422 = vmatpush1.msra.mxu0 0.0
        %423 = vmatprep.subr.mxu0 0.0
        %424 = vmatpush1.msra.mxu0 0.0
        %425 = vmatprep.subr.mxu0 0.0
        %426 = vmatpush1.msra.mxu0 0.0
        %427 = vmatprep.subr.mxu0 0.0
        %428 = vmatpush1.msra.mxu0 0.0
        %429 = vmatprep.subr.mxu0 0.0
        %430 = vmatpush1.msra.mxu0 0.0
        %431 = vmatprep.subr.mxu0 0.0
        %432 = vmatpush1.msra.mxu0 0.0
        %433 = vmatprep.subr.mxu0 0.0
        %434 = vmatpush1.msra.mxu0 0.0
        %435 = vmatprep.subr.mxu0 0.0
        %436 = vmatpush1.msra.mxu0 0.0
        %437 = vmatprep.subr.mxu0 0.0
        %438 = vmatpush1.msra.mxu0 0.0
        %439 = vmatprep.subr.mxu0 0.0
        %440 = vmatpush1.msra.mxu0 0.0
        %441 = vmatprep.subr.mxu0 0.0
        %442 = vmatpush1.msra.mxu0 %v399
        %443 = vmatprep.subr.mxu0 0.0
        %444 = vmatpush2.msra.mxu0 0.0
        %445 = vmatprep.subr.mxu0 0.0
        %446 = vmatpush2.msra.mxu0 0.0
        %447 = vmatprep.subr.mxu0 0.0
        %448 = vmatpush2.msra.mxu0 0.0
        %449 = vmatprep.subr.mxu0 0.0
        %450 = vmatpush2.msra.mxu0 0.0
        %451 = vmatprep.subr.mxu0 0.0
        %452 = vmatpush2.msra.mxu0 0.0
        %453 = vmatprep.subr.mxu0 0.0
        %454 = vmatpush2.msra.mxu0 0.0
        %455 = vmatprep.subr.mxu0 0.0
        %456 = vmatpush2.msra.mxu0 0.0
        %457 = vmatprep.subr.mxu0 0.0
        %458 = vmatpush2.msra.mxu0 0.0
        %459 = vmatprep.subr.mxu0 0.0
        %460 = vmatpush2.msra.mxu0 0.0
        %461 = vmatprep.subr.mxu0 0.0
        %462 = vmatpush2.msra.mxu0 0.0
        %463 = vmatprep.subr.mxu0 0.0
        %464 = vmatpush2.msra.mxu0 0.0
        %465 = vmatprep.subr.mxu0 0.0
        %466 = vmatpush2.msra.mxu0 0.0
        %467 = vmatprep.subr.mxu0 0.0
        %468 = vmatpush2.msra.mxu0 0.0
        %469 = vmatprep.subr.mxu0 0.0
        %470 = vmatpush2.msra.mxu0 0.0
        %471 = vmatprep.subr.mxu0 0.0
        %472 = vmatpush2.msra.mxu0 0.0
        %473 = vmatprep.subr.mxu0 0.0
        %474 = vmatpush2.msra.mxu0 0.0
        %475 = vmatprep.mubr.f32.mxu0 0.0
        %476 = vmatmul.mubr.f32.gmra.mxu0 %v409
        %v477 = vpop.f32.mrf.mxu0
        %v478 = vadd.f32 %v405, %v477
        %v479 = vpop.f32.mrf.mxu0
        %480 = vdwg.mxu0
        %v481 = vmax.f32 %v478, 0.0
        %v482 = vld [vmem:[#allocation7] sm:$0xff]
        %v483 = vld [vmem:[#allocation7 + $0x8] sm:$0xff]
        %v484 = vld [vmem:[#allocation7 + $0x10] sm:$0xff]
        %v485 = vld [vmem:[#allocation7 + $0x18] sm:$0xff]
        %v486 = vld [vmem:[#allocation7 + $0x20] sm:$0xff]
        %v487 = vld [vmem:[#allocation7 + $0x28] sm:$0xff]
        %v488 = vld [vmem:[#allocation7 + $0x30] sm:$0xff]
        %v489 = vld [vmem:[#allocation7 + $0x38] sm:$0xff]
        %v490 = vld [vmem:[%s8] sm:$0x3]
        %v492 = vlaneseq
        %v493 = vshrl.u32 %v492, 7
        %v494 = vsub.s32 0, %v493
        %v495 = vrot.slane %v490, %v494
        %v496 = vlaneseq
        %v497 = vshrl.u32 %v496, 7
        %v498 = vsub.s32 1, %v497
        %v499 = vrot.slane %v490, %v498
        %vm502 = vcmask 261120
        %v504 = vsel %vm502, %v481, 0
        %506 = vmatprep.subr.mxu0 0.0
        %507 = vmatpush1.msra.mxu0 0.0
        %508 = vmatprep.subr.mxu0 0.0
        %509 = vmatpush1.msra.mxu0 0.0
        %510 = vmatprep.subr.mxu0 0.0
        %511 = vmatpush1.msra.mxu0 0.0
        %512 = vmatprep.subr.mxu0 0.0
        %513 = vmatpush1.msra.mxu0 0.0
        %514 = vmatprep.subr.mxu0 0.0
        %515 = vmatpush1.msra.mxu0 0.0
        %516 = vmatprep.subr.mxu0 0.0
        %517 = vmatpush1.msra.mxu0 0.0
        %518 = vmatprep.subr.mxu0 0.0
        %519 = vmatpush1.msra.mxu0 0.0
        %520 = vmatprep.subr.mxu0 0.0
        %521 = vmatpush1.msra.mxu0 0.0
        %522 = vmatprep.subr.mxu0 0.0
        %523 = vmatpush1.msra.mxu0 0.0
        %524 = vmatprep.subr.mxu0 0.0
        %525 = vmatpush1.msra.mxu0 0.0
        %526 = vmatprep.subr.mxu0 0.0
        %527 = vmatpush1.msra.mxu0 0.0
        %528 = vmatprep.subr.mxu0 0.0
        %529 = vmatpush1.msra.mxu0 0.0
        %530 = vmatprep.subr.mxu0 %v489
        %531 = vmatpush1.msra.mxu0 %v488
        %532 = vmatprep.subr.mxu0 %v487
        %533 = vmatpush1.msra.mxu0 %v486
        %534 = vmatprep.subr.mxu0 %v485
        %535 = vmatpush1.msra.mxu0 %v484
        %536 = vmatprep.subr.mxu0 %v483
        %537 = vmatpush1.msra.mxu0 %v482
        %538 = vmatprep.subr.mxu0 0.0
        %539 = vmatpush2.msra.mxu0 0.0
        %540 = vmatprep.subr.mxu0 0.0
        %541 = vmatpush2.msra.mxu0 0.0
        %542 = vmatprep.subr.mxu0 0.0
        %543 = vmatpush2.msra.mxu0 0.0
        %544 = vmatprep.subr.mxu0 0.0
        %545 = vmatpush2.msra.mxu0 0.0
        %546 = vmatprep.subr.mxu0 0.0
        %547 = vmatpush2.msra.mxu0 0.0
        %548 = vmatprep.subr.mxu0 0.0
        %549 = vmatpush2.msra.mxu0 0.0
        %550 = vmatprep.subr.mxu0 0.0
        %551 = vmatpush2.msra.mxu0 0.0
        %552 = vmatprep.subr.mxu0 0.0
        %553 = vmatpush2.msra.mxu0 0.0
        %554 = vmatprep.subr.mxu0 0.0
        %555 = vmatpush2.msra.mxu0 0.0
        %556 = vmatprep.subr.mxu0 0.0
        %557 = vmatpush2.msra.mxu0 0.0
        %558 = vmatprep.subr.mxu0 0.0
        %559 = vmatpush2.msra.mxu0 0.0
        %560 = vmatprep.subr.mxu0 0.0
        %561 = vmatpush2.msra.mxu0 0.0
        %562 = vmatprep.subr.mxu0 0.0
        %563 = vmatpush2.msra.mxu0 0.0
        %564 = vmatprep.subr.mxu0 0.0
        %565 = vmatpush2.msra.mxu0 0.0
        %566 = vmatprep.subr.mxu0 0.0
        %567 = vmatpush2.msra.mxu0 0.0
        %568 = vmatprep.subr.mxu0 0.0
        %569 = vmatpush2.msra.mxu0 0.0
        %570 = vmatprep.mubr.f32.mxu0 0.0
        %571 = vmatmul.mubr.f32.gmra.mxu0 %v504
        %v572 = vpop.f32.mrf.mxu0
        %v573 = vadd.f32 %v495, %v572
        %v574 = vpop.f32.mrf.mxu0
        %v575 = vadd.f32 %v499, %v574
        %576 = vdwg.mxu0
        %v577 = vld [vmem:[%s2] sm:$0xff]
        %v578 = vld [vmem:[%s2 + $0x8] sm:$0xff]
        %v579 = vld [vmem:[%s3] sm:$0x1]
        %v580 = vld [vmem:[%s346] sm:$0x1]
        %v581 = vld [vmem:[%s346 + $0x8] sm:$0x1]
        %v582 = vld [vmem:[%s346 + $0x10] sm:$0x1]
        %v583 = vld [vmem:[%s346 + $0x18] sm:$0x1]
        %v584 = vld [vmem:[%s346 + $0x20] sm:$0x1]
        %v585 = vld [vmem:[%s346 + $0x28] sm:$0x1]
        %v586 = vld [vmem:[%s346 + $0x30] sm:$0x1]
        %v587 = vld [vmem:[%s346 + $0x38] sm:$0x1]
        %v589 = vlaneseq
        %v590 = vshrl.u32 %v589, 7
        %v591 = vsub.s32 0, %v590
        %v592 = vrot.slane %v579, %v591
        %v602 = vrot.slane %v581, 7
        %vm603 = vcmask 1041409
        %v604 = vsel %vm603, %v602, %v580
        %v605 = vrot.slane %v582, 6
        %vm606 = vcmask 1042434
        %v607 = vsel %vm606, %v605, %v604
        %v608 = vrot.slane %v583, 5
        %vm609 = vcmask 1043459
        %v610 = vsel %vm609, %v608, %v607
        %v611 = vrot.slane %v584, 4
        %vm612 = vcmask 1044484
        %v613 = vsel %vm612, %v611, %v610
        %v614 = vrot.slane %v585, 3
        %vm615 = vcmask 1045509
        %v616 = vsel %vm615, %v614, %v613
        %v617 = vrot.slane %v586, 2
        %vm618 = vcmask 1046534
        %v619 = vsel %vm618, %v617, %v616
        %v620 = vrot.slane %v587, 1
        %vm621 = vcmask 1047559
        %v622 = vsel %vm621, %v620, %v619
        %vm623 = vcmask 130048
        %v624 = vsel %vm623, %v622, 0
        %626 = vmatprep.subr.mxu0 0.0
        %627 = vmatpush1.msra.mxu0 0.0
        %628 = vmatprep.subr.mxu0 0.0
        %629 = vmatpush1.msra.mxu0 0.0
        %630 = vmatprep.subr.mxu0 0.0
        %631 = vmatpush1.msra.mxu0 0.0
        %632 = vmatprep.subr.mxu0 0.0
        %633 = vmatpush1.msra.mxu0 0.0
        %634 = vmatprep.subr.mxu0 0.0
        %635 = vmatpush1.msra.mxu0 0.0
        %636 = vmatprep.subr.mxu0 0.0
        %637 = vmatpush1.msra.mxu0 0.0
        %638 = vmatprep.subr.mxu0 0.0
        %639 = vmatpush1.msra.mxu0 0.0
        %640 = vmatprep.subr.mxu0 0.0
        %641 = vmatpush1.msra.mxu0 0.0
        %642 = vmatprep.subr.mxu0 0.0
        %643 = vmatpush1.msra.mxu0 0.0
        %644 = vmatprep.subr.mxu0 0.0
        %645 = vmatpush1.msra.mxu0 0.0
        %646 = vmatprep.subr.mxu0 0.0
        %647 = vmatpush1.msra.mxu0 0.0
        %648 = vmatprep.subr.mxu0 0.0
        %649 = vmatpush1.msra.mxu0 0.0
        %650 = vmatprep.subr.mxu0 0.0
        %651 = vmatpush1.msra.mxu0 0.0
        %652 = vmatprep.subr.mxu0 0.0
        %653 = vmatpush1.msra.mxu0 0.0
        %654 = vmatprep.subr.mxu0 0.0
        %655 = vmatpush1.msra.mxu0 %v578
        %656 = vmatprep.subr.mxu0 0.0
        %657 = vmatpush1.msra.mxu0 %v577
        %658 = vmatprep.subr.mxu0 0.0
        %659 = vmatpush2.msra.mxu0 0.0
        %660 = vmatprep.subr.mxu0 0.0
        %661 = vmatpush2.msra.mxu0 0.0
        %662 = vmatprep.subr.mxu0 0.0
        %663 = vmatpush2.msra.mxu0 0.0
        %664 = vmatprep.subr.mxu0 0.0
        %665 = vmatpush2.msra.mxu0 0.0
        %666 = vmatprep.subr.mxu0 0.0
        %667 = vmatpush2.msra.mxu0 0.0
        %668 = vmatprep.subr.mxu0 0.0
        %669 = vmatpush2.msra.mxu0 0.0
        %670 = vmatprep.subr.mxu0 0.0
        %671 = vmatpush2.msra.mxu0 0.0
        %672 = vmatprep.subr.mxu0 0.0
        %673 = vmatpush2.msra.mxu0 0.0
        %674 = vmatprep.subr.mxu0 0.0
        %675 = vmatpush2.msra.mxu0 0.0
        %676 = vmatprep.subr.mxu0 0.0
        %677 = vmatpush2.msra.mxu0 0.0
        %678 = vmatprep.subr.mxu0 0.0
        %679 = vmatpush2.msra.mxu0 0.0
        %680 = vmatprep.subr.mxu0 0.0
        %681 = vmatpush2.msra.mxu0 0.0
        %682 = vmatprep.subr.mxu0 0.0
        %683 = vmatpush2.msra.mxu0 0.0
        %684 = vmatprep.subr.mxu0 0.0
        %685 = vmatpush2.msra.mxu0 0.0
        %686 = vmatprep.subr.mxu0 0.0
        %687 = vmatpush2.msra.mxu0 0.0
        %688 = vmatprep.subr.mxu0 0.0
        %689 = vmatpush2.msra.mxu0 0.0
        %690 = vmatprep.mubr.f32.mxu0 0.0
        %691 = vmatmul.mubr.f32.gmra.mxu0 %v624
        %v692 = vpop.f32.mrf.mxu0
        %v693 = vadd.f32 %v592, %v692
        %v694 = vpop.f32.mrf.mxu0
        %695 = vdwg.mxu0
        %v696 = vmax.f32 %v693, 0.0
        %v697 = vld [vmem:[#allocation5] sm:$0xff]
        %v698 = vld [vmem:[#allocation5 + $0x8] sm:$0xff]
        %v699 = vld [vmem:[#allocation5 + $0x10] sm:$0xff]
        %v700 = vld [vmem:[#allocation5 + $0x18] sm:$0xff]
        %v701 = vld [vmem:[#allocation5 + $0x20] sm:$0xff]
        %v702 = vld [vmem:[#allocation5 + $0x28] sm:$0xff]
        %v703 = vld [vmem:[#allocation5 + $0x30] sm:$0xff]
        %v704 = vld [vmem:[#allocation5 + $0x38] sm:$0xff]
        %v706 = vsel %vm502, %v696, 0
        %708 = vmatprep.subr.mxu0 0.0
        %709 = vmatpush1.msra.mxu0 0.0
        %710 = vmatprep.subr.mxu0 0.0
        %711 = vmatpush1.msra.mxu0 0.0
        %712 = vmatprep.subr.mxu0 0.0
        %713 = vmatpush1.msra.mxu0 0.0
        %714 = vmatprep.subr.mxu0 0.0
        %715 = vmatpush1.msra.mxu0 0.0
        %716 = vmatprep.subr.mxu0 0.0
        %717 = vmatpush1.msra.mxu0 0.0
        %718 = vmatprep.subr.mxu0 0.0
        %719 = vmatpush1.msra.mxu0 0.0
        %720 = vmatprep.subr.mxu0 0.0
        %721 = vmatpush1.msra.mxu0 0.0
        %722 = vmatprep.subr.mxu0 0.0
        %723 = vmatpush1.msra.mxu0 0.0
        %724 = vmatprep.subr.mxu0 0.0
        %725 = vmatpush1.msra.mxu0 0.0
        %726 = vmatprep.subr.mxu0 0.0
        %727 = vmatpush1.msra.mxu0 0.0
        %728 = vmatprep.subr.mxu0 0.0
        %729 = vmatpush1.msra.mxu0 0.0
        %730 = vmatprep.subr.mxu0 0.0
        %731 = vmatpush1.msra.mxu0 0.0
        %732 = vmatprep.subr.mxu0 %v704
        %733 = vmatpush1.msra.mxu0 %v703
        %734 = vmatprep.subr.mxu0 %v702
        %735 = vmatpush1.msra.mxu0 %v701
        %736 = vmatprep.subr.mxu0 %v700
        %737 = vmatpush1.msra.mxu0 %v699
        %738 = vmatprep.subr.mxu0 %v698
        %739 = vmatpush1.msra.mxu0 %v697
        %740 = vmatprep.subr.mxu0 0.0
        %741 = vmatpush2.msra.mxu0 0.0
        %742 = vmatprep.subr.mxu0 0.0
        %743 = vmatpush2.msra.mxu0 0.0
        %744 = vmatprep.subr.mxu0 0.0
        %745 = vmatpush2.msra.mxu0 0.0
        %746 = vmatprep.subr.mxu0 0.0
        %747 = vmatpush2.msra.mxu0 0.0
        %748 = vmatprep.subr.mxu0 0.0
        %749 = vmatpush2.msra.mxu0 0.0
        %750 = vmatprep.subr.mxu0 0.0
        %751 = vmatpush2.msra.mxu0 0.0
        %752 = vmatprep.subr.mxu0 0.0
        %753 = vmatpush2.msra.mxu0 0.0
        %754 = vmatprep.subr.mxu0 0.0
        %755 = vmatpush2.msra.mxu0 0.0
        %756 = vmatprep.subr.mxu0 0.0
        %757 = vmatpush2.msra.mxu0 0.0
        %758 = vmatprep.subr.mxu0 0.0
        %759 = vmatpush2.msra.mxu0 0.0
        %760 = vmatprep.subr.mxu0 0.0
        %761 = vmatpush2.msra.mxu0 0.0
        %762 = vmatprep.subr.mxu0 0.0
        %763 = vmatpush2.msra.mxu0 0.0
        %764 = vmatprep.subr.mxu0 0.0
        %765 = vmatpush2.msra.mxu0 0.0
        %766 = vmatprep.subr.mxu0 0.0
        %767 = vmatpush2.msra.mxu0 0.0
        %768 = vmatprep.subr.mxu0 0.0
        %769 = vmatpush2.msra.mxu0 0.0
        %770 = vmatprep.subr.mxu0 0.0
        %771 = vmatpush2.msra.mxu0 0.0
        %772 = vmatprep.mubr.f32.mxu0 0.0
        %773 = vmatmul.mubr.f32.gmra.mxu0 %v706
        %v774 = vpop.f32.mrf.mxu0
        %v775 = vadd.f32 0.0, %v774
        %v776 = vpop.f32.mrf.mxu0
        %v777 = vadd.f32 0.0, %v776
        %778 = vdwg.mxu0
        %v779 = vadd.f32 %v573, %v775
        %v780 = vadd.f32 %v575, %v777
        %v781 = vld [vmem:[%s346 + $0x1] sm:$0x1]
        %v782 = vld [vmem:[%s346 + $0x9] sm:$0x1]
        %v783 = vld [vmem:[%s346 + $0x11] sm:$0x1]
        %v784 = vld [vmem:[%s346 + $0x19] sm:$0x1]
        %v785 = vld [vmem:[%s346 + $0x21] sm:$0x1]
        %v786 = vld [vmem:[%s346 + $0x29] sm:$0x1]
        %v787 = vld [vmem:[%s346 + $0x31] sm:$0x1]
        %v788 = vld [vmem:[%s346 + $0x39] sm:$0x1]
        %v797 = vrot.slane %v782, 7
        %v798 = vsel %vm603, %v797, %v781
        %v799 = vrot.slane %v783, 6
        %v800 = vsel %vm606, %v799, %v798
        %v801 = vrot.slane %v784, 5
        %v802 = vsel %vm609, %v801, %v800
        %v803 = vrot.slane %v785, 4
        %v804 = vsel %vm612, %v803, %v802
        %v805 = vrot.slane %v786, 3
        %v806 = vsel %vm615, %v805, %v804
        %v807 = vrot.slane %v787, 2
        %v808 = vsel %vm618, %v807, %v806
        %v809 = vrot.slane %v788, 1
        %v810 = vsel %vm621, %v809, %v808
        %v811 = vsel %vm623, %v810, 0
        %813 = vmatprep.subr.mxu0 0.0
        %814 = vmatpush1.msra.mxu0 0.0
        %815 = vmatprep.subr.mxu0 0.0
        %816 = vmatpush1.msra.mxu0 0.0
        %817 = vmatprep.subr.mxu0 0.0
        %818 = vmatpush1.msra.mxu0 0.0
        %819 = vmatprep.subr.mxu0 0.0
        %820 = vmatpush1.msra.mxu0 0.0
        %821 = vmatprep.subr.mxu0 0.0
        %822 = vmatpush1.msra.mxu0 0.0
        %823 = vmatprep.subr.mxu0 0.0
        %824 = vmatpush1.msra.mxu0 0.0
        %825 = vmatprep.subr.mxu0 0.0
        %826 = vmatpush1.msra.mxu0 0.0
        %827 = vmatprep.subr.mxu0 0.0
        %828 = vmatpush1.msra.mxu0 0.0
        %829 = vmatprep.subr.mxu0 0.0
        %830 = vmatpush1.msra.mxu0 0.0
        %831 = vmatprep.subr.mxu0 0.0
        %832 = vmatpush1.msra.mxu0 0.0
        %833 = vmatprep.subr.mxu0 0.0
        %834 = vmatpush1.msra.mxu0 0.0
        %835 = vmatprep.subr.mxu0 0.0
        %836 = vmatpush1.msra.mxu0 0.0
        %837 = vmatprep.subr.mxu0 0.0
        %838 = vmatpush1.msra.mxu0 0.0
        %839 = vmatprep.subr.mxu0 0.0
        %840 = vmatpush1.msra.mxu0 0.0
        %841 = vmatprep.subr.mxu0 0.0
        %842 = vmatpush1.msra.mxu0 %v578
        %843 = vmatprep.subr.mxu0 0.0
        %844 = vmatpush1.msra.mxu0 %v577
        %845 = vmatprep.subr.mxu0 0.0
        %846 = vmatpush2.msra.mxu0 0.0
        %847 = vmatprep.subr.mxu0 0.0
        %848 = vmatpush2.msra.mxu0 0.0
        %849 = vmatprep.subr.mxu0 0.0
        %850 = vmatpush2.msra.mxu0 0.0
        %851 = vmatprep.subr.mxu0 0.0
        %852 = vmatpush2.msra.mxu0 0.0
        %853 = vmatprep.subr.mxu0 0.0
        %854 = vmatpush2.msra.mxu0 0.0
        %855 = vmatprep.subr.mxu0 0.0
        %856 = vmatpush2.msra.mxu0 0.0
        %857 = vmatprep.subr.mxu0 0.0
        %858 = vmatpush2.msra.mxu0 0.0
        %859 = vmatprep.subr.mxu0 0.0
        %860 = vmatpush2.msra.mxu0 0.0
        %861 = vmatprep.subr.mxu0 0.0
        %862 = vmatpush2.msra.mxu0 0.0
        %863 = vmatprep.subr.mxu0 0.0
        %864 = vmatpush2.msra.mxu0 0.0
        %865 = vmatprep.subr.mxu0 0.0
        %866 = vmatpush2.msra.mxu0 0.0
        %867 = vmatprep.subr.mxu0 0.0
        %868 = vmatpush2.msra.mxu0 0.0
        %869 = vmatprep.subr.mxu0 0.0
        %870 = vmatpush2.msra.mxu0 0.0
        %871 = vmatprep.subr.mxu0 0.0
        %872 = vmatpush2.msra.mxu0 0.0
        %873 = vmatprep.subr.mxu0 0.0
        %874 = vmatpush2.msra.mxu0 0.0
        %875 = vmatprep.subr.mxu0 0.0
        %876 = vmatpush2.msra.mxu0 0.0
        %877 = vmatprep.mubr.f32.mxu0 0.0
        %878 = vmatmul.mubr.f32.gmra.mxu0 %v811
        %v879 = vpop.f32.mrf.mxu0
        %v880 = vadd.f32 %v592, %v879
        %v881 = vpop.f32.mrf.mxu0
        %882 = vdwg.mxu0
        %v883 = vmax.f32 %v880, 0.0
        %s884 = scalar_lea.vmem [#allocation5], 64
        %v885 = vld [vmem:[%s884] sm:$0xff]
        %v886 = vld [vmem:[%s884 + $0x8] sm:$0xff]
        %v887 = vld [vmem:[%s884 + $0x10] sm:$0xff]
        %v888 = vld [vmem:[%s884 + $0x18] sm:$0xff]
        %v889 = vld [vmem:[%s884 + $0x20] sm:$0xff]
        %v890 = vld [vmem:[%s884 + $0x28] sm:$0xff]
        %v891 = vld [vmem:[%s884 + $0x30] sm:$0xff]
        %v892 = vld [vmem:[%s884 + $0x38] sm:$0xff]
        %v894 = vsel %vm502, %v883, 0
        %896 = vmatprep.subr.mxu0 0.0
        %897 = vmatpush1.msra.mxu0 0.0
        %898 = vmatprep.subr.mxu0 0.0
        %899 = vmatpush1.msra.mxu0 0.0
        %900 = vmatprep.subr.mxu0 0.0
        %901 = vmatpush1.msra.mxu0 0.0
        %902 = vmatprep.subr.mxu0 0.0
        %903 = vmatpush1.msra.mxu0 0.0
        %904 = vmatprep.subr.mxu0 0.0
        %905 = vmatpush1.msra.mxu0 0.0
        %906 = vmatprep.subr.mxu0 0.0
        %907 = vmatpush1.msra.mxu0 0.0
        %908 = vmatprep.subr.mxu0 0.0
        %909 = vmatpush1.msra.mxu0 0.0
        %910 = vmatprep.subr.mxu0 0.0
        %911 = vmatpush1.msra.mxu0 0.0
        %912 = vmatprep.subr.mxu0 0.0
        %913 = vmatpush1.msra.mxu0 0.0
        %914 = vmatprep.subr.mxu0 0.0
        %915 = vmatpush1.msra.mxu0 0.0
        %916 = vmatprep.subr.mxu0 0.0
        %917 = vmatpush1.msra.mxu0 0.0
        %918 = vmatprep.subr.mxu0 0.0
        %919 = vmatpush1.msra.mxu0 0.0
        %920 = vmatprep.subr.mxu0 %v892
        %921 = vmatpush1.msra.mxu0 %v891
        %922 = vmatprep.subr.mxu0 %v890
        %923 = vmatpush1.msra.mxu0 %v889
        %924 = vmatprep.subr.mxu0 %v888
        %925 = vmatpush1.msra.mxu0 %v887
        %926 = vmatprep.subr.mxu0 %v886
        %927 = vmatpush1.msra.mxu0 %v885
        %928 = vmatprep.subr.mxu0 0.0
        %929 = vmatpush2.msra.mxu0 0.0
        %930 = vmatprep.subr.mxu0 0.0
        %931 = vmatpush2.msra.mxu0 0.0
        %932 = vmatprep.subr.mxu0 0.0
        %933 = vmatpush2.msra.mxu0 0.0
        %934 = vmatprep.subr.mxu0 0.0
        %935 = vmatpush2.msra.mxu0 0.0
        %936 = vmatprep.subr.mxu0 0.0
        %937 = vmatpush2.msra.mxu0 0.0
        %938 = vmatprep.subr.mxu0 0.0
        %939 = vmatpush2.msra.mxu0 0.0
        %940 = vmatprep.subr.mxu0 0.0
        %941 = vmatpush2.msra.mxu0 0.0
        %942 = vmatprep.subr.mxu0 0.0
        %943 = vmatpush2.msra.mxu0 0.0
        %944 = vmatprep.subr.mxu0 0.0
        %945 = vmatpush2.msra.mxu0 0.0
        %946 = vmatprep.subr.mxu0 0.0
        %947 = vmatpush2.msra.mxu0 0.0
        %948 = vmatprep.subr.mxu0 0.0
        %949 = vmatpush2.msra.mxu0 0.0
        %950 = vmatprep.subr.mxu0 0.0
        %951 = vmatpush2.msra.mxu0 0.0
        %952 = vmatprep.subr.mxu0 0.0
        %953 = vmatpush2.msra.mxu0 0.0
        %954 = vmatprep.subr.mxu0 0.0
        %955 = vmatpush2.msra.mxu0 0.0
        %956 = vmatprep.subr.mxu0 0.0
        %957 = vmatpush2.msra.mxu0 0.0
        %958 = vmatprep.subr.mxu0 0.0
        %959 = vmatpush2.msra.mxu0 0.0
        %960 = vmatprep.mubr.f32.mxu0 0.0
        %961 = vmatmul.mubr.f32.gmra.mxu0 %v894
        %v962 = vpop.f32.mrf.mxu0
        %v963 = vadd.f32 0.0, %v962
        %v964 = vpop.f32.mrf.mxu0
        %v965 = vadd.f32 0.0, %v964
        %966 = vdwg.mxu0
        %v967 = vadd.f32 %v779, %v963
        %v968 = vadd.f32 %v780, %v965
        %v969 = vld [vmem:[%s346 + $0x2] sm:$0x1]
        %v970 = vld [vmem:[%s346 + $0xa] sm:$0x1]
        %v971 = vld [vmem:[%s346 + $0x12] sm:$0x1]
        %v972 = vld [vmem:[%s346 + $0x1a] sm:$0x1]
        %v973 = vld [vmem:[%s346 + $0x22] sm:$0x1]
        %v974 = vld [vmem:[%s346 + $0x2a] sm:$0x1]
        %v975 = vld [vmem:[%s346 + $0x32] sm:$0x1]
        %v976 = vld [vmem:[%s346 + $0x3a] sm:$0x1]
        %v985 = vrot.slane %v970, 7
        %v986 = vsel %vm603, %v985, %v969
        %v987 = vrot.slane %v971, 6
        %v988 = vsel %vm606, %v987, %v986
        %v989 = vrot.slane %v972, 5
        %v990 = vsel %vm609, %v989, %v988
        %v991 = vrot.slane %v973, 4
        %v992 = vsel %vm612, %v991, %v990
        %v993 = vrot.slane %v974, 3
        %v994 = vsel %vm615, %v993, %v992
        %v995 = vrot.slane %v975, 2
        %v996 = vsel %vm618, %v995, %v994
        %v997 = vrot.slane %v976, 1
        %v998 = vsel %vm621, %v997, %v996
        %v999 = vsel %vm623, %v998, 0
        %1001 = vmatprep.subr.mxu0 0.0
        %1002 = vmatpush1.msra.mxu0 0.0
        %1003 = vmatprep.subr.mxu0 0.0
        %1004 = vmatpush1.msra.mxu0 0.0
        %1005 = vmatprep.subr.mxu0 0.0
        %1006 = vmatpush1.msra.mxu0 0.0
        %1007 = vmatprep.subr.mxu0 0.0
        %1008 = vmatpush1.msra.mxu0 0.0
        %1009 = vmatprep.subr.mxu0 0.0
        %1010 = vmatpush1.msra.mxu0 0.0
        %1011 = vmatprep.subr.mxu0 0.0
        %1012 = vmatpush1.msra.mxu0 0.0
        %1013 = vmatprep.subr.mxu0 0.0
        %1014 = vmatpush1.msra.mxu0 0.0
        %1015 = vmatprep.subr.mxu0 0.0
        %1016 = vmatpush1.msra.mxu0 0.0
        %1017 = vmatprep.subr.mxu0 0.0
        %1018 = vmatpush1.msra.mxu0 0.0
        %1019 = vmatprep.subr.mxu0 0.0
        %1020 = vmatpush1.msra.mxu0 0.0
        %1021 = vmatprep.subr.mxu0 0.0
        %1022 = vmatpush1.msra.mxu0 0.0
        %1023 = vmatprep.subr.mxu0 0.0
        %1024 = vmatpush1.msra.mxu0 0.0
        %1025 = vmatprep.subr.mxu0 0.0
        %1026 = vmatpush1.msra.mxu0 0.0
        %1027 = vmatprep.subr.mxu0 0.0
        %1028 = vmatpush1.msra.mxu0 0.0
        %1029 = vmatprep.subr.mxu0 0.0
        %1030 = vmatpush1.msra.mxu0 %v578
        %1031 = vmatprep.subr.mxu0 0.0
        %1032 = vmatpush1.msra.mxu0 %v577
        %1033 = vmatprep.subr.mxu0 0.0
        %1034 = vmatpush2.msra.mxu0 0.0
        %1035 = vmatprep.subr.mxu0 0.0
        %1036 = vmatpush2.msra.mxu0 0.0
        %1037 = vmatprep.subr.mxu0 0.0
        %1038 = vmatpush2.msra.mxu0 0.0
        %1039 = vmatprep.subr.mxu0 0.0
        %1040 = vmatpush2.msra.mxu0 0.0
        %1041 = vmatprep.subr.mxu0 0.0
        %1042 = vmatpush2.msra.mxu0 0.0
        %1043 = vmatprep.subr.mxu0 0.0
        %1044 = vmatpush2.msra.mxu0 0.0
        %1045 = vmatprep.subr.mxu0 0.0
        %1046 = vmatpush2.msra.mxu0 0.0
        %1047 = vmatprep.subr.mxu0 0.0
        %1048 = vmatpush2.msra.mxu0 0.0
        %1049 = vmatprep.subr.mxu0 0.0
        %1050 = vmatpush2.msra.mxu0 0.0
        %1051 = vmatprep.subr.mxu0 0.0
        %1052 = vmatpush2.msra.mxu0 0.0
        %1053 = vmatprep.subr.mxu0 0.0
        %1054 = vmatpush2.msra.mxu0 0.0
        %1055 = vmatprep.subr.mxu0 0.0
        %1056 = vmatpush2.msra.mxu0 0.0
        %1057 = vmatprep.subr.mxu0 0.0
        %1058 = vmatpush2.msra.mxu0 0.0
        %1059 = vmatprep.subr.mxu0 0.0
        %1060 = vmatpush2.msra.mxu0 0.0
        %1061 = vmatprep.subr.mxu0 0.0
        %1062 = vmatpush2.msra.mxu0 0.0
        %1063 = vmatprep.subr.mxu0 0.0
        %1064 = vmatpush2.msra.mxu0 0.0
        %1065 = vmatprep.mubr.f32.mxu0 0.0
        %1066 = vmatmul.mubr.f32.gmra.mxu0 %v999
        %v1067 = vpop.f32.mrf.mxu0
        %v1068 = vadd.f32 %v592, %v1067
        %v1069 = vpop.f32.mrf.mxu0
        %1070 = vdwg.mxu0
        %v1071 = vmax.f32 %v1068, 0.0
        %s1072 = scalar_lea.vmem [#allocation5], 128
        %v1073 = vld [vmem:[%s1072] sm:$0xff]
        %v1074 = vld [vmem:[%s1072 + $0x8] sm:$0xff]
        %v1075 = vld [vmem:[%s1072 + $0x10] sm:$0xff]
        %v1076 = vld [vmem:[%s1072 + $0x18] sm:$0xff]
        %v1077 = vld [vmem:[%s1072 + $0x20] sm:$0xff]
        %v1078 = vld [vmem:[%s1072 + $0x28] sm:$0xff]
        %v1079 = vld [vmem:[%s1072 + $0x30] sm:$0xff]
        %v1080 = vld [vmem:[%s1072 + $0x38] sm:$0xff]
        %v1082 = vsel %vm502, %v1071, 0
        %1084 = vmatprep.subr.mxu0 0.0
        %1085 = vmatpush1.msra.mxu0 0.0
        %1086 = vmatprep.subr.mxu0 0.0
        %1087 = vmatpush1.msra.mxu0 0.0
        %1088 = vmatprep.subr.mxu0 0.0
        %1089 = vmatpush1.msra.mxu0 0.0
        %1090 = vmatprep.subr.mxu0 0.0
        %1091 = vmatpush1.msra.mxu0 0.0
        %1092 = vmatprep.subr.mxu0 0.0
        %1093 = vmatpush1.msra.mxu0 0.0
        %1094 = vmatprep.subr.mxu0 0.0
        %1095 = vmatpush1.msra.mxu0 0.0
        %1096 = vmatprep.subr.mxu0 0.0
        %1097 = vmatpush1.msra.mxu0 0.0
        %1098 = vmatprep.subr.mxu0 0.0
        %1099 = vmatpush1.msra.mxu0 0.0
        %1100 = vmatprep.subr.mxu0 0.0
        %1101 = vmatpush1.msra.mxu0 0.0
        %1102 = vmatprep.subr.mxu0 0.0
        %1103 = vmatpush1.msra.mxu0 0.0
        %1104 = vmatprep.subr.mxu0 0.0
        %1105 = vmatpush1.msra.mxu0 0.0
        %1106 = vmatprep.subr.mxu0 0.0
        %1107 = vmatpush1.msra.mxu0 0.0
        %1108 = vmatprep.subr.mxu0 %v1080
        %1109 = vmatpush1.msra.mxu0 %v1079
        %1110 = vmatprep.subr.mxu0 %v1078
        %1111 = vmatpush1.msra.mxu0 %v1077
        %1112 = vmatprep.subr.mxu0 %v1076
        %1113 = vmatpush1.msra.mxu0 %v1075
        %1114 = vmatprep.subr.mxu0 %v1074
        %1115 = vmatpush1.msra.mxu0 %v1073
        %1116 = vmatprep.subr.mxu0 0.0
        %1117 = vmatpush2.msra.mxu0 0.0
        %1118 = vmatprep.subr.mxu0 0.0
        %1119 = vmatpush2.msra.mxu0 0.0
        %1120 = vmatprep.subr.mxu0 0.0
        %1121 = vmatpush2.msra.mxu0 0.0
        %1122 = vmatprep.subr.mxu0 0.0
        %1123 = vmatpush2.msra.mxu0 0.0
        %1124 = vmatprep.subr.mxu0 0.0
        %1125 = vmatpush2.msra.mxu0 0.0
        %1126 = vmatprep.subr.mxu0 0.0
        %1127 = vmatpush2.msra.mxu0 0.0
        %1128 = vmatprep.subr.mxu0 0.0
        %1129 = vmatpush2.msra.mxu0 0.0
        %1130 = vmatprep.subr.mxu0 0.0
        %1131 = vmatpush2.msra.mxu0 0.0
        %1132 = vmatprep.subr.mxu0 0.0
        %1133 = vmatpush2.msra.mxu0 0.0
        %1134 = vmatprep.subr.mxu0 0.0
        %1135 = vmatpush2.msra.mxu0 0.0
        %1136 = vmatprep.subr.mxu0 0.0
        %1137 = vmatpush2.msra.mxu0 0.0
        %1138 = vmatprep.subr.mxu0 0.0
        %1139 = vmatpush2.msra.mxu0 0.0
        %1140 = vmatprep.subr.mxu0 0.0
        %1141 = vmatpush2.msra.mxu0 0.0
        %1142 = vmatprep.subr.mxu0 0.0
        %1143 = vmatpush2.msra.mxu0 0.0
        %1144 = vmatprep.subr.mxu0 0.0
        %1145 = vmatpush2.msra.mxu0 0.0
        %1146 = vmatprep.subr.mxu0 0.0
        %1147 = vmatpush2.msra.mxu0 0.0
        %1148 = vmatprep.mubr.f32.mxu0 0.0
        %1149 = vmatmul.mubr.f32.gmra.mxu0 %v1082
        %v1150 = vpop.f32.mrf.mxu0
        %v1151 = vadd.f32 0.0, %v1150
        %v1152 = vpop.f32.mrf.mxu0
        %v1153 = vadd.f32 0.0, %v1152
        %1154 = vdwg.mxu0
        %v1155 = vadd.f32 %v967, %v1151
        %v1156 = vadd.f32 %v968, %v1153
        %v1157 = vld [vmem:[%s346 + $0x3] sm:$0x1]
        %v1158 = vld [vmem:[%s346 + $0xb] sm:$0x1]
        %v1159 = vld [vmem:[%s346 + $0x13] sm:$0x1]
        %v1160 = vld [vmem:[%s346 + $0x1b] sm:$0x1]
        %v1161 = vld [vmem:[%s346 + $0x23] sm:$0x1]
        %v1162 = vld [vmem:[%s346 + $0x2b] sm:$0x1]
        %v1163 = vld [vmem:[%s346 + $0x33] sm:$0x1]
        %v1164 = vld [vmem:[%s346 + $0x3b] sm:$0x1]
        %v1173 = vrot.slane %v1158, 7
        %v1174 = vsel %vm603, %v1173, %v1157
        %v1175 = vrot.slane %v1159, 6
        %v1176 = vsel %vm606, %v1175, %v1174
        %v1177 = vrot.slane %v1160, 5
        %v1178 = vsel %vm609, %v1177, %v1176
        %v1179 = vrot.slane %v1161, 4
        %v1180 = vsel %vm612, %v1179, %v1178
        %v1181 = vrot.slane %v1162, 3
        %v1182 = vsel %vm615, %v1181, %v1180
        %v1183 = vrot.slane %v1163, 2
        %v1184 = vsel %vm618, %v1183, %v1182
        %v1185 = vrot.slane %v1164, 1
        %v1186 = vsel %vm621, %v1185, %v1184
        %v1187 = vsel %vm623, %v1186, 0
        %1189 = vmatprep.subr.mxu0 0.0
        %1190 = vmatpush1.msra.mxu0 0.0
        %1191 = vmatprep.subr.mxu0 0.0
        %1192 = vmatpush1.msra.mxu0 0.0
        %1193 = vmatprep.subr.mxu0 0.0
        %1194 = vmatpush1.msra.mxu0 0.0
        %1195 = vmatprep.subr.mxu0 0.0
        %1196 = vmatpush1.msra.mxu0 0.0
        %1197 = vmatprep.subr.mxu0 0.0
        %1198 = vmatpush1.msra.mxu0 0.0
        %1199 = vmatprep.subr.mxu0 0.0
        %1200 = vmatpush1.msra.mxu0 0.0
        %1201 = vmatprep.subr.mxu0 0.0
        %1202 = vmatpush1.msra.mxu0 0.0
        %1203 = vmatprep.subr.mxu0 0.0
        %1204 = vmatpush1.msra.mxu0 0.0
        %1205 = vmatprep.subr.mxu0 0.0
        %1206 = vmatpush1.msra.mxu0 0.0
        %1207 = vmatprep.subr.mxu0 0.0
        %1208 = vmatpush1.msra.mxu0 0.0
        %1209 = vmatprep.subr.mxu0 0.0
        %1210 = vmatpush1.msra.mxu0 0.0
        %1211 = vmatprep.subr.mxu0 0.0
        %1212 = vmatpush1.msra.mxu0 0.0
        %1213 = vmatprep.subr.mxu0 0.0
        %1214 = vmatpush1.msra.mxu0 0.0
        %1215 = vmatprep.subr.mxu0 0.0
        %1216 = vmatpush1.msra.mxu0 0.0
        %1217 = vmatprep.subr.mxu0 0.0
        %1218 = vmatpush1.msra.mxu0 %v578
        %1219 = vmatprep.subr.mxu0 0.0
        %1220 = vmatpush1.msra.mxu0 %v577
        %1221 = vmatprep.subr.mxu0 0.0
        %1222 = vmatpush2.msra.mxu0 0.0
        %1223 = vmatprep.subr.mxu0 0.0
        %1224 = vmatpush2.msra.mxu0 0.0
        %1225 = vmatprep.subr.mxu0 0.0
        %1226 = vmatpush2.msra.mxu0 0.0
        %1227 = vmatprep.subr.mxu0 0.0
        %1228 = vmatpush2.msra.mxu0 0.0
        %1229 = vmatprep.subr.mxu0 0.0
        %1230 = vmatpush2.msra.mxu0 0.0
        %1231 = vmatprep.subr.mxu0 0.0
        %1232 = vmatpush2.msra.mxu0 0.0
        %1233 = vmatprep.subr.mxu0 0.0
        %1234 = vmatpush2.msra.mxu0 0.0
        %1235 = vmatprep.subr.mxu0 0.0
        %1236 = vmatpush2.msra.mxu0 0.0
        %1237 = vmatprep.subr.mxu0 0.0
        %1238 = vmatpush2.msra.mxu0 0.0
        %1239 = vmatprep.subr.mxu0 0.0
        %1240 = vmatpush2.msra.mxu0 0.0
        %1241 = vmatprep.subr.mxu0 0.0
        %1242 = vmatpush2.msra.mxu0 0.0
        %1243 = vmatprep.subr.mxu0 0.0
        %1244 = vmatpush2.msra.mxu0 0.0
        %1245 = vmatprep.subr.mxu0 0.0
        %1246 = vmatpush2.msra.mxu0 0.0
        %1247 = vmatprep.subr.mxu0 0.0
        %1248 = vmatpush2.msra.mxu0 0.0
        %1249 = vmatprep.subr.mxu0 0.0
        %1250 = vmatpush2.msra.mxu0 0.0
        %1251 = vmatprep.subr.mxu0 0.0
        %1252 = vmatpush2.msra.mxu0 0.0
        %1253 = vmatprep.mubr.f32.mxu0 0.0
        %1254 = vmatmul.mubr.f32.gmra.mxu0 %v1187
        %v1255 = vpop.f32.mrf.mxu0
        %v1256 = vadd.f32 %v592, %v1255
        %v1257 = vpop.f32.mrf.mxu0
        %1258 = vdwg.mxu0
        %v1259 = vmax.f32 %v1256, 0.0
        %s1260 = scalar_lea.vmem [#allocation5], 192
        %v1261 = vld [vmem:[%s1260] sm:$0xff]
        %v1262 = vld [vmem:[%s1260 + $0x8] sm:$0xff]
        %v1263 = vld [vmem:[%s1260 + $0x10] sm:$0xff]
        %v1264 = vld [vmem:[%s1260 + $0x18] sm:$0xff]
        %v1265 = vld [vmem:[%s1260 + $0x20] sm:$0xff]
        %v1266 = vld [vmem:[%s1260 + $0x28] sm:$0xff]
        %v1267 = vld [vmem:[%s1260 + $0x30] sm:$0xff]
        %v1268 = vld [vmem:[%s1260 + $0x38] sm:$0xff]
        %v1270 = vsel %vm502, %v1259, 0
        %1272 = vmatprep.subr.mxu0 0.0
        %1273 = vmatpush1.msra.mxu0 0.0
        %1274 = vmatprep.subr.mxu0 0.0
        %1275 = vmatpush1.msra.mxu0 0.0
        %1276 = vmatprep.subr.mxu0 0.0
        %1277 = vmatpush1.msra.mxu0 0.0
        %1278 = vmatprep.subr.mxu0 0.0
        %1279 = vmatpush1.msra.mxu0 0.0
        %1280 = vmatprep.subr.mxu0 0.0
        %1281 = vmatpush1.msra.mxu0 0.0
        %1282 = vmatprep.subr.mxu0 0.0
        %1283 = vmatpush1.msra.mxu0 0.0
        %1284 = vmatprep.subr.mxu0 0.0
        %1285 = vmatpush1.msra.mxu0 0.0
        %1286 = vmatprep.subr.mxu0 0.0
        %1287 = vmatpush1.msra.mxu0 0.0
        %1288 = vmatprep.subr.mxu0 0.0
        %1289 = vmatpush1.msra.mxu0 0.0
        %1290 = vmatprep.subr.mxu0 0.0
        %1291 = vmatpush1.msra.mxu0 0.0
        %1292 = vmatprep.subr.mxu0 0.0
        %1293 = vmatpush1.msra.mxu0 0.0
        %1294 = vmatprep.subr.mxu0 0.0
        %1295 = vmatpush1.msra.mxu0 0.0
        %1296 = vmatprep.subr.mxu0 %v1268
        %1297 = vmatpush1.msra.mxu0 %v1267
        %1298 = vmatprep.subr.mxu0 %v1266
        %1299 = vmatpush1.msra.mxu0 %v1265
        %1300 = vmatprep.subr.mxu0 %v1264
        %1301 = vmatpush1.msra.mxu0 %v1263
        %1302 = vmatprep.subr.mxu0 %v1262
        %1303 = vmatpush1.msra.mxu0 %v1261
        %1304 = vmatprep.subr.mxu0 0.0
        %1305 = vmatpush2.msra.mxu0 0.0
        %1306 = vmatprep.subr.mxu0 0.0
        %1307 = vmatpush2.msra.mxu0 0.0
        %1308 = vmatprep.subr.mxu0 0.0
        %1309 = vmatpush2.msra.mxu0 0.0
        %1310 = vmatprep.subr.mxu0 0.0
        %1311 = vmatpush2.msra.mxu0 0.0
        %1312 = vmatprep.subr.mxu0 0.0
        %1313 = vmatpush2.msra.mxu0 0.0
        %1314 = vmatprep.subr.mxu0 0.0
        %1315 = vmatpush2.msra.mxu0 0.0
        %1316 = vmatprep.subr.mxu0 0.0
        %1317 = vmatpush2.msra.mxu0 0.0
        %1318 = vmatprep.subr.mxu0 0.0
        %1319 = vmatpush2.msra.mxu0 0.0
        %1320 = vmatprep.subr.mxu0 0.0
        %1321 = vmatpush2.msra.mxu0 0.0
        %1322 = vmatprep.subr.mxu0 0.0
        %1323 = vmatpush2.msra.mxu0 0.0
        %1324 = vmatprep.subr.mxu0 0.0
        %1325 = vmatpush2.msra.mxu0 0.0
        %1326 = vmatprep.subr.mxu0 0.0
        %1327 = vmatpush2.msra.mxu0 0.0
        %1328 = vmatprep.subr.mxu0 0.0
        %1329 = vmatpush2.msra.mxu0 0.0
        %1330 = vmatprep.subr.mxu0 0.0
        %1331 = vmatpush2.msra.mxu0 0.0
        %1332 = vmatprep.subr.mxu0 0.0
        %1333 = vmatpush2.msra.mxu0 0.0
        %1334 = vmatprep.subr.mxu0 0.0
        %1335 = vmatpush2.msra.mxu0 0.0
        %1336 = vmatprep.mubr.f32.mxu0 0.0
        %1337 = vmatmul.mubr.f32.gmra.mxu0 %v1270
        %v1338 = vpop.f32.mrf.mxu0
        %v1339 = vadd.f32 0.0, %v1338
        %v1340 = vpop.f32.mrf.mxu0
        %v1341 = vadd.f32 0.0, %v1340
        %1342 = vdwg.mxu0
        %v1343 = vadd.f32 %v1155, %v1339
        %v1344 = vadd.f32 %v1156, %v1341
        %v1345 = vld [vmem:[%s346 + $0x4] sm:$0x1]
        %v1346 = vld [vmem:[%s346 + $0xc] sm:$0x1]
        %v1347 = vld [vmem:[%s346 + $0x14] sm:$0x1]
        %v1348 = vld [vmem:[%s346 + $0x1c] sm:$0x1]
        %v1349 = vld [vmem:[%s346 + $0x24] sm:$0x1]
        %v1350 = vld [vmem:[%s346 + $0x2c] sm:$0x1]
        %v1351 = vld [vmem:[%s346 + $0x34] sm:$0x1]
        %v1352 = vld [vmem:[%s346 + $0x3c] sm:$0x1]
        %v1361 = vrot.slane %v1346, 7
        %v1362 = vsel %vm603, %v1361, %v1345
        %v1363 = vrot.slane %v1347, 6
        %v1364 = vsel %vm606, %v1363, %v1362
        %v1365 = vrot.slane %v1348, 5
        %v1366 = vsel %vm609, %v1365, %v1364
        %v1367 = vrot.slane %v1349, 4
        %v1368 = vsel %vm612, %v1367, %v1366
        %v1369 = vrot.slane %v1350, 3
        %v1370 = vsel %vm615, %v1369, %v1368
        %v1371 = vrot.slane %v1351, 2
        %v1372 = vsel %vm618, %v1371, %v1370
        %v1373 = vrot.slane %v1352, 1
        %v1374 = vsel %vm621, %v1373, %v1372
        %v1375 = vsel %vm623, %v1374, 0
        %1377 = vmatprep.subr.mxu0 0.0
        %1378 = vmatpush1.msra.mxu0 0.0
        %1379 = vmatprep.subr.mxu0 0.0
        %1380 = vmatpush1.msra.mxu0 0.0
        %1381 = vmatprep.subr.mxu0 0.0
        %1382 = vmatpush1.msra.mxu0 0.0
        %1383 = vmatprep.subr.mxu0 0.0
        %1384 = vmatpush1.msra.mxu0 0.0
        %1385 = vmatprep.subr.mxu0 0.0
        %1386 = vmatpush1.msra.mxu0 0.0
        %1387 = vmatprep.subr.mxu0 0.0
        %1388 = vmatpush1.msra.mxu0 0.0
        %1389 = vmatprep.subr.mxu0 0.0
        %1390 = vmatpush1.msra.mxu0 0.0
        %1391 = vmatprep.subr.mxu0 0.0
        %1392 = vmatpush1.msra.mxu0 0.0
        %1393 = vmatprep.subr.mxu0 0.0
        %1394 = vmatpush1.msra.mxu0 0.0
        %1395 = vmatprep.subr.mxu0 0.0
        %1396 = vmatpush1.msra.mxu0 0.0
        %1397 = vmatprep.subr.mxu0 0.0
        %1398 = vmatpush1.msra.mxu0 0.0
        %1399 = vmatprep.subr.mxu0 0.0
        %1400 = vmatpush1.msra.mxu0 0.0
        %1401 = vmatprep.subr.mxu0 0.0
        %1402 = vmatpush1.msra.mxu0 0.0
        %1403 = vmatprep.subr.mxu0 0.0
        %1404 = vmatpush1.msra.mxu0 0.0
        %1405 = vmatprep.subr.mxu0 0.0
        %1406 = vmatpush1.msra.mxu0 %v578
        %1407 = vmatprep.subr.mxu0 0.0
        %1408 = vmatpush1.msra.mxu0 %v577
        %1409 = vmatprep.subr.mxu0 0.0
        %1410 = vmatpush2.msra.mxu0 0.0
        %1411 = vmatprep.subr.mxu0 0.0
        %1412 = vmatpush2.msra.mxu0 0.0
        %1413 = vmatprep.subr.mxu0 0.0
        %1414 = vmatpush2.msra.mxu0 0.0
        %1415 = vmatprep.subr.mxu0 0.0
        %1416 = vmatpush2.msra.mxu0 0.0
        %1417 = vmatprep.subr.mxu0 0.0
        %1418 = vmatpush2.msra.mxu0 0.0
        %1419 = vmatprep.subr.mxu0 0.0
        %1420 = vmatpush2.msra.mxu0 0.0
        %1421 = vmatprep.subr.mxu0 0.0
        %1422 = vmatpush2.msra.mxu0 0.0
        %1423 = vmatprep.subr.mxu0 0.0
        %1424 = vmatpush2.msra.mxu0 0.0
        %1425 = vmatprep.subr.mxu0 0.0
        %1426 = vmatpush2.msra.mxu0 0.0
        %1427 = vmatprep.subr.mxu0 0.0
        %1428 = vmatpush2.msra.mxu0 0.0
        %1429 = vmatprep.subr.mxu0 0.0
        %1430 = vmatpush2.msra.mxu0 0.0
        %1431 = vmatprep.subr.mxu0 0.0
        %1432 = vmatpush2.msra.mxu0 0.0
        %1433 = vmatprep.subr.mxu0 0.0
        %1434 = vmatpush2.msra.mxu0 0.0
        %1435 = vmatprep.subr.mxu0 0.0
        %1436 = vmatpush2.msra.mxu0 0.0
        %1437 = vmatprep.subr.mxu0 0.0
        %1438 = vmatpush2.msra.mxu0 0.0
        %1439 = vmatprep.subr.mxu0 0.0
        %1440 = vmatpush2.msra.mxu0 0.0
        %1441 = vmatprep.mubr.f32.mxu0 0.0
        %1442 = vmatmul.mubr.f32.gmra.mxu0 %v1375
        %v1443 = vpop.f32.mrf.mxu0
        %v1444 = vadd.f32 %v592, %v1443
        %v1445 = vpop.f32.mrf.mxu0
        %1446 = vdwg.mxu0
        %v1447 = vmax.f32 %v1444, 0.0
        %s1448 = scalar_lea.vmem [#allocation5], 256
        %v1449 = vld [vmem:[%s1448] sm:$0xff]
        %v1450 = vld [vmem:[%s1448 + $0x8] sm:$0xff]
        %v1451 = vld [vmem:[%s1448 + $0x10] sm:$0xff]
        %v1452 = vld [vmem:[%s1448 + $0x18] sm:$0xff]
        %v1453 = vld [vmem:[%s1448 + $0x20] sm:$0xff]
        %v1454 = vld [vmem:[%s1448 + $0x28] sm:$0xff]
        %v1455 = vld [vmem:[%s1448 + $0x30] sm:$0xff]
        %v1456 = vld [vmem:[%s1448 + $0x38] sm:$0xff]
        %v1458 = vsel %vm502, %v1447, 0
        %1460 = vmatprep.subr.mxu0 0.0
        %1461 = vmatpush1.msra.mxu0 0.0
        %1462 = vmatprep.subr.mxu0 0.0
        %1463 = vmatpush1.msra.mxu0 0.0
        %1464 = vmatprep.subr.mxu0 0.0
        %1465 = vmatpush1.msra.mxu0 0.0
        %1466 = vmatprep.subr.mxu0 0.0
        %1467 = vmatpush1.msra.mxu0 0.0
        %1468 = vmatprep.subr.mxu0 0.0
        %1469 = vmatpush1.msra.mxu0 0.0
        %1470 = vmatprep.subr.mxu0 0.0
        %1471 = vmatpush1.msra.mxu0 0.0
        %1472 = vmatprep.subr.mxu0 0.0
        %1473 = vmatpush1.msra.mxu0 0.0
        %1474 = vmatprep.subr.mxu0 0.0
        %1475 = vmatpush1.msra.mxu0 0.0
        %1476 = vmatprep.subr.mxu0 0.0
        %1477 = vmatpush1.msra.mxu0 0.0
        %1478 = vmatprep.subr.mxu0 0.0
        %1479 = vmatpush1.msra.mxu0 0.0
        %1480 = vmatprep.subr.mxu0 0.0
        %1481 = vmatpush1.msra.mxu0 0.0
        %1482 = vmatprep.subr.mxu0 0.0
        %1483 = vmatpush1.msra.mxu0 0.0
        %1484 = vmatprep.subr.mxu0 %v1456
        %1485 = vmatpush1.msra.mxu0 %v1455
        %1486 = vmatprep.subr.mxu0 %v1454
        %1487 = vmatpush1.msra.mxu0 %v1453
        %1488 = vmatprep.subr.mxu0 %v1452
        %1489 = vmatpush1.msra.mxu0 %v1451
        %1490 = vmatprep.subr.mxu0 %v1450
        %1491 = vmatpush1.msra.mxu0 %v1449
        %1492 = vmatprep.subr.mxu0 0.0
        %1493 = vmatpush2.msra.mxu0 0.0
        %1494 = vmatprep.subr.mxu0 0.0
        %1495 = vmatpush2.msra.mxu0 0.0
        %1496 = vmatprep.subr.mxu0 0.0
        %1497 = vmatpush2.msra.mxu0 0.0
        %1498 = vmatprep.subr.mxu0 0.0
        %1499 = vmatpush2.msra.mxu0 0.0
        %1500 = vmatprep.subr.mxu0 0.0
        %1501 = vmatpush2.msra.mxu0 0.0
        %1502 = vmatprep.subr.mxu0 0.0
        %1503 = vmatpush2.msra.mxu0 0.0
        %1504 = vmatprep.subr.mxu0 0.0
        %1505 = vmatpush2.msra.mxu0 0.0
        %1506 = vmatprep.subr.mxu0 0.0
        %1507 = vmatpush2.msra.mxu0 0.0
        %1508 = vmatprep.subr.mxu0 0.0
        %1509 = vmatpush2.msra.mxu0 0.0
        %1510 = vmatprep.subr.mxu0 0.0
        %1511 = vmatpush2.msra.mxu0 0.0
        %1512 = vmatprep.subr.mxu0 0.0
        %1513 = vmatpush2.msra.mxu0 0.0
        %1514 = vmatprep.subr.mxu0 0.0
        %1515 = vmatpush2.msra.mxu0 0.0
        %1516 = vmatprep.subr.mxu0 0.0
        %1517 = vmatpush2.msra.mxu0 0.0
        %1518 = vmatprep.subr.mxu0 0.0
        %1519 = vmatpush2.msra.mxu0 0.0
        %1520 = vmatprep.subr.mxu0 0.0
        %1521 = vmatpush2.msra.mxu0 0.0
        %1522 = vmatprep.subr.mxu0 0.0
        %1523 = vmatpush2.msra.mxu0 0.0
        %1524 = vmatprep.mubr.f32.mxu0 0.0
        %1525 = vmatmul.mubr.f32.gmra.mxu0 %v1458
        %v1526 = vpop.f32.mrf.mxu0
        %v1527 = vadd.f32 0.0, %v1526
        %v1528 = vpop.f32.mrf.mxu0
        %v1529 = vadd.f32 0.0, %v1528
        %1530 = vdwg.mxu0
        %v1531 = vadd.f32 %v1343, %v1527
        %v1532 = vadd.f32 %v1344, %v1529
        %v1533 = vld [vmem:[%s346 + $0x5] sm:$0x1]
        %v1534 = vld [vmem:[%s346 + $0xd] sm:$0x1]
        %v1535 = vld [vmem:[%s346 + $0x15] sm:$0x1]
        %v1536 = vld [vmem:[%s346 + $0x1d] sm:$0x1]
        %v1537 = vld [vmem:[%s346 + $0x25] sm:$0x1]
        %v1538 = vld [vmem:[%s346 + $0x2d] sm:$0x1]
        %v1539 = vld [vmem:[%s346 + $0x35] sm:$0x1]
        %v1540 = vld [vmem:[%s346 + $0x3d] sm:$0x1]
        %v1549 = vrot.slane %v1534, 7
        %v1550 = vsel %vm603, %v1549, %v1533
        %v1551 = vrot.slane %v1535, 6
        %v1552 = vsel %vm606, %v1551, %v1550
        %v1553 = vrot.slane %v1536, 5
        %v1554 = vsel %vm609, %v1553, %v1552
        %v1555 = vrot.slane %v1537, 4
        %v1556 = vsel %vm612, %v1555, %v1554
        %v1557 = vrot.slane %v1538, 3
        %v1558 = vsel %vm615, %v1557, %v1556
        %v1559 = vrot.slane %v1539, 2
        %v1560 = vsel %vm618, %v1559, %v1558
        %v1561 = vrot.slane %v1540, 1
        %v1562 = vsel %vm621, %v1561, %v1560
        %v1563 = vsel %vm623, %v1562, 0
        %1565 = vmatprep.subr.mxu0 0.0
        %1566 = vmatpush1.msra.mxu0 0.0
        %1567 = vmatprep.subr.mxu0 0.0
        %1568 = vmatpush1.msra.mxu0 0.0
        %1569 = vmatprep.subr.mxu0 0.0
        %1570 = vmatpush1.msra.mxu0 0.0
        %1571 = vmatprep.subr.mxu0 0.0
        %1572 = vmatpush1.msra.mxu0 0.0
        %1573 = vmatprep.subr.mxu0 0.0
        %1574 = vmatpush1.msra.mxu0 0.0
        %1575 = vmatprep.subr.mxu0 0.0
        %1576 = vmatpush1.msra.mxu0 0.0
        %1577 = vmatprep.subr.mxu0 0.0
        %1578 = vmatpush1.msra.mxu0 0.0
        %1579 = vmatprep.subr.mxu0 0.0
        %1580 = vmatpush1.msra.mxu0 0.0
        %1581 = vmatprep.subr.mxu0 0.0
        %1582 = vmatpush1.msra.mxu0 0.0
        %1583 = vmatprep.subr.mxu0 0.0
        %1584 = vmatpush1.msra.mxu0 0.0
        %1585 = vmatprep.subr.mxu0 0.0
        %1586 = vmatpush1.msra.mxu0 0.0
        %1587 = vmatprep.subr.mxu0 0.0
        %1588 = vmatpush1.msra.mxu0 0.0
        %1589 = vmatprep.subr.mxu0 0.0
        %1590 = vmatpush1.msra.mxu0 0.0
        %1591 = vmatprep.subr.mxu0 0.0
        %1592 = vmatpush1.msra.mxu0 0.0
        %1593 = vmatprep.subr.mxu0 0.0
        %1594 = vmatpush1.msra.mxu0 %v578
        %1595 = vmatprep.subr.mxu0 0.0
        %1596 = vmatpush1.msra.mxu0 %v577
        %1597 = vmatprep.subr.mxu0 0.0
        %1598 = vmatpush2.msra.mxu0 0.0
        %1599 = vmatprep.subr.mxu0 0.0
        %1600 = vmatpush2.msra.mxu0 0.0
        %1601 = vmatprep.subr.mxu0 0.0
        %1602 = vmatpush2.msra.mxu0 0.0
        %1603 = vmatprep.subr.mxu0 0.0
        %1604 = vmatpush2.msra.mxu0 0.0
        %1605 = vmatprep.subr.mxu0 0.0
        %1606 = vmatpush2.msra.mxu0 0.0
        %1607 = vmatprep.subr.mxu0 0.0
        %1608 = vmatpush2.msra.mxu0 0.0
        %1609 = vmatprep.subr.mxu0 0.0
        %1610 = vmatpush2.msra.mxu0 0.0
        %1611 = vmatprep.subr.mxu0 0.0
        %1612 = vmatpush2.msra.mxu0 0.0
        %1613 = vmatprep.subr.mxu0 0.0
        %1614 = vmatpush2.msra.mxu0 0.0
        %1615 = vmatprep.subr.mxu0 0.0
        %1616 = vmatpush2.msra.mxu0 0.0
        %1617 = vmatprep.subr.mxu0 0.0
        %1618 = vmatpush2.msra.mxu0 0.0
        %1619 = vmatprep.subr.mxu0 0.0
        %1620 = vmatpush2.msra.mxu0 0.0
        %1621 = vmatprep.subr.mxu0 0.0
        %1622 = vmatpush2.msra.mxu0 0.0
        %1623 = vmatprep.subr.mxu0 0.0
        %1624 = vmatpush2.msra.mxu0 0.0
        %1625 = vmatprep.subr.mxu0 0.0
        %1626 = vmatpush2.msra.mxu0 0.0
        %1627 = vmatprep.subr.mxu0 0.0
        %1628 = vmatpush2.msra.mxu0 0.0
        %1629 = vmatprep.mubr.f32.mxu0 0.0
        %1630 = vmatmul.mubr.f32.gmra.mxu0 %v1563
        %v1631 = vpop.f32.mrf.mxu0
        %v1632 = vadd.f32 %v592, %v1631
        %v1633 = vpop.f32.mrf.mxu0
        %1634 = vdwg.mxu0
        %v1635 = vmax.f32 %v1632, 0.0
        %s1636 = scalar_lea.vmem [#allocation5], 320
        %v1637 = vld [vmem:[%s1636] sm:$0xff]
        %v1638 = vld [vmem:[%s1636 + $0x8] sm:$0xff]
        %v1639 = vld [vmem:[%s1636 + $0x10] sm:$0xff]
        %v1640 = vld [vmem:[%s1636 + $0x18] sm:$0xff]
        %v1641 = vld [vmem:[%s1636 + $0x20] sm:$0xff]
        %v1642 = vld [vmem:[%s1636 + $0x28] sm:$0xff]
        %v1643 = vld [vmem:[%s1636 + $0x30] sm:$0xff]
        %v1644 = vld [vmem:[%s1636 + $0x38] sm:$0xff]
        %v1646 = vsel %vm502, %v1635, 0
        %1648 = vmatprep.subr.mxu0 0.0
        %1649 = vmatpush1.msra.mxu0 0.0
        %1650 = vmatprep.subr.mxu0 0.0
        %1651 = vmatpush1.msra.mxu0 0.0
        %1652 = vmatprep.subr.mxu0 0.0
        %1653 = vmatpush1.msra.mxu0 0.0
        %1654 = vmatprep.subr.mxu0 0.0
        %1655 = vmatpush1.msra.mxu0 0.0
        %1656 = vmatprep.subr.mxu0 0.0
        %1657 = vmatpush1.msra.mxu0 0.0
        %1658 = vmatprep.subr.mxu0 0.0
        %1659 = vmatpush1.msra.mxu0 0.0
        %1660 = vmatprep.subr.mxu0 0.0
        %1661 = vmatpush1.msra.mxu0 0.0
        %1662 = vmatprep.subr.mxu0 0.0
        %1663 = vmatpush1.msra.mxu0 0.0
        %1664 = vmatprep.subr.mxu0 0.0
        %1665 = vmatpush1.msra.mxu0 0.0
        %1666 = vmatprep.subr.mxu0 0.0
        %1667 = vmatpush1.msra.mxu0 0.0
        %1668 = vmatprep.subr.mxu0 0.0
        %1669 = vmatpush1.msra.mxu0 0.0
        %1670 = vmatprep.subr.mxu0 0.0
        %1671 = vmatpush1.msra.mxu0 0.0
        %1672 = vmatprep.subr.mxu0 %v1644
        %1673 = vmatpush1.msra.mxu0 %v1643
        %1674 = vmatprep.subr.mxu0 %v1642
        %1675 = vmatpush1.msra.mxu0 %v1641
        %1676 = vmatprep.subr.mxu0 %v1640
        %1677 = vmatpush1.msra.mxu0 %v1639
        %1678 = vmatprep.subr.mxu0 %v1638
        %1679 = vmatpush1.msra.mxu0 %v1637
        %1680 = vmatprep.subr.mxu0 0.0
        %1681 = vmatpush2.msra.mxu0 0.0
        %1682 = vmatprep.subr.mxu0 0.0
        %1683 = vmatpush2.msra.mxu0 0.0
        %1684 = vmatprep.subr.mxu0 0.0
        %1685 = vmatpush2.msra.mxu0 0.0
        %1686 = vmatprep.subr.mxu0 0.0
        %1687 = vmatpush2.msra.mxu0 0.0
        %1688 = vmatprep.subr.mxu0 0.0
        %1689 = vmatpush2.msra.mxu0 0.0
        %1690 = vmatprep.subr.mxu0 0.0
        %1691 = vmatpush2.msra.mxu0 0.0
        %1692 = vmatprep.subr.mxu0 0.0
        %1693 = vmatpush2.msra.mxu0 0.0
        %1694 = vmatprep.subr.mxu0 0.0
        %1695 = vmatpush2.msra.mxu0 0.0
        %1696 = vmatprep.subr.mxu0 0.0
        %1697 = vmatpush2.msra.mxu0 0.0
        %1698 = vmatprep.subr.mxu0 0.0
        %1699 = vmatpush2.msra.mxu0 0.0
        %1700 = vmatprep.subr.mxu0 0.0
        %1701 = vmatpush2.msra.mxu0 0.0
        %1702 = vmatprep.subr.mxu0 0.0
        %1703 = vmatpush2.msra.mxu0 0.0
        %1704 = vmatprep.subr.mxu0 0.0
        %1705 = vmatpush2.msra.mxu0 0.0
        %1706 = vmatprep.subr.mxu0 0.0
        %1707 = vmatpush2.msra.mxu0 0.0
        %1708 = vmatprep.subr.mxu0 0.0
        %1709 = vmatpush2.msra.mxu0 0.0
        %1710 = vmatprep.subr.mxu0 0.0
        %1711 = vmatpush2.msra.mxu0 0.0
        %1712 = vmatprep.mubr.f32.mxu0 0.0
        %1713 = vmatmul.mubr.f32.gmra.mxu0 %v1646
        %v1714 = vpop.f32.mrf.mxu0
        %v1715 = vadd.f32 0.0, %v1714
        %v1716 = vpop.f32.mrf.mxu0
        %v1717 = vadd.f32 0.0, %v1716
        %1718 = vdwg.mxu0
        %v1719 = vadd.f32 %v1531, %v1715
        %v1720 = vadd.f32 %v1532, %v1717
        %v1721 = vld [vmem:[%s346 + $0x6] sm:$0x1]
        %v1722 = vld [vmem:[%s346 + $0xe] sm:$0x1]
        %v1723 = vld [vmem:[%s346 + $0x16] sm:$0x1]
        %v1724 = vld [vmem:[%s346 + $0x1e] sm:$0x1]
        %v1725 = vld [vmem:[%s346 + $0x26] sm:$0x1]
        %v1726 = vld [vmem:[%s346 + $0x2e] sm:$0x1]
        %v1727 = vld [vmem:[%s346 + $0x36] sm:$0x1]
        %v1728 = vld [vmem:[%s346 + $0x3e] sm:$0x1]
        %v1737 = vrot.slane %v1722, 7
        %v1738 = vsel %vm603, %v1737, %v1721
        %v1739 = vrot.slane %v1723, 6
        %v1740 = vsel %vm606, %v1739, %v1738
        %v1741 = vrot.slane %v1724, 5
        %v1742 = vsel %vm609, %v1741, %v1740
        %v1743 = vrot.slane %v1725, 4
        %v1744 = vsel %vm612, %v1743, %v1742
        %v1745 = vrot.slane %v1726, 3
        %v1746 = vsel %vm615, %v1745, %v1744
        %v1747 = vrot.slane %v1727, 2
        %v1748 = vsel %vm618, %v1747, %v1746
        %v1749 = vrot.slane %v1728, 1
        %v1750 = vsel %vm621, %v1749, %v1748
        %v1751 = vsel %vm623, %v1750, 0
        %1753 = vmatprep.subr.mxu0 0.0
        %1754 = vmatpush1.msra.mxu0 0.0
        %1755 = vmatprep.subr.mxu0 0.0
        %1756 = vmatpush1.msra.mxu0 0.0
        %1757 = vmatprep.subr.mxu0 0.0
        %1758 = vmatpush1.msra.mxu0 0.0
        %1759 = vmatprep.subr.mxu0 0.0
        %1760 = vmatpush1.msra.mxu0 0.0
        %1761 = vmatprep.subr.mxu0 0.0
        %1762 = vmatpush1.msra.mxu0 0.0
        %1763 = vmatprep.subr.mxu0 0.0
        %1764 = vmatpush1.msra.mxu0 0.0
        %1765 = vmatprep.subr.mxu0 0.0
        %1766 = vmatpush1.msra.mxu0 0.0
        %1767 = vmatprep.subr.mxu0 0.0
        %1768 = vmatpush1.msra.mxu0 0.0
        %1769 = vmatprep.subr.mxu0 0.0
        %1770 = vmatpush1.msra.mxu0 0.0
        %1771 = vmatprep.subr.mxu0 0.0
        %1772 = vmatpush1.msra.mxu0 0.0
        %1773 = vmatprep.subr.mxu0 0.0
        %1774 = vmatpush1.msra.mxu0 0.0
        %1775 = vmatprep.subr.mxu0 0.0
        %1776 = vmatpush1.msra.mxu0 0.0
        %1777 = vmatprep.subr.mxu0 0.0
        %1778 = vmatpush1.msra.mxu0 0.0
        %1779 = vmatprep.subr.mxu0 0.0
        %1780 = vmatpush1.msra.mxu0 0.0
        %1781 = vmatprep.subr.mxu0 0.0
        %1782 = vmatpush1.msra.mxu0 %v578
        %1783 = vmatprep.subr.mxu0 0.0
        %1784 = vmatpush1.msra.mxu0 %v577
        %1785 = vmatprep.subr.mxu0 0.0
        %1786 = vmatpush2.msra.mxu0 0.0
        %1787 = vmatprep.subr.mxu0 0.0
        %1788 = vmatpush2.msra.mxu0 0.0
        %1789 = vmatprep.subr.mxu0 0.0
        %1790 = vmatpush2.msra.mxu0 0.0
        %1791 = vmatprep.subr.mxu0 0.0
        %1792 = vmatpush2.msra.mxu0 0.0
        %1793 = vmatprep.subr.mxu0 0.0
        %1794 = vmatpush2.msra.mxu0 0.0
        %1795 = vmatprep.subr.mxu0 0.0
        %1796 = vmatpush2.msra.mxu0 0.0
        %1797 = vmatprep.subr.mxu0 0.0
        %1798 = vmatpush2.msra.mxu0 0.0
        %1799 = vmatprep.subr.mxu0 0.0
        %1800 = vmatpush2.msra.mxu0 0.0
        %1801 = vmatprep.subr.mxu0 0.0
        %1802 = vmatpush2.msra.mxu0 0.0
        %1803 = vmatprep.subr.mxu0 0.0
        %1804 = vmatpush2.msra.mxu0 0.0
        %1805 = vmatprep.subr.mxu0 0.0
        %1806 = vmatpush2.msra.mxu0 0.0
        %1807 = vmatprep.subr.mxu0 0.0
        %1808 = vmatpush2.msra.mxu0 0.0
        %1809 = vmatprep.subr.mxu0 0.0
        %1810 = vmatpush2.msra.mxu0 0.0
        %1811 = vmatprep.subr.mxu0 0.0
        %1812 = vmatpush2.msra.mxu0 0.0
        %1813 = vmatprep.subr.mxu0 0.0
        %1814 = vmatpush2.msra.mxu0 0.0
        %1815 = vmatprep.subr.mxu0 0.0
        %1816 = vmatpush2.msra.mxu0 0.0
        %1817 = vmatprep.mubr.f32.mxu0 0.0
        %1818 = vmatmul.mubr.f32.gmra.mxu0 %v1751
        %v1819 = vpop.f32.mrf.mxu0
        %v1820 = vadd.f32 %v592, %v1819
        %v1821 = vpop.f32.mrf.mxu0
        %1822 = vdwg.mxu0
        %v1823 = vmax.f32 %v1820, 0.0
        %s1824 = scalar_lea.vmem [#allocation5], 384
        %v1825 = vld [vmem:[%s1824] sm:$0xff]
        %v1826 = vld [vmem:[%s1824 + $0x8] sm:$0xff]
        %v1827 = vld [vmem:[%s1824 + $0x10] sm:$0xff]
        %v1828 = vld [vmem:[%s1824 + $0x18] sm:$0xff]
        %v1829 = vld [vmem:[%s1824 + $0x20] sm:$0xff]
        %v1830 = vld [vmem:[%s1824 + $0x28] sm:$0xff]
        %v1831 = vld [vmem:[%s1824 + $0x30] sm:$0xff]
        %v1832 = vld [vmem:[%s1824 + $0x38] sm:$0xff]
        %v1834 = vsel %vm502, %v1823, 0
        %1836 = vmatprep.subr.mxu0 0.0
        %1837 = vmatpush1.msra.mxu0 0.0
        %1838 = vmatprep.subr.mxu0 0.0
        %1839 = vmatpush1.msra.mxu0 0.0
        %1840 = vmatprep.subr.mxu0 0.0
        %1841 = vmatpush1.msra.mxu0 0.0
        %1842 = vmatprep.subr.mxu0 0.0
        %1843 = vmatpush1.msra.mxu0 0.0
        %1844 = vmatprep.subr.mxu0 0.0
        %1845 = vmatpush1.msra.mxu0 0.0
        %1846 = vmatprep.subr.mxu0 0.0
        %1847 = vmatpush1.msra.mxu0 0.0
        %1848 = vmatprep.subr.mxu0 0.0
        %1849 = vmatpush1.msra.mxu0 0.0
        %1850 = vmatprep.subr.mxu0 0.0
        %1851 = vmatpush1.msra.mxu0 0.0
        %1852 = vmatprep.subr.mxu0 0.0
        %1853 = vmatpush1.msra.mxu0 0.0
        %1854 = vmatprep.subr.mxu0 0.0
        %1855 = vmatpush1.msra.mxu0 0.0
        %1856 = vmatprep.subr.mxu0 0.0
        %1857 = vmatpush1.msra.mxu0 0.0
        %1858 = vmatprep.subr.mxu0 0.0
        %1859 = vmatpush1.msra.mxu0 0.0
        %1860 = vmatprep.subr.mxu0 %v1832
        %1861 = vmatpush1.msra.mxu0 %v1831
        %1862 = vmatprep.subr.mxu0 %v1830
        %1863 = vmatpush1.msra.mxu0 %v1829
        %1864 = vmatprep.subr.mxu0 %v1828
        %1865 = vmatpush1.msra.mxu0 %v1827
        %1866 = vmatprep.subr.mxu0 %v1826
        %1867 = vmatpush1.msra.mxu0 %v1825
        %1868 = vmatprep.subr.mxu0 0.0
        %1869 = vmatpush2.msra.mxu0 0.0
        %1870 = vmatprep.subr.mxu0 0.0
        %1871 = vmatpush2.msra.mxu0 0.0
        %1872 = vmatprep.subr.mxu0 0.0
        %1873 = vmatpush2.msra.mxu0 0.0
        %1874 = vmatprep.subr.mxu0 0.0
        %1875 = vmatpush2.msra.mxu0 0.0
        %1876 = vmatprep.subr.mxu0 0.0
        %1877 = vmatpush2.msra.mxu0 0.0
        %1878 = vmatprep.subr.mxu0 0.0
        %1879 = vmatpush2.msra.mxu0 0.0
        %1880 = vmatprep.subr.mxu0 0.0
        %1881 = vmatpush2.msra.mxu0 0.0
        %1882 = vmatprep.subr.mxu0 0.0
        %1883 = vmatpush2.msra.mxu0 0.0
        %1884 = vmatprep.subr.mxu0 0.0
        %1885 = vmatpush2.msra.mxu0 0.0
        %1886 = vmatprep.subr.mxu0 0.0
        %1887 = vmatpush2.msra.mxu0 0.0
        %1888 = vmatprep.subr.mxu0 0.0
        %1889 = vmatpush2.msra.mxu0 0.0
        %1890 = vmatprep.subr.mxu0 0.0
        %1891 = vmatpush2.msra.mxu0 0.0
        %1892 = vmatprep.subr.mxu0 0.0
        %1893 = vmatpush2.msra.mxu0 0.0
        %1894 = vmatprep.subr.mxu0 0.0
        %1895 = vmatpush2.msra.mxu0 0.0
        %1896 = vmatprep.subr.mxu0 0.0
        %1897 = vmatpush2.msra.mxu0 0.0
        %1898 = vmatprep.subr.mxu0 0.0
        %1899 = vmatpush2.msra.mxu0 0.0
        %1900 = vmatprep.mubr.f32.mxu0 0.0
        %1901 = vmatmul.mubr.f32.gmra.mxu0 %v1834
        %v1902 = vpop.f32.mrf.mxu0
        %v1903 = vadd.f32 0.0, %v1902
        %v1904 = vpop.f32.mrf.mxu0
        %v1905 = vadd.f32 0.0, %v1904
        %1906 = vdwg.mxu0
        %v1907 = vadd.f32 %v1719, %v1903
        %v1908 = vadd.f32 %v1720, %v1905
        %v1909 = vld [vmem:[%s346 + $0x7] sm:$0x1]
        %v1910 = vld [vmem:[%s346 + $0xf] sm:$0x1]
        %v1911 = vld [vmem:[%s346 + $0x17] sm:$0x1]
        %v1912 = vld [vmem:[%s346 + $0x1f] sm:$0x1]
        %v1913 = vld [vmem:[%s346 + $0x27] sm:$0x1]
        %v1914 = vld [vmem:[%s346 + $0x2f] sm:$0x1]
        %v1915 = vld [vmem:[%s346 + $0x37] sm:$0x1]
        %v1916 = vld [vmem:[%s346 + $0x3f] sm:$0x1]
        %v1925 = vrot.slane %v1910, 7
        %v1926 = vsel %vm603, %v1925, %v1909
        %v1927 = vrot.slane %v1911, 6
        %v1928 = vsel %vm606, %v1927, %v1926
        %v1929 = vrot.slane %v1912, 5
        %v1930 = vsel %vm609, %v1929, %v1928
        %v1931 = vrot.slane %v1913, 4
        %v1932 = vsel %vm612, %v1931, %v1930
        %v1933 = vrot.slane %v1914, 3
        %v1934 = vsel %vm615, %v1933, %v1932
        %v1935 = vrot.slane %v1915, 2
        %v1936 = vsel %vm618, %v1935, %v1934
        %v1937 = vrot.slane %v1916, 1
        %v1938 = vsel %vm621, %v1937, %v1936
        %v1939 = vsel %vm623, %v1938, 0
        %1941 = vmatprep.subr.mxu0 0.0
        %1942 = vmatpush1.msra.mxu0 0.0
        %1943 = vmatprep.subr.mxu0 0.0
        %1944 = vmatpush1.msra.mxu0 0.0
        %1945 = vmatprep.subr.mxu0 0.0
        %1946 = vmatpush1.msra.mxu0 0.0
        %1947 = vmatprep.subr.mxu0 0.0
        %1948 = vmatpush1.msra.mxu0 0.0
        %1949 = vmatprep.subr.mxu0 0.0
        %1950 = vmatpush1.msra.mxu0 0.0
        %1951 = vmatprep.subr.mxu0 0.0
        %1952 = vmatpush1.msra.mxu0 0.0
        %1953 = vmatprep.subr.mxu0 0.0
        %1954 = vmatpush1.msra.mxu0 0.0
        %1955 = vmatprep.subr.mxu0 0.0
        %1956 = vmatpush1.msra.mxu0 0.0
        %1957 = vmatprep.subr.mxu0 0.0
        %1958 = vmatpush1.msra.mxu0 0.0
        %1959 = vmatprep.subr.mxu0 0.0
        %1960 = vmatpush1.msra.mxu0 0.0
        %1961 = vmatprep.subr.mxu0 0.0
        %1962 = vmatpush1.msra.mxu0 0.0
        %1963 = vmatprep.subr.mxu0 0.0
        %1964 = vmatpush1.msra.mxu0 0.0
        %1965 = vmatprep.subr.mxu0 0.0
        %1966 = vmatpush1.msra.mxu0 0.0
        %1967 = vmatprep.subr.mxu0 0.0
        %1968 = vmatpush1.msra.mxu0 0.0
        %1969 = vmatprep.subr.mxu0 0.0
        %1970 = vmatpush1.msra.mxu0 %v578
        %1971 = vmatprep.subr.mxu0 0.0
        %1972 = vmatpush1.msra.mxu0 %v577
        %1973 = vmatprep.subr.mxu0 0.0
        %1974 = vmatpush2.msra.mxu0 0.0
        %1975 = vmatprep.subr.mxu0 0.0
        %1976 = vmatpush2.msra.mxu0 0.0
        %1977 = vmatprep.subr.mxu0 0.0
        %1978 = vmatpush2.msra.mxu0 0.0
        %1979 = vmatprep.subr.mxu0 0.0
        %1980 = vmatpush2.msra.mxu0 0.0
        %1981 = vmatprep.subr.mxu0 0.0
        %1982 = vmatpush2.msra.mxu0 0.0
        %1983 = vmatprep.subr.mxu0 0.0
        %1984 = vmatpush2.msra.mxu0 0.0
        %1985 = vmatprep.subr.mxu0 0.0
        %1986 = vmatpush2.msra.mxu0 0.0
        %1987 = vmatprep.subr.mxu0 0.0
        %1988 = vmatpush2.msra.mxu0 0.0
        %1989 = vmatprep.subr.mxu0 0.0
        %1990 = vmatpush2.msra.mxu0 0.0
        %1991 = vmatprep.subr.mxu0 0.0
        %1992 = vmatpush2.msra.mxu0 0.0
        %1993 = vmatprep.subr.mxu0 0.0
        %1994 = vmatpush2.msra.mxu0 0.0
        %1995 = vmatprep.subr.mxu0 0.0
        %1996 = vmatpush2.msra.mxu0 0.0
        %1997 = vmatprep.subr.mxu0 0.0
        %1998 = vmatpush2.msra.mxu0 0.0
        %1999 = vmatprep.subr.mxu0 0.0
        %2000 = vmatpush2.msra.mxu0 0.0
        %2001 = vmatprep.subr.mxu0 0.0
        %2002 = vmatpush2.msra.mxu0 0.0
        %2003 = vmatprep.subr.mxu0 0.0
        %2004 = vmatpush2.msra.mxu0 0.0
        %2005 = vmatprep.mubr.f32.mxu0 0.0
        %2006 = vmatmul.mubr.f32.gmra.mxu0 %v1939
        %v2007 = vpop.f32.mrf.mxu0
        %v2008 = vadd.f32 %v592, %v2007
        %v2009 = vpop.f32.mrf.mxu0
        %2010 = vdwg.mxu0
        %v2011 = vmax.f32 %v2008, 0.0
        %s2012 = scalar_lea.vmem [#allocation5], 448
        %v2013 = vld [vmem:[%s2012] sm:$0xff]
        %v2014 = vld [vmem:[%s2012 + $0x8] sm:$0xff]
        %v2015 = vld [vmem:[%s2012 + $0x10] sm:$0xff]
        %v2016 = vld [vmem:[%s2012 + $0x18] sm:$0xff]
        %v2017 = vld [vmem:[%s2012 + $0x20] sm:$0xff]
        %v2018 = vld [vmem:[%s2012 + $0x28] sm:$0xff]
        %v2019 = vld [vmem:[%s2012 + $0x30] sm:$0xff]
        %v2020 = vld [vmem:[%s2012 + $0x38] sm:$0xff]
        %v2022 = vsel %vm502, %v2011, 0
        %2024 = vmatprep.subr.mxu0 0.0
        %2025 = vmatpush1.msra.mxu0 0.0
        %2026 = vmatprep.subr.mxu0 0.0
        %2027 = vmatpush1.msra.mxu0 0.0
        %2028 = vmatprep.subr.mxu0 0.0
        %2029 = vmatpush1.msra.mxu0 0.0
        %2030 = vmatprep.subr.mxu0 0.0
        %2031 = vmatpush1.msra.mxu0 0.0
        %2032 = vmatprep.subr.mxu0 0.0
        %2033 = vmatpush1.msra.mxu0 0.0
        %2034 = vmatprep.subr.mxu0 0.0
        %2035 = vmatpush1.msra.mxu0 0.0
        %2036 = vmatprep.subr.mxu0 0.0
        %2037 = vmatpush1.msra.mxu0 0.0
        %2038 = vmatprep.subr.mxu0 0.0
        %2039 = vmatpush1.msra.mxu0 0.0
        %2040 = vmatprep.subr.mxu0 0.0
        %2041 = vmatpush1.msra.mxu0 0.0
        %2042 = vmatprep.subr.mxu0 0.0
        %2043 = vmatpush1.msra.mxu0 0.0
        %2044 = vmatprep.subr.mxu0 0.0
        %2045 = vmatpush1.msra.mxu0 0.0
        %2046 = vmatprep.subr.mxu0 0.0
        %2047 = vmatpush1.msra.mxu0 0.0
        %2048 = vmatprep.subr.mxu0 %v2020
        %2049 = vmatpush1.msra.mxu0 %v2019
        %2050 = vmatprep.subr.mxu0 %v2018
        %2051 = vmatpush1.msra.mxu0 %v2017
        %2052 = vmatprep.subr.mxu0 %v2016
        %2053 = vmatpush1.msra.mxu0 %v2015
        %2054 = vmatprep.subr.mxu0 %v2014
        %2055 = vmatpush1.msra.mxu0 %v2013
        %2056 = vmatprep.subr.mxu0 0.0
        %2057 = vmatpush2.msra.mxu0 0.0
        %2058 = vmatprep.subr.mxu0 0.0
        %2059 = vmatpush2.msra.mxu0 0.0
        %2060 = vmatprep.subr.mxu0 0.0
        %2061 = vmatpush2.msra.mxu0 0.0
        %2062 = vmatprep.subr.mxu0 0.0
        %2063 = vmatpush2.msra.mxu0 0.0
        %2064 = vmatprep.subr.mxu0 0.0
        %2065 = vmatpush2.msra.mxu0 0.0
        %2066 = vmatprep.subr.mxu0 0.0
        %2067 = vmatpush2.msra.mxu0 0.0
        %2068 = vmatprep.subr.mxu0 0.0
        %2069 = vmatpush2.msra.mxu0 0.0
        %2070 = vmatprep.subr.mxu0 0.0
        %2071 = vmatpush2.msra.mxu0 0.0
        %2072 = vmatprep.subr.mxu0 0.0
        %2073 = vmatpush2.msra.mxu0 0.0
        %2074 = vmatprep.subr.mxu0 0.0
        %2075 = vmatpush2.msra.mxu0 0.0
        %2076 = vmatprep.subr.mxu0 0.0
        %2077 = vmatpush2.msra.mxu0 0.0
        %2078 = vmatprep.subr.mxu0 0.0
        %2079 = vmatpush2.msra.mxu0 0.0
        %2080 = vmatprep.subr.mxu0 0.0
        %2081 = vmatpush2.msra.mxu0 0.0
        %2082 = vmatprep.subr.mxu0 0.0
        %2083 = vmatpush2.msra.mxu0 0.0
        %2084 = vmatprep.subr.mxu0 0.0
        %2085 = vmatpush2.msra.mxu0 0.0
        %2086 = vmatprep.subr.mxu0 0.0
        %2087 = vmatpush2.msra.mxu0 0.0
        %2088 = vmatprep.mubr.f32.mxu0 0.0
        %2089 = vmatmul.mubr.f32.gmra.mxu0 %v2022
        %v2090 = vpop.f32.mrf.mxu0
        %v2091 = vadd.f32 0.0, %v2090
        %v2092 = vpop.f32.mrf.mxu0
        %v2093 = vadd.f32 0.0, %v2092
        %2094 = vdwg.mxu0
        %v2095 = vadd.f32 %v1907, %v2091
        %v2096 = vadd.f32 %v1908, %v2093
        %v2097 = vmax.f32 %v2095, 0.0
        %v2098 = vmax.f32 %v2096, 0.0
        %2099 = vst [vmem:[%s392] sm:$0xff] %v2097
        %2100 = vst [vmem:[%s392 + $0x8] sm:$0xff] %v2098
        %s2101 = sand.u32 %s234, 1
        %s2102 = scalar_lea.sflag [#allocation4], %s2101
        %s2103 = sand.u32 %s234, 1
        %s2104 = smul.addr %s2103, 16
        %s2105 = scalar_lea.vmem [#allocation8], %s2104
        // Predicated region
        $region69: #{tpu_custom_call.1} parent=55 // pred_check
          %p2106 = pneg %p244
        $region70: #{tpu_custom_call.1} parent=55 // pred_check_branch
          %2108 = sbr.rel (%p2106) target = $region72
        $region71: #{tpu_custom_call.1} parent=55 // pred_region
          %s2110 = ssub.s32 256, 256
          %2111 = vsyncadd %s2102, %s2110
          %s2112 = smul.addr %s27, 2
          %s2113 = smul.addr %s2112, 128
          %s2114 = scalar_lea.hbm %s9, %s2113
          %s2116 = sshll.u32 %s2105, 4
          %s2117 = int_to_ptr.vmem [resolvable:$true] %s2116
          %2119 = dma.vmem_to_hbm [thread:$0]  %s2117, 256, %s2114, %s2102
        $region72: #{tpu_custom_call.1} parent=55 // pred_fallthru
          _
      $region56: #{tpu_custom_call.1} parent=5 // pred_fallthru
        _
      %p2120 = scmp.le.s32.totalorder 2, %s22
      // Predicated region
      $region73: #{tpu_custom_call.1} parent=5 // pred_check
        %p2121 = pneg %p2120
      $region74: #{tpu_custom_call.1} parent=5 // pred_check_branch
        %2123 = sbr.rel (%p2121) target = $region76
      $region75: #{tpu_custom_call.1} parent=5 // pred_region
        %s2124 = ssub.s32 %s22, 2
        // Predicated region
        $region77: #{tpu_custom_call.1} parent=75 // pred_check
          %p2125 = pneg %p250
        $region78: #{tpu_custom_call.1} parent=75 // pred_check_branch
          %2127 = sbr.rel (%p2125) target = $region80
        $region79: #{tpu_custom_call.1} parent=75 // pred_region
          %s2128 = sand.u32 %s235, 1
          %s2129 = scalar_lea.sflag [#allocation4], %s2128
          %s2130 = sand.u32 %s235, 1
          %s2131 = smul.addr %s2130, 16
          %s2132 = scalar_lea.vmem [#allocation8], %s2131
          %2133 = dma.done %s2129, 256
        $region80: #{tpu_custom_call.1} parent=75 // pred_fallthru
          _
      $region76: #{tpu_custom_call.1} parent=5 // pred_fallthru
        _
    $region6: #{tpu_custom_call.1} parent=1 // loop_footer
      %s26 = sadd.s32 1, %s22
    $region7: #{tpu_custom_call.1} parent=1 // loop_footer_branch
      %21 = sbr.rel target = $region3
    $region8: #{tpu_custom_call.1} parent=1 // loop_exit
      _
    %2134 = vsyncpa [#allocation3], 1
    %s2135 = scalar_lea.sflag [#allocation3], 1
    %2136 = vsyncpa %s2135, 1
    %2137 = vsyncpa [#allocation6], 1
    %2138 = vsyncpa [#allocation4], 1
    %s2139 = scalar_lea.sflag [#allocation4], 1
    %2140 = vsyncpa %s2139, 1

// kernel: tpu_custom_call.1
$region0: #{tpu_custom_call.1}
  #allocation0 [shape = 'u32[]', space=smem, size = 0x4, offset = 0x4, fixed_abs, tag = 'smem constant byte address 0x4 - core index']
  #allocation1 [shape = 'u32[144,128]{1,0:T(1,128)}', space=vmem, size = 0x12000, scoped, tag = 'internal scratch']
  %s0 = inlined_call_operand.hbm [shape: f32[16,8,16], index: 0, kind: input, shape index: {}]
  %s1 = inlined_call_operand.vmem [shape: f32[16,8], index: 1, kind: input, shape index: {}]
  %s2 = inlined_call_operand.vmem [shape: f32[16,32], index: 2, kind: input, shape index: {}]
  %s3 = inlined_call_operand.vmem [shape: f32[1,32], index: 3, kind: input, shape index: {}]
  %s4 = inlined_call_operand.vmem [shape: f32[8,32], index: 4, kind: input, shape index: {}]
  %s5 = inlined_call_operand.vmem [shape: f32[1,32], index: 5, kind: input, shape index: {}]
  %s6 = inlined_call_operand.hbm [shape: f32[8,32,256], index: 6, kind: input, shape index: {}]
  %s7 = inlined_call_operand.hbm [shape: f32[32,256], index: 7, kind: input, shape index: {}]
  %s8 = inlined_call_operand.vmem [shape: f32[1,256], index: 8, kind: input, shape index: {}]
  %s9 = inlined_call_operand.hbm [shape: f32[16,256], index: 9, kind: output, shape index: {}]
  %s10 = sld [smem:[#allocation0]]
  $region81: #{tpu_custom_call.1} parent=0
    _
  %s12 = ssub.s32 1, %s10
  %s13 = scalar_select 0, %s12, %s10
  $region1: #{tpu_custom_call.1} parent=0
    #allocation2 [shape = 'u8[65536]{0}', space=vmem, size = 0x10000, scoped, tag = 'input window, operand 0']
    #allocation3 [shape = 's32[2]{0}', space=sflag, size = 0x8, scoped, tag = 'scoped memory for tpu_custom_call.1']
    #allocation4 [shape = 's32[2]{0}', space=sflag, size = 0x8, scoped, tag = 'scoped memory for tpu_custom_call.1']
    #allocation5 [shape = 'u8[262144]{0}', space=vmem, size = 0x40000, scoped, tag = 'input window, operand 6, single buffered']
    #allocation6 [shape = 's32[1]{0}', space=sflag, size = 0x4, scoped, tag = 'scoped memory for tpu_custom_call.1']
    #allocation7 [shape = 'u8[32768]{0}', space=vmem, size = 0x8000, scoped, tag = 'input window, operand 7, single buffered']
    #allocation8 [shape = 'u8[16384]{0}', space=vmem, size = 0x4000, scoped, tag = 'output window, operand 0']
    %14 = vsyncpa [#allocation3], 0
    %s15 = scalar_lea.sflag [#allocation3], 1
    %16 = vsyncpa %s15, 0
    %17 = vsyncpa [#allocation6], 0
    %18 = vsyncpa [#allocation4], 0
    %s19 = scalar_lea.sflag [#allocation4], 1
    %20 = vsyncpa %s19, 0
    loop: start=0, step=1, limit=4
    $region2: #{tpu_custom_call.1} parent=1 // loop_pre_header
      _
    $region3: #{tpu_custom_call.1} parent=1 // loop_header
      %s22 = sphi 0, %s26
      %p23 = scmp.ge.s32.totalorder %s22, 4
      %s32 = sphi 0, %s34
      %s35 = sphi 0, %s32
      %s36 = sphi 0, %s35
      %s52 = sphi 0, %s36
      %s58 = sphi 0, %s60
      %s61 = sphi 0, %s58
      %s62 = sphi 0, %s61
      %s78 = sphi 0, %s62
      %s82 = sphi 0, %s82
      %s84 = sphi 0, %s82
      %s85 = sphi 0, %s84
      %s99 = sphi 0, %s85
      %s103 = sphi 0, %s103
      %s105 = sphi 0, %s103
      %s106 = sphi 0, %s105
      %s120 = sphi 0, %s106
      %s124 = sphi 0, %s124
      %s126 = sphi 0, %s124
      %s127 = sphi 0, %s126
      %s141 = sphi 0, %s127
      %s145 = sphi 0, %s145
      %s147 = sphi 0, %s145
      %s148 = sphi 0, %s147
      %s162 = sphi 0, %s148
      %s166 = sphi 0, %s166
      %s168 = sphi 0, %s166
      %s169 = sphi 0, %s168
      %s183 = sphi 0, %s169
      %s187 = sphi 0, %s187
      %s189 = sphi 0, %s187
      %s190 = sphi 0, %s189
      %s204 = sphi 0, %s190
      %s208 = sphi 0, %s208
      %s210 = sphi 0, %s208
      %s211 = sphi 0, %s210
      %s225 = sphi 0, %s211
      %s231 = sphi 0, %s233
      %s234 = sphi 0, %s231
      %s235 = sphi 0, %s234
      %s251 = sphi 0, %s235
    $region4: #{tpu_custom_call.1} parent=1 // loop_header_branch
      %25 = sbr.rel (%p23) target = $region8
    $region5: #{tpu_custom_call.1} parent=1 // loop_body
      %s27 = ssub.s32 %s22, 1
      %s28 = ssub.s32 %s22, 2
      %s29 = sadd.s32 %s22, 1
      %s30 = ssub.s32 %s22, %s29
      %p31 = scmp.eq.s32.totalorder %s30, 0
      %s33 = sadd.s32 %s32, 1
      %s34 = scalar_select %p31, %s32, %s33
      %p37 = pneg %p31
      %p38 = scmp.eq.s32.totalorder %s22, 1
      %p39 = por %p37, %p38
      %p40 = scmp.ne.s32.totalorder %s32, %s35
      %p41 = scmp.eq.s32.totalorder %s22, 0
      %p42 = por %p40, %p41
      %p43 = scmp.ne.s32.totalorder %s32, %s35
      %p44 = scmp.eq.s32.totalorder %s27, 1
      %p45 = por %p43, %p44
      %p46 = scmp.ne.s32.totalorder %s35, %s36
      %p47 = scmp.eq.s32.totalorder %s27, 0
      %p48 = por %p46, %p47
      %p49 = scmp.ne.s32.totalorder %s35, %s36
      %p50 = scmp.eq.s32.totalorder %s28, 1
      %p51 = por %p49, %p50
      %p53 = scmp.ne.s32.totalorder %s36, %s52
      %p54 = scmp.eq.s32.totalorder %s28, 0
      %p55 = por %p53, %p54
      %s56 = ssub.s32 %s22, %s29
      %p57 = scmp.eq.s32.totalorder %s56, 0
      %s59 = sadd.s32 %s58, 1
      %s60 = scalar_select %p57, %s58, %s59
      %p63 = pneg %p57
      %p64 = scmp.eq.s32.totalorder %s22, 1
      %p65 = por %p63, %p64
      %p66 = scmp.ne.s32.totalorder %s58, %s61
      %p67 = scmp.eq.s32.totalorder %s22, 0
      %p68 = por %p66, %p67
      %p69 = scmp.ne.s32.totalorder %s58, %s61
      %p70 = scmp.eq.s32.totalorder %s27, 1
      %p71 = por %p69, %p70
      %p72 = scmp.ne.s32.totalorder %s61, %s62
      %p73 = scmp.eq.s32.totalorder %s27, 0
      %p74 = por %p72, %p73
      %p75 = scmp.ne.s32.totalorder %s61, %s62
      %p76 = scmp.eq.s32.totalorder %s28, 1
      %p77 = por %p75, %p76
      %p79 = scmp.ne.s32.totalorder %s62, %s78
      %p80 = scmp.eq.s32.totalorder %s28, 0
      %p81 = por %p79, %p80
      %s83 = sadd.s32 %s82, 1
      %p86 = scmp.eq.s32.totalorder %s22, 1
      %p87 = scmp.ne.s32.totalorder %s82, %s84
      %p88 = scmp.eq.s32.totalorder %s22, 0
      %p89 = por %p87, %p88
      %p90 = scmp.ne.s32.totalorder %s82, %s84
      %p91 = scmp.eq.s32.totalorder %s27, 1
      %p92 = por %p90, %p91
      %p93 = scmp.ne.s32.totalorder %s84, %s85
      %p94 = scmp.eq.s32.totalorder %s27, 0
      %p95 = por %p93, %p94
      %p96 = scmp.ne.s32.totalorder %s84, %s85
      %p97 = scmp.eq.s32.totalorder %s28, 1
      %p98 = por %p96, %p97
      %p100 = scmp.ne.s32.totalorder %s85, %s99
      %p101 = scmp.eq.s32.totalorder %s28, 0
      %p102 = por %p100, %p101
      %s104 = sadd.s32 %s103, 1
      %p107 = scmp.eq.s32.totalorder %s22, 1
      %p108 = scmp.ne.s32.totalorder %s103, %s105
      %p109 = scmp.eq.s32.totalorder %s22, 0
      %p110 = por %p108, %p109
      %p111 = scmp.ne.s32.totalorder %s103, %s105
      %p112 = scmp.eq.s32.totalorder %s27, 1
      %p113 = por %p111, %p112
      %p114 = scmp.ne.s32.totalorder %s105, %s106
      %p115 = scmp.eq.s32.totalorder %s27, 0
      %p116 = por %p114, %p115
      %p117 = scmp.ne.s32.totalorder %s105, %s106
      %p118 = scmp.eq.s32.totalorder %s28, 1
      %p119 = por %p117, %p118
      %p121 = scmp.ne.s32.totalorder %s106, %s120
      %p122 = scmp.eq.s32.totalorder %s28, 0
      %p123 = por %p121, %p122
      %s125 = sadd.s32 %s124, 1
      %p128 = scmp.eq.s32.totalorder %s22, 1
      %p129 = scmp.ne.s32.totalorder %s124, %s126
      %p130 = scmp.eq.s32.totalorder %s22, 0
      %p131 = por %p129, %p130
      %p132 = scmp.ne.s32.totalorder %s124, %s126
      %p133 = scmp.eq.s32.totalorder %s27, 1
      %p134 = por %p132, %p133
      %p135 = scmp.ne.s32.totalorder %s126, %s127
      %p136 = scmp.eq.s32.totalorder %s27, 0
      %p137 = por %p135, %p136
      %p138 = scmp.ne.s32.totalorder %s126, %s127
      %p139 = scmp.eq.s32.totalorder %s28, 1
      %p140 = por %p138, %p139
      %p142 = scmp.ne.s32.totalorder %s127, %s141
      %p143 = scmp.eq.s32.totalorder %s28, 0
      %p144 = por %p142, %p143
      %s146 = sadd.s32 %s145, 1
      %p149 = scmp.eq.s32.totalorder %s22, 1
      %p150 = scmp.ne.s32.totalorder %s145, %s147
      %p151 = scmp.eq.s32.totalorder %s22, 0
      %p152 = por %p150, %p151
      %p153 = scmp.ne.s32.totalorder %s145, %s147
      %p154 = scmp.eq.s32.totalorder %s27, 1
      %p155 = por %p153, %p154
      %p156 = scmp.ne.s32.totalorder %s147, %s148
      %p157 = scmp.eq.s32.totalorder %s27, 0
      %p158 = por %p156, %p157
      %p159 = scmp.ne.s32.totalorder %s147, %s148
      %p160 = scmp.eq.s32.totalorder %s28, 1
      %p161 = por %p159, %p160
      %p163 = scmp.ne.s32.totalorder %s148, %s162
      %p164 = scmp.eq.s32.totalorder %s28, 0
      %p165 = por %p163, %p164
      %s167 = sadd.s32 %s166, 1
      %p170 = scmp.eq.s32.totalorder %s22, 1
      %p171 = scmp.ne.s32.totalorder %s166, %s168
      %p172 = scmp.eq.s32.totalorder %s22, 0
      %p173 = por %p171, %p172
      %p174 = scmp.ne.s32.totalorder %s166, %s168
      %p175 = scmp.eq.s32.totalorder %s27, 1
      %p176 = por %p174, %p175
      %p177 = scmp.ne.s32.totalorder %s168, %s169
      %p178 = scmp.eq.s32.totalorder %s27, 0
      %p179 = por %p177, %p178
      %p180 = scmp.ne.s32.totalorder %s168, %s169
      %p181 = scmp.eq.s32.totalorder %s28, 1
      %p182 = por %p180, %p181
      %p184 = scmp.ne.s32.totalorder %s169, %s183
      %p185 = scmp.eq.s32.totalorder %s28, 0
      %p186 = por %p184, %p185
      %s188 = sadd.s32 %s187, 1
      %p191 = scmp.eq.s32.totalorder %s22, 1
      %p192 = scmp.ne.s32.totalorder %s187, %s189
      %p193 = scmp.eq.s32.totalorder %s22, 0
      %p194 = por %p192, %p193
      %p195 = scmp.ne.s32.totalorder %s187, %s189
      %p196 = scmp.eq.s32.totalorder %s27, 1
      %p197 = por %p195, %p196
      %p198 = scmp.ne.s32.totalorder %s189, %s190
      %p199 = scmp.eq.s32.totalorder %s27, 0
      %p200 = por %p198, %p199
      %p201 = scmp.ne.s32.totalorder %s189, %s190
      %p202 = scmp.eq.s32.totalorder %s28, 1
      %p203 = por %p201, %p202
      %p205 = scmp.ne.s32.totalorder %s190, %s204
      %p206 = scmp.eq.s32.totalorder %s28, 0
      %p207 = por %p205, %p206
      %s209 = sadd.s32 %s208, 1
      %p212 = scmp.eq.s32.totalorder %s22, 1
      %p213 = scmp.ne.s32.totalorder %s208, %s210
      %p214 = scmp.eq.s32.totalorder %s22, 0
      %p215 = por %p213, %p214
      %p216 = scmp.ne.s32.totalorder %s208, %s210
      %p217 = scmp.eq.s32.totalorder %s27, 1
      %p218 = por %p216, %p217
      %p219 = scmp.ne.s32.totalorder %s210, %s211
      %p220 = scmp.eq.s32.totalorder %s27, 0
      %p221 = por %p219, %p220
      %p222 = scmp.ne.s32.totalorder %s210, %s211
      %p223 = scmp.eq.s32.totalorder %s28, 1
      %p224 = por %p222, %p223
      %p226 = scmp.ne.s32.totalorder %s211, %s225
      %p227 = scmp.eq.s32.totalorder %s28, 0
      %p228 = por %p226, %p227
      %s229 = ssub.s32 %s22, %s29
      %p230 = scmp.eq.s32.totalorder %s229, 0
      %s232 = sadd.s32 %s231, 1
      %s233 = scalar_select %p230, %s231, %s232
      %p236 = pneg %p230
      %p237 = scmp.eq.s32.totalorder %s22, 1
      %p238 = por %p236, %p237
      %p239 = scmp.ne.s32.totalorder %s231, %s234
      %p240 = scmp.eq.s32.totalorder %s22, 0
      %p241 = por %p239, %p240
      %p242 = scmp.ne.s32.totalorder %s231, %s234
      %p243 = scmp.eq.s32.totalorder %s27, 1
      %p244 = por %p242, %p243
      %p245 = scmp.ne.s32.totalorder %s234, %s235
      %p246 = scmp.eq.s32.totalorder %s27, 0
      %p247 = por %p245, %p246
      %p248 = scmp.ne.s32.totalorder %s234, %s235
      %p249 = scmp.eq.s32.totalorder %s28, 1
      %p250 = por %p248, %p249
      %p252 = scmp.ne.s32.totalorder %s235, %s251
      %p253 = scmp.eq.s32.totalorder %s28, 0
      %p254 = por %p252, %p253
      %p255 = scmp.le.s32.totalorder 1, %s22
      %p256 = scmp.lt.s32.totalorder %s22, 3
      %p257 = pnand %p255, %p256
      %p258 = pneg %p257
      // Predicated region
      $region9: #{tpu_custom_call.1} parent=5 // pred_check
        _
      $region10: #{tpu_custom_call.1} parent=5 // pred_check_branch
        %260 = sbr.rel (%p257) target = $region12
      $region11: #{tpu_custom_call.1} parent=5 // pred_region
        %s261 = ssub.s32 %s22, 1
        // Predicated region
        $region13: #{tpu_custom_call.1} parent=11 // pred_check
          %p262 = pneg %p95
        $region14: #{tpu_custom_call.1} parent=11 // pred_check_branch
          %264 = sbr.rel (%p262) target = $region16
        $region15: #{tpu_custom_call.1} parent=11 // pred_region
          _
        $region16: #{tpu_custom_call.1} parent=11 // pred_fallthru
          _
        // Predicated region
        $region17: #{tpu_custom_call.1} parent=11 // pred_check
          %p265 = pneg %p116
        $region18: #{tpu_custom_call.1} parent=11 // pred_check_branch
          %267 = sbr.rel (%p265) target = $region20
        $region19: #{tpu_custom_call.1} parent=11 // pred_region
          _
        $region20: #{tpu_custom_call.1} parent=11 // pred_fallthru
          _
        // Predicated region
        $region21: #{tpu_custom_call.1} parent=11 // pred_check
          %p268 = pneg %p137
        $region22: #{tpu_custom_call.1} parent=11 // pred_check_branch
          %270 = sbr.rel (%p268) target = $region24
        $region23: #{tpu_custom_call.1} parent=11 // pred_region
          _
        $region24: #{tpu_custom_call.1} parent=11 // pred_fallthru
          _
        // Predicated region
        $region25: #{tpu_custom_call.1} parent=11 // pred_check
          %p271 = pneg %p158
        $region26: #{tpu_custom_call.1} parent=11 // pred_check_branch
          %273 = sbr.rel (%p271) target = $region28
        $region27: #{tpu_custom_call.1} parent=11 // pred_region
          _
        $region28: #{tpu_custom_call.1} parent=11 // pred_fallthru
          _
        // Predicated region
        $region29: #{tpu_custom_call.1} parent=11 // pred_check
          %p274 = pneg %p179
        $region30: #{tpu_custom_call.1} parent=11 // pred_check_branch
          %276 = sbr.rel (%p274) target = $region32
        $region31: #{tpu_custom_call.1} parent=11 // pred_region
          %s278 = ssub.s32 8192, 8192
          %279 = vsyncadd [#allocation6], %s278
          %s280 = sshll.u32 [#allocation5], 4
          %s281 = int_to_ptr.vmem [resolvable:$true] %s280
          %286 = dma.hbm_to_vmem [thread:$0]  %s6, 8192, %s281, [#allocation6], 256, 256, 16
        $region32: #{tpu_custom_call.1} parent=11 // pred_fallthru
          _
        // Predicated region
        $region33: #{tpu_custom_call.1} parent=11 // pred_check
          %p287 = pneg %p200
        $region34: #{tpu_custom_call.1} parent=11 // pred_check_branch
          %289 = sbr.rel (%p287) target = $region36
        $region35: #{tpu_custom_call.1} parent=11 // pred_region
          %s291 = ssub.s32 1024, 1024
          %292 = vsyncadd [#allocation6], %s291
          %s293 = sshll.u32 [#allocation7], 4
          %s294 = int_to_ptr.vmem [resolvable:$true] %s293
          %299 = dma.hbm_to_vmem [thread:$0]  %s7, 1024, %s294, [#allocation6], 256, 256, 16
        $region36: #{tpu_custom_call.1} parent=11 // pred_fallthru
          _
        // Predicated region
        $region37: #{tpu_custom_call.1} parent=11 // pred_check
          %p300 = pneg %p221
        $region38: #{tpu_custom_call.1} parent=11 // pred_check_branch
          %302 = sbr.rel (%p300) target = $region40
        $region39: #{tpu_custom_call.1} parent=11 // pred_region
          _
        $region40: #{tpu_custom_call.1} parent=11 // pred_fallthru
          _
      $region12: #{tpu_custom_call.1} parent=5 // pred_fallthru
        _
      %p303 = scmp.lt.s32.totalorder %s22, 2
      // Predicated region
      $region41: #{tpu_custom_call.1} parent=5 // pred_check
        %p304 = pneg %p303
      $region42: #{tpu_custom_call.1} parent=5 // pred_check_branch
        %306 = sbr.rel (%p304) target = $region44
      $region43: #{tpu_custom_call.1} parent=5 // pred_region
        // Predicated region
        $region45: #{tpu_custom_call.1} parent=43 // pred_check
          %p307 = pneg %p42
        $region46: #{tpu_custom_call.1} parent=43 // pred_check_branch
          %309 = sbr.rel (%p307) target = $region48
        $region47: #{tpu_custom_call.1} parent=43 // pred_region
          %s310 = sand.u32 %s32, 1
          %s311 = scalar_lea.sflag [#allocation3], %s310
          %s312 = sand.u32 %s32, 1
          %s313 = smul.addr %s312, 64
          %s314 = scalar_lea.vmem [#allocation2], %s313
          %s315 = smul.u32 8, %s22
          %s317 = ssub.s32 1024, 1024
          %318 = vsyncadd %s311, %s317
          %s319 = smul.addr %s315, 128
          %s320 = scalar_lea.hbm %s0, %s319
          %s321 = sshll.u32 %s314, 4
          %s322 = int_to_ptr.vmem [resolvable:$true] %s321
          %327 = dma.hbm_to_vmem [thread:$0]  %s320, 1024, %s322, %s311, 128, 128, 8
        $region48: #{tpu_custom_call.1} parent=43 // pred_fallthru
          _
        // Predicated region
        $region49: #{tpu_custom_call.1} parent=43 // pred_check
          %p328 = pneg %p68
        $region50: #{tpu_custom_call.1} parent=43 // pred_check_branch
          %330 = sbr.rel (%p328) target = $region52
        $region51: #{tpu_custom_call.1} parent=43 // pred_region
          %p331 = scmp.lt.s32.totalorder %s22, 1
          %s332 = scalar_select %p331, %s22, 1
          %s333 = smul.addr %s332, 8
          %s334 = scalar_lea.vmem %s1, %s333
        $region52: #{tpu_custom_call.1} parent=43 // pred_fallthru
          _
      $region44: #{tpu_custom_call.1} parent=5 // pred_fallthru
        _
      %p335 = scmp.le.s32.totalorder 1, %s22
      %p336 = scmp.lt.s32.totalorder %s22, 3
      %p337 = pnand %p335, %p336
      %p338 = pneg %p337
      // Predicated region
      $region53: #{tpu_custom_call.1} parent=5 // pred_check
        _
      $region54: #{tpu_custom_call.1} parent=5 // pred_check_branch
        %340 = sbr.rel (%p337) target = $region56
      $region55: #{tpu_custom_call.1} parent=5 // pred_region
        %s341 = ssub.s32 %s22, 1
        %s342 = sand.u32 %s35, 1
        %s343 = scalar_lea.sflag [#allocation3], %s342
        %s344 = sand.u32 %s35, 1
        %s345 = smul.addr %s344, 64
        %s346 = scalar_lea.vmem [#allocation2], %s345
        // Predicated region
        $region57: #{tpu_custom_call.1} parent=55 // pred_check
          %p347 = pneg %p48
        $region58: #{tpu_custom_call.1} parent=55 // pred_check_branch
          %349 = sbr.rel (%p347) target = $region60
        $region59: #{tpu_custom_call.1} parent=55 // pred_region
          %350 = dma.done %s343, 1024
        $region60: #{tpu_custom_call.1} parent=55 // pred_fallthru
          _
        // Predicated region
        $region61: #{tpu_custom_call.1} parent=55 // pred_check
          %p351 = pneg %p179
        $region62: #{tpu_custom_call.1} parent=55 // pred_check_branch
          %353 = sbr.rel (%p351) target = $region64
        $region63: #{tpu_custom_call.1} parent=55 // pred_region
          %354 = dma.done [#allocation6], 8192
        $region64: #{tpu_custom_call.1} parent=55 // pred_fallthru
          _
        // Predicated region
        $region65: #{tpu_custom_call.1} parent=55 // pred_check
          %p355 = pneg %p200
        $region66: #{tpu_custom_call.1} parent=55 // pred_check_branch
          %357 = sbr.rel (%p355) target = $region68
        $region67: #{tpu_custom_call.1} parent=55 // pred_region
          %358 = dma.done [#allocation6], 1024
        $region68: #{tpu_custom_call.1} parent=55 // pred_fallthru
          _
        %s359 = sand.u32 %s35, 1
        %s360 = scalar_lea.sflag [#allocation3], %s359
        %s361 = sand.u32 %s35, 1
        %s362 = smul.addr %s361, 64
        %s363 = scalar_lea.vmem [#allocation2], %s362
        %p364 = pneg %p48
        %p365 = pneg %p45
        %p366 = scmp.lt.s32.totalorder %s27, 1
        %s367 = scalar_select %p366, %s27, 1
        %s368 = smul.addr %s367, 8
        %s369 = scalar_lea.vmem %s1, %s368
        %p370 = pneg %p74
        %p371 = pneg %p71
        %p372 = pneg %p95
        %p373 = pneg %p92
        %p374 = pneg %p116
        %p375 = pneg %p113
        %p376 = pneg %p137
        %p377 = pneg %p134
        %p378 = pneg %p158
        %p379 = pneg %p155
        %p380 = pneg %p179
        %p381 = pneg %p176
        %p382 = pneg %p200
        %p383 = pneg %p197
        %p384 = pneg %p221
        %p385 = pneg %p218
        %p386 = pneg %p247
        %p387 = pneg %p244
        %s388 = sand.u32 %s234, 1
        %s389 = scalar_lea.sflag [#allocation4], %s388
        %s390 = sand.u32 %s234, 1
        %s391 = smul.addr %s390, 16
        %s392 = scalar_lea.vmem [#allocation8], %s391
        %s393 = smul.u32 8, %s27
        %p394 = scmp.lt.s32.totalorder %s27, 1
        %s395 = scalar_select %p394, %s27, 1
        %s396 = smul.addr %s395, 8
        %s397 = scalar_lea.vmem %s1, %s396
        %v398 = vld [vmem:[%s397] sm:$0xff]
        %v399 = vld [vmem:[%s4] sm:$0xff]
        %v400 = vld [vmem:[%s5] sm:$0x1]
        %v402 = vlaneseq
        %v403 = vshrl.u32 %v402, 7
        %v404 = vsub.s32 0, %v403
        %v405 = vrot.slane %v400, %v404
        %vm407 = vcmask 64512
        %v409 = vsel %vm407, %v398, 0
        %411 = vmatprep.subr.mxu0 0.0
        %412 = vmatpush1.msra.mxu0 0.0
        %413 = vmatprep.subr.mxu0 0.0
        %414 = vmatpush1.msra.mxu0 0.0
        %415 = vmatprep.subr.mxu0 0.0
        %416 = vmatpush1.msra.mxu0 0.0
        %417 = vmatprep.subr.mxu0 0.0
        %418 = vmatpush1.msra.mxu0 0.0
        %419 = vmatprep.subr.mxu0 0.0
        %420 = vmatpush1.msra.mxu0 0.0
        %421 = vmatprep.subr.mxu0 0.0
        %422 = vmatpush1.msra.mxu0 0.0
        %423 = vmatprep.subr.mxu0 0.0
        %424 = vmatpush1.msra.mxu0 0.0
        %425 = vmatprep.subr.mxu0 0.0
        %426 = vmatpush1.msra.mxu0 0.0
        %427 = vmatprep.subr.mxu0 0.0
        %428 = vmatpush1.msra.mxu0 0.0
        %429 = vmatprep.subr.mxu0 0.0
        %430 = vmatpush1.msra.mxu0 0.0
        %431 = vmatprep.subr.mxu0 0.0
        %432 = vmatpush1.msra.mxu0 0.0
        %433 = vmatprep.subr.mxu0 0.0
        %434 = vmatpush1.msra.mxu0 0.0
        %435 = vmatprep.subr.mxu0 0.0
        %436 = vmatpush1.msra.mxu0 0.0
        %437 = vmatprep.subr.mxu0 0.0
        %438 = vmatpush1.msra.mxu0 0.0
        %439 = vmatprep.subr.mxu0 0.0
        %440 = vmatpush1.msra.mxu0 0.0
        %441 = vmatprep.subr.mxu0 0.0
        %442 = vmatpush1.msra.mxu0 %v399
        %443 = vmatprep.subr.mxu0 0.0
        %444 = vmatpush2.msra.mxu0 0.0
        %445 = vmatprep.subr.mxu0 0.0
        %446 = vmatpush2.msra.mxu0 0.0
        %447 = vmatprep.subr.mxu0 0.0
        %448 = vmatpush2.msra.mxu0 0.0
        %449 = vmatprep.subr.mxu0 0.0
        %450 = vmatpush2.msra.mxu0 0.0
        %451 = vmatprep.subr.mxu0 0.0
        %452 = vmatpush2.msra.mxu0 0.0
        %453 = vmatprep.subr.mxu0 0.0
        %454 = vmatpush2.msra.mxu0 0.0
        %455 = vmatprep.subr.mxu0 0.0
        %456 = vmatpush2.msra.mxu0 0.0
        %457 = vmatprep.subr.mxu0 0.0
        %458 = vmatpush2.msra.mxu0 0.0
        %459 = vmatprep.subr.mxu0 0.0
        %460 = vmatpush2.msra.mxu0 0.0
        %461 = vmatprep.subr.mxu0 0.0
        %462 = vmatpush2.msra.mxu0 0.0
        %463 = vmatprep.subr.mxu0 0.0
        %464 = vmatpush2.msra.mxu0 0.0
        %465 = vmatprep.subr.mxu0 0.0
        %466 = vmatpush2.msra.mxu0 0.0
        %467 = vmatprep.subr.mxu0 0.0
        %468 = vmatpush2.msra.mxu0 0.0
        %469 = vmatprep.subr.mxu0 0.0
        %470 = vmatpush2.msra.mxu0 0.0
        %471 = vmatprep.subr.mxu0 0.0
        %472 = vmatpush2.msra.mxu0 0.0
        %473 = vmatprep.subr.mxu0 0.0
        %474 = vmatpush2.msra.mxu0 0.0
        %475 = vmatprep.mubr.f32.mxu0 0.0
        %476 = vmatmul.mubr.f32.gmra.mxu0 %v409
        %v477 = vpop.f32.mrf.mxu0
        %v478 = vadd.f32 %v405, %v477
        %v479 = vpop.f32.mrf.mxu0
        %480 = vdwg.mxu0
        %v481 = vmax.f32 %v478, 0.0
        %v482 = vld [vmem:[#allocation7] sm:$0xff]
        %v483 = vld [vmem:[#allocation7 + $0x8] sm:$0xff]
        %v484 = vld [vmem:[#allocation7 + $0x10] sm:$0xff]
        %v485 = vld [vmem:[#allocation7 + $0x18] sm:$0xff]
        %v486 = vld [vmem:[#allocation7 + $0x20] sm:$0xff]
        %v487 = vld [vmem:[#allocation7 + $0x28] sm:$0xff]
        %v488 = vld [vmem:[#allocation7 + $0x30] sm:$0xff]
        %v489 = vld [vmem:[#allocation7 + $0x38] sm:$0xff]
        %v490 = vld [vmem:[%s8] sm:$0x3]
        %v492 = vlaneseq
        %v493 = vshrl.u32 %v492, 7
        %v494 = vsub.s32 0, %v493
        %v495 = vrot.slane %v490, %v494
        %v496 = vlaneseq
        %v497 = vshrl.u32 %v496, 7
        %v498 = vsub.s32 1, %v497
        %v499 = vrot.slane %v490, %v498
        %vm502 = vcmask 261120
        %v504 = vsel %vm502, %v481, 0
        %506 = vmatprep.subr.mxu0 0.0
        %507 = vmatpush1.msra.mxu0 0.0
        %508 = vmatprep.subr.mxu0 0.0
        %509 = vmatpush1.msra.mxu0 0.0
        %510 = vmatprep.subr.mxu0 0.0
        %511 = vmatpush1.msra.mxu0 0.0
        %512 = vmatprep.subr.mxu0 0.0
        %513 = vmatpush1.msra.mxu0 0.0
        %514 = vmatprep.subr.mxu0 0.0
        %515 = vmatpush1.msra.mxu0 0.0
        %516 = vmatprep.subr.mxu0 0.0
        %517 = vmatpush1.msra.mxu0 0.0
        %518 = vmatprep.subr.mxu0 0.0
        %519 = vmatpush1.msra.mxu0 0.0
        %520 = vmatprep.subr.mxu0 0.0
        %521 = vmatpush1.msra.mxu0 0.0
        %522 = vmatprep.subr.mxu0 0.0
        %523 = vmatpush1.msra.mxu0 0.0
        %524 = vmatprep.subr.mxu0 0.0
        %525 = vmatpush1.msra.mxu0 0.0
        %526 = vmatprep.subr.mxu0 0.0
        %527 = vmatpush1.msra.mxu0 0.0
        %528 = vmatprep.subr.mxu0 0.0
        %529 = vmatpush1.msra.mxu0 0.0
        %530 = vmatprep.subr.mxu0 %v489
        %531 = vmatpush1.msra.mxu0 %v488
        %532 = vmatprep.subr.mxu0 %v487
        %533 = vmatpush1.msra.mxu0 %v486
        %534 = vmatprep.subr.mxu0 %v485
        %535 = vmatpush1.msra.mxu0 %v484
        %536 = vmatprep.subr.mxu0 %v483
        %537 = vmatpush1.msra.mxu0 %v482
        %538 = vmatprep.subr.mxu0 0.0
        %539 = vmatpush2.msra.mxu0 0.0
        %540 = vmatprep.subr.mxu0 0.0
        %541 = vmatpush2.msra.mxu0 0.0
        %542 = vmatprep.subr.mxu0 0.0
        %543 = vmatpush2.msra.mxu0 0.0
        %544 = vmatprep.subr.mxu0 0.0
        %545 = vmatpush2.msra.mxu0 0.0
        %546 = vmatprep.subr.mxu0 0.0
        %547 = vmatpush2.msra.mxu0 0.0
        %548 = vmatprep.subr.mxu0 0.0
        %549 = vmatpush2.msra.mxu0 0.0
        %550 = vmatprep.subr.mxu0 0.0
        %551 = vmatpush2.msra.mxu0 0.0
        %552 = vmatprep.subr.mxu0 0.0
        %553 = vmatpush2.msra.mxu0 0.0
        %554 = vmatprep.subr.mxu0 0.0
        %555 = vmatpush2.msra.mxu0 0.0
        %556 = vmatprep.subr.mxu0 0.0
        %557 = vmatpush2.msra.mxu0 0.0
        %558 = vmatprep.subr.mxu0 0.0
        %559 = vmatpush2.msra.mxu0 0.0
        %560 = vmatprep.subr.mxu0 0.0
        %561 = vmatpush2.msra.mxu0 0.0
        %562 = vmatprep.subr.mxu0 0.0
        %563 = vmatpush2.msra.mxu0 0.0
        %564 = vmatprep.subr.mxu0 0.0
        %565 = vmatpush2.msra.mxu0 0.0
        %566 = vmatprep.subr.mxu0 0.0
        %567 = vmatpush2.msra.mxu0 0.0
        %568 = vmatprep.subr.mxu0 0.0
        %569 = vmatpush2.msra.mxu0 0.0
        %570 = vmatprep.mubr.f32.mxu0 0.0
        %571 = vmatmul.mubr.f32.gmra.mxu0 %v504
        %v572 = vpop.f32.mrf.mxu0
        %v573 = vadd.f32 %v495, %v572
        %v574 = vpop.f32.mrf.mxu0
        %v575 = vadd.f32 %v499, %v574
        %576 = vdwg.mxu0
        %v577 = vld [vmem:[%s2] sm:$0xff]
        %v578 = vld [vmem:[%s2 + $0x8] sm:$0xff]
        %v579 = vld [vmem:[%s3] sm:$0x1]
        %v580 = vld [vmem:[%s346] sm:$0x1]
        %v581 = vld [vmem:[%s346 + $0x8] sm:$0x1]
        %v582 = vld [vmem:[%s346 + $0x10] sm:$0x1]
        %v583 = vld [vmem:[%s346 + $0x18] sm:$0x1]
        %v584 = vld [vmem:[%s346 + $0x20] sm:$0x1]
        %v585 = vld [vmem:[%s346 + $0x28] sm:$0x1]
        %v586 = vld [vmem:[%s346 + $0x30] sm:$0x1]
        %v587 = vld [vmem:[%s346 + $0x38] sm:$0x1]
        %v589 = vlaneseq
        %v590 = vshrl.u32 %v589, 7
        %v591 = vsub.s32 0, %v590
        %v592 = vrot.slane %v579, %v591
        %v602 = vrot.slane %v581, 7
        %vm603 = vcmask 1041409
        %v604 = vsel %vm603, %v602, %v580
        %v605 = vrot.slane %v582, 6
        %vm606 = vcmask 1042434
        %v607 = vsel %vm606, %v605, %v604
        %v608 = vrot.slane %v583, 5
        %vm609 = vcmask 1043459
        %v610 = vsel %vm609, %v608, %v607
        %v611 = vrot.slane %v584, 4
        %vm612 = vcmask 1044484
        %v613 = vsel %vm612, %v611, %v610
        %v614 = vrot.slane %v585, 3
        %vm615 = vcmask 1045509
        %v616 = vsel %vm615, %v614, %v613
        %v617 = vrot.slane %v586, 2
        %vm618 = vcmask 1046534
        %v619 = vsel %vm618, %v617, %v616
        %v620 = vrot.slane %v587, 1
        %vm621 = vcmask 1047559
        %v622 = vsel %vm621, %v620, %v619
        %vm623 = vcmask 130048
        %v624 = vsel %vm623, %v622, 0
        %626 = vmatprep.subr.mxu0 0.0
        %627 = vmatpush1.msra.mxu0 0.0
        %628 = vmatprep.subr.mxu0 0.0
        %629 = vmatpush1.msra.mxu0 0.0
        %630 = vmatprep.subr.mxu0 0.0
        %631 = vmatpush1.msra.mxu0 0.0
        %632 = vmatprep.subr.mxu0 0.0
        %633 = vmatpush1.msra.mxu0 0.0
        %634 = vmatprep.subr.mxu0 0.0
        %635 = vmatpush1.msra.mxu0 0.0
        %636 = vmatprep.subr.mxu0 0.0
        %637 = vmatpush1.msra.mxu0 0.0
        %638 = vmatprep.subr.mxu0 0.0
        %639 = vmatpush1.msra.mxu0 0.0
        %640 = vmatprep.subr.mxu0 0.0
        %641 = vmatpush1.msra.mxu0 0.0
        %642 = vmatprep.subr.mxu0 0.0
        %643 = vmatpush1.msra.mxu0 0.0
        %644 = vmatprep.subr.mxu0 0.0
        %645 = vmatpush1.msra.mxu0 0.0
        %646 = vmatprep.subr.mxu0 0.0
        %647 = vmatpush1.msra.mxu0 0.0
        %648 = vmatprep.subr.mxu0 0.0
        %649 = vmatpush1.msra.mxu0 0.0
        %650 = vmatprep.subr.mxu0 0.0
        %651 = vmatpush1.msra.mxu0 0.0
        %652 = vmatprep.subr.mxu0 0.0
        %653 = vmatpush1.msra.mxu0 0.0
        %654 = vmatprep.subr.mxu0 0.0
        %655 = vmatpush1.msra.mxu0 %v578
        %656 = vmatprep.subr.mxu0 0.0
        %657 = vmatpush1.msra.mxu0 %v577
        %658 = vmatprep.subr.mxu0 0.0
        %659 = vmatpush2.msra.mxu0 0.0
        %660 = vmatprep.subr.mxu0 0.0
        %661 = vmatpush2.msra.mxu0 0.0
        %662 = vmatprep.subr.mxu0 0.0
        %663 = vmatpush2.msra.mxu0 0.0
        %664 = vmatprep.subr.mxu0 0.0
        %665 = vmatpush2.msra.mxu0 0.0
        %666 = vmatprep.subr.mxu0 0.0
        %667 = vmatpush2.msra.mxu0 0.0
        %668 = vmatprep.subr.mxu0 0.0
        %669 = vmatpush2.msra.mxu0 0.0
        %670 = vmatprep.subr.mxu0 0.0
        %671 = vmatpush2.msra.mxu0 0.0
        %672 = vmatprep.subr.mxu0 0.0
        %673 = vmatpush2.msra.mxu0 0.0
        %674 = vmatprep.subr.mxu0 0.0
        %675 = vmatpush2.msra.mxu0 0.0
        %676 = vmatprep.subr.mxu0 0.0
        %677 = vmatpush2.msra.mxu0 0.0
        %678 = vmatprep.subr.mxu0 0.0
        %679 = vmatpush2.msra.mxu0 0.0
        %680 = vmatprep.subr.mxu0 0.0
        %681 = vmatpush2.msra.mxu0 0.0
        %682 = vmatprep.subr.mxu0 0.0
        %683 = vmatpush2.msra.mxu0 0.0
        %684 = vmatprep.subr.mxu0 0.0
        %685 = vmatpush2.msra.mxu0 0.0
        %686 = vmatprep.subr.mxu0 0.0
        %687 = vmatpush2.msra.mxu0 0.0
        %688 = vmatprep.subr.mxu0 0.0
        %689 = vmatpush2.msra.mxu0 0.0
        %690 = vmatprep.mubr.f32.mxu0 0.0
        %691 = vmatmul.mubr.f32.gmra.mxu0 %v624
        %v692 = vpop.f32.mrf.mxu0
        %v693 = vadd.f32 %v592, %v692
        %v694 = vpop.f32.mrf.mxu0
        %695 = vdwg.mxu0
        %v696 = vmax.f32 %v693, 0.0
        %v697 = vld [vmem:[#allocation5] sm:$0xff]
        %v698 = vld [vmem:[#allocation5 + $0x8] sm:$0xff]
        %v699 = vld [vmem:[#allocation5 + $0x10] sm:$0xff]
        %v700 = vld [vmem:[#allocation5 + $0x18] sm:$0xff]
        %v701 = vld [vmem:[#allocation5 + $0x20] sm:$0xff]
        %v702 = vld [vmem:[#allocation5 + $0x28] sm:$0xff]
        %v703 = vld [vmem:[#allocation5 + $0x30] sm:$0xff]
        %v704 = vld [vmem:[#allocation5 + $0x38] sm:$0xff]
        %v706 = vsel %vm502, %v696, 0
        %708 = vmatprep.subr.mxu0 0.0
        %709 = vmatpush1.msra.mxu0 0.0
        %710 = vmatprep.subr.mxu0 0.0
        %711 = vmatpush1.msra.mxu0 0.0
        %712 = vmatprep.subr.mxu0 0.0
        %713 = vmatpush1.msra.mxu0 0.0
        %714 = vmatprep.subr.mxu0 0.0
        %715 = vmatpush1.msra.mxu0 0.0
        %716 = vmatprep.subr.mxu0 0.0
        %717 = vmatpush1.msra.mxu0 0.0
        %718 = vmatprep.subr.mxu0 0.0
        %719 = vmatpush1.msra.mxu0 0.0
        %720 = vmatprep.subr.mxu0 0.0
        %721 = vmatpush1.msra.mxu0 0.0
        %722 = vmatprep.subr.mxu0 0.0
        %723 = vmatpush1.msra.mxu0 0.0
        %724 = vmatprep.subr.mxu0 0.0
        %725 = vmatpush1.msra.mxu0 0.0
        %726 = vmatprep.subr.mxu0 0.0
        %727 = vmatpush1.msra.mxu0 0.0
        %728 = vmatprep.subr.mxu0 0.0
        %729 = vmatpush1.msra.mxu0 0.0
        %730 = vmatprep.subr.mxu0 0.0
        %731 = vmatpush1.msra.mxu0 0.0
        %732 = vmatprep.subr.mxu0 %v704
        %733 = vmatpush1.msra.mxu0 %v703
        %734 = vmatprep.subr.mxu0 %v702
        %735 = vmatpush1.msra.mxu0 %v701
        %736 = vmatprep.subr.mxu0 %v700
        %737 = vmatpush1.msra.mxu0 %v699
        %738 = vmatprep.subr.mxu0 %v698
        %739 = vmatpush1.msra.mxu0 %v697
        %740 = vmatprep.subr.mxu0 0.0
        %741 = vmatpush2.msra.mxu0 0.0
        %742 = vmatprep.subr.mxu0 0.0
        %743 = vmatpush2.msra.mxu0 0.0
        %744 = vmatprep.subr.mxu0 0.0
        %745 = vmatpush2.msra.mxu0 0.0
        %746 = vmatprep.subr.mxu0 0.0
        %747 = vmatpush2.msra.mxu0 0.0
        %748 = vmatprep.subr.mxu0 0.0
        %749 = vmatpush2.msra.mxu0 0.0
        %750 = vmatprep.subr.mxu0 0.0
        %751 = vmatpush2.msra.mxu0 0.0
        %752 = vmatprep.subr.mxu0 0.0
        %753 = vmatpush2.msra.mxu0 0.0
        %754 = vmatprep.subr.mxu0 0.0
        %755 = vmatpush2.msra.mxu0 0.0
        %756 = vmatprep.subr.mxu0 0.0
        %757 = vmatpush2.msra.mxu0 0.0
        %758 = vmatprep.subr.mxu0 0.0
        %759 = vmatpush2.msra.mxu0 0.0
        %760 = vmatprep.subr.mxu0 0.0
        %761 = vmatpush2.msra.mxu0 0.0
        %762 = vmatprep.subr.mxu0 0.0
        %763 = vmatpush2.msra.mxu0 0.0
        %764 = vmatprep.subr.mxu0 0.0
        %765 = vmatpush2.msra.mxu0 0.0
        %766 = vmatprep.subr.mxu0 0.0
        %767 = vmatpush2.msra.mxu0 0.0
        %768 = vmatprep.subr.mxu0 0.0
        %769 = vmatpush2.msra.mxu0 0.0
        %770 = vmatprep.subr.mxu0 0.0
        %771 = vmatpush2.msra.mxu0 0.0
        %772 = vmatprep.mubr.f32.mxu0 0.0
        %773 = vmatmul.mubr.f32.gmra.mxu0 %v706
        %v774 = vpop.f32.mrf.mxu0
        %v775 = vadd.f32 0.0, %v774
        %v776 = vpop.f32.mrf.mxu0
        %v777 = vadd.f32 0.0, %v776
        %778 = vdwg.mxu0
        %v779 = vadd.f32 %v573, %v775
        %v780 = vadd.f32 %v575, %v777
        %v781 = vld [vmem:[%s346 + $0x1] sm:$0x1]
        %v782 = vld [vmem:[%s346 + $0x9] sm:$0x1]
        %v783 = vld [vmem:[%s346 + $0x11] sm:$0x1]
        %v784 = vld [vmem:[%s346 + $0x19] sm:$0x1]
        %v785 = vld [vmem:[%s346 + $0x21] sm:$0x1]
        %v786 = vld [vmem:[%s346 + $0x29] sm:$0x1]
        %v787 = vld [vmem:[%s346 + $0x31] sm:$0x1]
        %v788 = vld [vmem:[%s346 + $0x39] sm:$0x1]
        %v797 = vrot.slane %v782, 7
        %v798 = vsel %vm603, %v797, %v781
        %v799 = vrot.slane %v783, 6
        %v800 = vsel %vm606, %v799, %v798
        %v801 = vrot.slane %v784, 5
        %v802 = vsel %vm609, %v801, %v800
        %v803 = vrot.slane %v785, 4
        %v804 = vsel %vm612, %v803, %v802
        %v805 = vrot.slane %v786, 3
        %v806 = vsel %vm615, %v805, %v804
        %v807 = vrot.slane %v787, 2
        %v808 = vsel %vm618, %v807, %v806
        %v809 = vrot.slane %v788, 1
        %v810 = vsel %vm621, %v809, %v808
        %v811 = vsel %vm623, %v810, 0
        %813 = vmatprep.subr.mxu0 0.0
        %814 = vmatpush1.msra.mxu0 0.0
        %815 = vmatprep.subr.mxu0 0.0
        %816 = vmatpush1.msra.mxu0 0.0
        %817 = vmatprep.subr.mxu0 0.0
        %818 = vmatpush1.msra.mxu0 0.0
        %819 = vmatprep.subr.mxu0 0.0
        %820 = vmatpush1.msra.mxu0 0.0
        %821 = vmatprep.subr.mxu0 0.0
        %822 = vmatpush1.msra.mxu0 0.0
        %823 = vmatprep.subr.mxu0 0.0
        %824 = vmatpush1.msra.mxu0 0.0
        %825 = vmatprep.subr.mxu0 0.0
        %826 = vmatpush1.msra.mxu0 0.0
        %827 = vmatprep.subr.mxu0 0.0
        %828 = vmatpush1.msra.mxu0 0.0
        %829 = vmatprep.subr.mxu0 0.0
        %830 = vmatpush1.msra.mxu0 0.0
        %831 = vmatprep.subr.mxu0 0.0
        %832 = vmatpush1.msra.mxu0 0.0
        %833 = vmatprep.subr.mxu0 0.0
        %834 = vmatpush1.msra.mxu0 0.0
        %835 = vmatprep.subr.mxu0 0.0
        %836 = vmatpush1.msra.mxu0 0.0
        %837 = vmatprep.subr.mxu0 0.0
        %838 = vmatpush1.msra.mxu0 0.0
        %839 = vmatprep.subr.mxu0 0.0
        %840 = vmatpush1.msra.mxu0 0.0
        %841 = vmatprep.subr.mxu0 0.0
        %842 = vmatpush1.msra.mxu0 %v578
        %843 = vmatprep.subr.mxu0 0.0
        %844 = vmatpush1.msra.mxu0 %v577
        %845 = vmatprep.subr.mxu0 0.0
        %846 = vmatpush2.msra.mxu0 0.0
        %847 = vmatprep.subr.mxu0 0.0
        %848 = vmatpush2.msra.mxu0 0.0
        %849 = vmatprep.subr.mxu0 0.0
        %850 = vmatpush2.msra.mxu0 0.0
        %851 = vmatprep.subr.mxu0 0.0
        %852 = vmatpush2.msra.mxu0 0.0
        %853 = vmatprep.subr.mxu0 0.0
        %854 = vmatpush2.msra.mxu0 0.0
        %855 = vmatprep.subr.mxu0 0.0
        %856 = vmatpush2.msra.mxu0 0.0
        %857 = vmatprep.subr.mxu0 0.0
        %858 = vmatpush2.msra.mxu0 0.0
        %859 = vmatprep.subr.mxu0 0.0
        %860 = vmatpush2.msra.mxu0 0.0
        %861 = vmatprep.subr.mxu0 0.0
        %862 = vmatpush2.msra.mxu0 0.0
        %863 = vmatprep.subr.mxu0 0.0
        %864 = vmatpush2.msra.mxu0 0.0
        %865 = vmatprep.subr.mxu0 0.0
        %866 = vmatpush2.msra.mxu0 0.0
        %867 = vmatprep.subr.mxu0 0.0
        %868 = vmatpush2.msra.mxu0 0.0
        %869 = vmatprep.subr.mxu0 0.0
        %870 = vmatpush2.msra.mxu0 0.0
        %871 = vmatprep.subr.mxu0 0.0
        %872 = vmatpush2.msra.mxu0 0.0
        %873 = vmatprep.subr.mxu0 0.0
        %874 = vmatpush2.msra.mxu0 0.0
        %875 = vmatprep.subr.mxu0 0.0
        %876 = vmatpush2.msra.mxu0 0.0
        %877 = vmatprep.mubr.f32.mxu0 0.0
        %878 = vmatmul.mubr.f32.gmra.mxu0 %v811
        %v879 = vpop.f32.mrf.mxu0
        %v880 = vadd.f32 %v592, %v879
        %v881 = vpop.f32.mrf.mxu0
        %882 = vdwg.mxu0
        %v883 = vmax.f32 %v880, 0.0
        %s884 = scalar_lea.vmem [#allocation5], 64
        %v885 = vld [vmem:[%s884] sm:$0xff]
        %v886 = vld [vmem:[%s884 + $0x8] sm:$0xff]
        %v887 = vld [vmem:[%s884 + $0x10] sm:$0xff]
        %v888 = vld [vmem:[%s884 + $0x18] sm:$0xff]
        %v889 = vld [vmem:[%s884 + $0x20] sm:$0xff]
        %v890 = vld [vmem:[%s884 + $0x28] sm:$0xff]
        %v891 = vld [vmem:[%s884 + $0x30] sm:$0xff]
        %v892 = vld [vmem:[%s884 + $0x38] sm:$0xff]
        %v894 = vsel %vm502, %v883, 0
        %896 = vmatprep.subr.mxu0 0.0
        %897 = vmatpush1.msra.mxu0 0.0
        %898 = vmatprep.subr.mxu0 0.0
        %899 = vmatpush1.msra.mxu0 0.0
        %900 = vmatprep.subr.mxu0 0.0
        %901 = vmatpush1.msra.mxu0 0.0
        %902 = vmatprep.subr.mxu0 0.0
        %903 = vmatpush1.msra.mxu0 0.0
        %904 = vmatprep.subr.mxu0 0.0
        %905 = vmatpush1.msra.mxu0 0.0
        %906 = vmatprep.subr.mxu0 0.0
        %907 = vmatpush1.msra.mxu0 0.0
        %908 = vmatprep.subr.mxu0 0.0
        %909 = vmatpush1.msra.mxu0 0.0
        %910 = vmatprep.subr.mxu0 0.0
        %911 = vmatpush1.msra.mxu0 0.0
        %912 = vmatprep.subr.mxu0 0.0
        %913 = vmatpush1.msra.mxu0 0.0
        %914 = vmatprep.subr.mxu0 0.0
        %915 = vmatpush1.msra.mxu0 0.0
        %916 = vmatprep.subr.mxu0 0.0
        %917 = vmatpush1.msra.mxu0 0.0
        %918 = vmatprep.subr.mxu0 0.0
        %919 = vmatpush1.msra.mxu0 0.0
        %920 = vmatprep.subr.mxu0 %v892
        %921 = vmatpush1.msra.mxu0 %v891
        %922 = vmatprep.subr.mxu0 %v890
        %923 = vmatpush1.msra.mxu0 %v889
        %924 = vmatprep.subr.mxu0 %v888
        %925 = vmatpush1.msra.mxu0 %v887
        %926 = vmatprep.subr.mxu0 %v886
        %927 = vmatpush1.msra.mxu0 %v885
        %928 = vmatprep.subr.mxu0 0.0
        %929 = vmatpush2.msra.mxu0 0.0
        %930 = vmatprep.subr.mxu0 0.0
        %931 = vmatpush2.msra.mxu0 0.0
        %932 = vmatprep.subr.mxu0 0.0
        %933 = vmatpush2.msra.mxu0 0.0
        %934 = vmatprep.subr.mxu0 0.0
        %935 = vmatpush2.msra.mxu0 0.0
        %936 = vmatprep.subr.mxu0 0.0
        %937 = vmatpush2.msra.mxu0 0.0
        %938 = vmatprep.subr.mxu0 0.0
        %939 = vmatpush2.msra.mxu0 0.0
        %940 = vmatprep.subr.mxu0 0.0
        %941 = vmatpush2.msra.mxu0 0.0
        %942 = vmatprep.subr.mxu0 0.0
        %943 = vmatpush2.msra.mxu0 0.0
        %944 = vmatprep.subr.mxu0 0.0
        %945 = vmatpush2.msra.mxu0 0.0
        %946 = vmatprep.subr.mxu0 0.0
        %947 = vmatpush2.msra.mxu0 0.0
        %948 = vmatprep.subr.mxu0 0.0
        %949 = vmatpush2.msra.mxu0 0.0
        %950 = vmatprep.subr.mxu0 0.0
        %951 = vmatpush2.msra.mxu0 0.0
        %952 = vmatprep.subr.mxu0 0.0
        %953 = vmatpush2.msra.mxu0 0.0
        %954 = vmatprep.subr.mxu0 0.0
        %955 = vmatpush2.msra.mxu0 0.0
        %956 = vmatprep.subr.mxu0 0.0
        %957 = vmatpush2.msra.mxu0 0.0
        %958 = vmatprep.subr.mxu0 0.0
        %959 = vmatpush2.msra.mxu0 0.0
        %960 = vmatprep.mubr.f32.mxu0 0.0
        %961 = vmatmul.mubr.f32.gmra.mxu0 %v894
        %v962 = vpop.f32.mrf.mxu0
        %v963 = vadd.f32 0.0, %v962
        %v964 = vpop.f32.mrf.mxu0
        %v965 = vadd.f32 0.0, %v964
        %966 = vdwg.mxu0
        %v967 = vadd.f32 %v779, %v963
        %v968 = vadd.f32 %v780, %v965
        %v969 = vld [vmem:[%s346 + $0x2] sm:$0x1]
        %v970 = vld [vmem:[%s346 + $0xa] sm:$0x1]
        %v971 = vld [vmem:[%s346 + $0x12] sm:$0x1]
        %v972 = vld [vmem:[%s346 + $0x1a] sm:$0x1]
        %v973 = vld [vmem:[%s346 + $0x22] sm:$0x1]
        %v974 = vld [vmem:[%s346 + $0x2a] sm:$0x1]
        %v975 = vld [vmem:[%s346 + $0x32] sm:$0x1]
        %v976 = vld [vmem:[%s346 + $0x3a] sm:$0x1]
        %v985 = vrot.slane %v970, 7
        %v986 = vsel %vm603, %v985, %v969
        %v987 = vrot.slane %v971, 6
        %v988 = vsel %vm606, %v987, %v986
        %v989 = vrot.slane %v972, 5
        %v990 = vsel %vm609, %v989, %v988
        %v991 = vrot.slane %v973, 4
        %v992 = vsel %vm612, %v991, %v990
        %v993 = vrot.slane %v974, 3
        %v994 = vsel %vm615, %v993, %v992
        %v995 = vrot.slane %v975, 2
        %v996 = vsel %vm618, %v995, %v994
        %v997 = vrot.slane %v976, 1
        %v998 = vsel %vm621, %v997, %v996
        %v999 = vsel %vm623, %v998, 0
        %1001 = vmatprep.subr.mxu0 0.0
        %1002 = vmatpush1.msra.mxu0 0.0
        %1003 = vmatprep.subr.mxu0 0.0
        %1004 = vmatpush1.msra.mxu0 0.0
        %1005 = vmatprep.subr.mxu0 0.0
        %1006 = vmatpush1.msra.mxu0 0.0
        %1007 = vmatprep.subr.mxu0 0.0
        %1008 = vmatpush1.msra.mxu0 0.0
        %1009 = vmatprep.subr.mxu0 0.0
        %1010 = vmatpush1.msra.mxu0 0.0
        %1011 = vmatprep.subr.mxu0 0.0
        %1012 = vmatpush1.msra.mxu0 0.0
        %1013 = vmatprep.subr.mxu0 0.0
        %1014 = vmatpush1.msra.mxu0 0.0
        %1015 = vmatprep.subr.mxu0 0.0
        %1016 = vmatpush1.msra.mxu0 0.0
        %1017 = vmatprep.subr.mxu0 0.0
        %1018 = vmatpush1.msra.mxu0 0.0
        %1019 = vmatprep.subr.mxu0 0.0
        %1020 = vmatpush1.msra.mxu0 0.0
        %1021 = vmatprep.subr.mxu0 0.0
        %1022 = vmatpush1.msra.mxu0 0.0
        %1023 = vmatprep.subr.mxu0 0.0
        %1024 = vmatpush1.msra.mxu0 0.0
        %1025 = vmatprep.subr.mxu0 0.0
        %1026 = vmatpush1.msra.mxu0 0.0
        %1027 = vmatprep.subr.mxu0 0.0
        %1028 = vmatpush1.msra.mxu0 0.0
        %1029 = vmatprep.subr.mxu0 0.0
        %1030 = vmatpush1.msra.mxu0 %v578
        %1031 = vmatprep.subr.mxu0 0.0
        %1032 = vmatpush1.msra.mxu0 %v577
        %1033 = vmatprep.subr.mxu0 0.0
        %1034 = vmatpush2.msra.mxu0 0.0
        %1035 = vmatprep.subr.mxu0 0.0
        %1036 = vmatpush2.msra.mxu0 0.0
        %1037 = vmatprep.subr.mxu0 0.0
        %1038 = vmatpush2.msra.mxu0 0.0
        %1039 = vmatprep.subr.mxu0 0.0
        %1040 = vmatpush2.msra.mxu0 0.0
        %1041 = vmatprep.subr.mxu0 0.0
        %1042 = vmatpush2.msra.mxu0 0.0
        %1043 = vmatprep.subr.mxu0 0.0
        %1044 = vmatpush2.msra.mxu0 0.0
        %1045 = vmatprep.subr.mxu0 0.0
        %1046 = vmatpush2.msra.mxu0 0.0
        %1047 = vmatprep.subr.mxu0 0.0
        %1048 = vmatpush2.msra.mxu0 0.0
        %1049 = vmatprep.subr.mxu0 0.0
        %1050 = vmatpush2.msra.mxu0 0.0
        %1051 = vmatprep.subr.mxu0 0.0
        %1052 = vmatpush2.msra.mxu0 0.0
        %1053 = vmatprep.subr.mxu0 0.0
        %1054 = vmatpush2.msra.mxu0 0.0
        %1055 = vmatprep.subr.mxu0 0.0
        %1056 = vmatpush2.msra.mxu0 0.0
        %1057 = vmatprep.subr.mxu0 0.0
        %1058 = vmatpush2.msra.mxu0 0.0
        %1059 = vmatprep.subr.mxu0 0.0
        %1060 = vmatpush2.msra.mxu0 0.0
        %1061 = vmatprep.subr.mxu0 0.0
        %1062 = vmatpush2.msra.mxu0 0.0
        %1063 = vmatprep.subr.mxu0 0.0
        %1064 = vmatpush2.msra.mxu0 0.0
        %1065 = vmatprep.mubr.f32.mxu0 0.0
        %1066 = vmatmul.mubr.f32.gmra.mxu0 %v999
        %v1067 = vpop.f32.mrf.mxu0
        %v1068 = vadd.f32 %v592, %v1067
        %v1069 = vpop.f32.mrf.mxu0
        %1070 = vdwg.mxu0
        %v1071 = vmax.f32 %v1068, 0.0
        %s1072 = scalar_lea.vmem [#allocation5], 128
        %v1073 = vld [vmem:[%s1072] sm:$0xff]
        %v1074 = vld [vmem:[%s1072 + $0x8] sm:$0xff]
        %v1075 = vld [vmem:[%s1072 + $0x10] sm:$0xff]
        %v1076 = vld [vmem:[%s1072 + $0x18] sm:$0xff]
        %v1077 = vld [vmem:[%s1072 + $0x20] sm:$0xff]
        %v1078 = vld [vmem:[%s1072 + $0x28] sm:$0xff]
        %v1079 = vld [vmem:[%s1072 + $0x30] sm:$0xff]
        %v1080 = vld [vmem:[%s1072 + $0x38] sm:$0xff]
        %v1082 = vsel %vm502, %v1071, 0
        %1084 = vmatprep.subr.mxu0 0.0
        %1085 = vmatpush1.msra.mxu0 0.0
        %1086 = vmatprep.subr.mxu0 0.0
        %1087 = vmatpush1.msra.mxu0 0.0
        %1088 = vmatprep.subr.mxu0 0.0
        %1089 = vmatpush1.msra.mxu0 0.0
        %1090 = vmatprep.subr.mxu0 0.0
        %1091 = vmatpush1.msra.mxu0 0.0
        %1092 = vmatprep.subr.mxu0 0.0
        %1093 = vmatpush1.msra.mxu0 0.0
        %1094 = vmatprep.subr.mxu0 0.0
        %1095 = vmatpush1.msra.mxu0 0.0
        %1096 = vmatprep.subr.mxu0 0.0
        %1097 = vmatpush1.msra.mxu0 0.0
        %1098 = vmatprep.subr.mxu0 0.0
        %1099 = vmatpush1.msra.mxu0 0.0
        %1100 = vmatprep.subr.mxu0 0.0
        %1101 = vmatpush1.msra.mxu0 0.0
        %1102 = vmatprep.subr.mxu0 0.0
        %1103 = vmatpush1.msra.mxu0 0.0
        %1104 = vmatprep.subr.mxu0 0.0
        %1105 = vmatpush1.msra.mxu0 0.0
        %1106 = vmatprep.subr.mxu0 0.0
        %1107 = vmatpush1.msra.mxu0 0.0
        %1108 = vmatprep.subr.mxu0 %v1080
        %1109 = vmatpush1.msra.mxu0 %v1079
        %1110 = vmatprep.subr.mxu0 %v1078
        %1111 = vmatpush1.msra.mxu0 %v1077
        %1112 = vmatprep.subr.mxu0 %v1076
        %1113 = vmatpush1.msra.mxu0 %v1075
        %1114 = vmatprep.subr.mxu0 %v1074
        %1115 = vmatpush1.msra.mxu0 %v1073
        %1116 = vmatprep.subr.mxu0 0.0
        %1117 = vmatpush2.msra.mxu0 0.0
        %1118 = vmatprep.subr.mxu0 0.0
        %1119 = vmatpush2.msra.mxu0 0.0
        %1120 = vmatprep.subr.mxu0 0.0
        %1121 = vmatpush2.msra.mxu0 0.0
        %1122 = vmatprep.subr.mxu0 0.0
        %1123 = vmatpush2.msra.mxu0 0.0
        %1124 = vmatprep.subr.mxu0 0.0
        %1125 = vmatpush2.msra.mxu0 0.0
        %1126 = vmatprep.subr.mxu0 0.0
        %1127 = vmatpush2.msra.mxu0 0.0
        %1128 = vmatprep.subr.mxu0 0.0
        %1129 = vmatpush2.msra.mxu0 0.0
        %1130 = vmatprep.subr.mxu0 0.0
        %1131 = vmatpush2.msra.mxu0 0.0
        %1132 = vmatprep.subr.mxu0 0.0
        %1133 = vmatpush2.msra.mxu0 0.0
        %1134 = vmatprep.subr.mxu0 0.0
        %1135 = vmatpush2.msra.mxu0 0.0
        %1136 = vmatprep.subr.mxu0 0.0
        %1137 = vmatpush2.msra.mxu0 0.0
        %1138 = vmatprep.subr.mxu0 0.0
        %1139 = vmatpush2.msra.mxu0 0.0
        %1140 = vmatprep.subr.mxu0 0.0
        %1141 = vmatpush2.msra.mxu0 0.0
        %1142 = vmatprep.subr.mxu0 0.0
        %1143 = vmatpush2.msra.mxu0 0.0
        %1144 = vmatprep.subr.mxu0 0.0
        %1145 = vmatpush2.msra.mxu0 0.0
        %1146 = vmatprep.subr.mxu0 0.0
        %1147 = vmatpush2.msra.mxu0 0.0
        %1148 = vmatprep.mubr.f32.mxu0 0.0
        %1149 = vmatmul.mubr.f32.gmra.mxu0 %v1082
        %v1150 = vpop.f32.mrf.mxu0
        %v1151 = vadd.f32 0.0, %v1150
        %v1152 = vpop.f32.mrf.mxu0
        %v1153 = vadd.f32 0.0, %v1152
        %1154 = vdwg.mxu0
        %v1155 = vadd.f32 %v967, %v1151
        %v1156 = vadd.f32 %v968, %v1153
        %v1157 = vld [vmem:[%s346 + $0x3] sm:$0x1]
        %v1158 = vld [vmem:[%s346 + $0xb] sm:$0x1]
        %v1159 = vld [vmem:[%s346 + $0x13] sm:$0x1]
        %v1160 = vld [vmem:[%s346 + $0x1b] sm:$0x1]
        %v1161 = vld [vmem:[%s346 + $0x23] sm:$0x1]
        %v1162 = vld [vmem:[%s346 + $0x2b] sm:$0x1]
        %v1163 = vld [vmem:[%s346 + $0x33] sm:$0x1]
        %v1164 = vld [vmem:[%s346 + $0x3b] sm:$0x1]
        %v1173 = vrot.slane %v1158, 7
        %v1174 = vsel %vm603, %v1173, %v1157
        %v1175 = vrot.slane %v1159, 6
        %v1176 = vsel %vm606, %v1175, %v1174
        %v1177 = vrot.slane %v1160, 5
        %v1178 = vsel %vm609, %v1177, %v1176
        %v1179 = vrot.slane %v1161, 4
        %v1180 = vsel %vm612, %v1179, %v1178
        %v1181 = vrot.slane %v1162, 3
        %v1182 = vsel %vm615, %v1181, %v1180
        %v1183 = vrot.slane %v1163, 2
        %v1184 = vsel %vm618, %v1183, %v1182
        %v1185 = vrot.slane %v1164, 1
        %v1186 = vsel %vm621, %v1185, %v1184
        %v1187 = vsel %vm623, %v1186, 0
        %1189 = vmatprep.subr.mxu0 0.0
        %1190 = vmatpush1.msra.mxu0 0.0
        %1191 = vmatprep.subr.mxu0 0.0
        %1192 = vmatpush1.msra.mxu0 0.0
        %1193 = vmatprep.subr.mxu0 0.0
        %1194 = vmatpush1.msra.mxu0 0.0
        %1195 = vmatprep.subr.mxu0 0.0
        %1196 = vmatpush1.msra.mxu0 0.0
        %1197 = vmatprep.subr.mxu0 0.0
        %1198 = vmatpush1.msra.mxu0 0.0
        %1199 = vmatprep.subr.mxu0 0.0
        %1200 = vmatpush1.msra.mxu0 0.0
        %1201 = vmatprep.subr.mxu0 0.0
        %1202 = vmatpush1.msra.mxu0 0.0
        %1203 = vmatprep.subr.mxu0 0.0
        %1204 = vmatpush1.msra.mxu0 0.0
        %1205 = vmatprep.subr.mxu0 0.0
        %1206 = vmatpush1.msra.mxu0 0.0
        %1207 = vmatprep.subr.mxu0 0.0
        %1208 = vmatpush1.msra.mxu0 0.0
        %1209 = vmatprep.subr.mxu0 0.0
        %1210 = vmatpush1.msra.mxu0 0.0
        %1211 = vmatprep.subr.mxu0 0.0
        %1212 = vmatpush1.msra.mxu0 0.0
        %1213 = vmatprep.subr.mxu0 0.0
        %1214 = vmatpush1.msra.mxu0 0.0
        %1215 = vmatprep.subr.mxu0 0.0
        %1216 = vmatpush1.msra.mxu0 0.0
        %1217 = vmatprep.subr.mxu0 0.0
        %1218 = vmatpush1.msra.mxu0 %v578
        %1219 = vmatprep.subr.mxu0 0.0
        %1220 = vmatpush1.msra.mxu0 %v577
        %1221 = vmatprep.subr.mxu0 0.0
        %1222 = vmatpush2.msra.mxu0 0.0
        %1223 = vmatprep.subr.mxu0 0.0
        %1224 = vmatpush2.msra.mxu0 0.0
        %1225 = vmatprep.subr.mxu0 0.0
        %1226 = vmatpush2.msra.mxu0 0.0
        %1227 = vmatprep.subr.mxu0 0.0
        %1228 = vmatpush2.msra.mxu0 0.0
        %1229 = vmatprep.subr.mxu0 0.0
        %1230 = vmatpush2.msra.mxu0 0.0
        %1231 = vmatprep.subr.mxu0 0.0
        %1232 = vmatpush2.msra.mxu0 0.0
        %1233 = vmatprep.subr.mxu0 0.0
        %1234 = vmatpush2.msra.mxu0 0.0
        %1235 = vmatprep.subr.mxu0 0.0
        %1236 = vmatpush2.msra.mxu0 0.0
        %1237 = vmatprep.subr.mxu0 0.0
        %1238 = vmatpush2.msra.mxu0 0.0
        %1239 = vmatprep.subr.mxu0 0.0
        %1240 = vmatpush2.msra.mxu0 0.0
        %1241 = vmatprep.subr.mxu0 0.0
        %1242 = vmatpush2.msra.mxu0 0.0
        %1243 = vmatprep.subr.mxu0 0.0
        %1244 = vmatpush2.msra.mxu0 0.0
        %1245 = vmatprep.subr.mxu0 0.0
        %1246 = vmatpush2.msra.mxu0 0.0
        %1247 = vmatprep.subr.mxu0 0.0
        %1248 = vmatpush2.msra.mxu0 0.0
        %1249 = vmatprep.subr.mxu0 0.0
        %1250 = vmatpush2.msra.mxu0 0.0
        %1251 = vmatprep.subr.mxu0 0.0
        %1252 = vmatpush2.msra.mxu0 0.0
        %1253 = vmatprep.mubr.f32.mxu0 0.0
        %1254 = vmatmul.mubr.f32.gmra.mxu0 %v1187
        %v1255 = vpop.f32.mrf.mxu0
        %v1256 = vadd.f32 %v592, %v1255
        %v1257 = vpop.f32.mrf.mxu0
        %1258 = vdwg.mxu0
        %v1259 = vmax.f32 %v1256, 0.0
        %s1260 = scalar_lea.vmem [#allocation5], 192
        %v1261 = vld [vmem:[%s1260] sm:$0xff]
        %v1262 = vld [vmem:[%s1260 + $0x8] sm:$0xff]
        %v1263 = vld [vmem:[%s1260 + $0x10] sm:$0xff]
        %v1264 = vld [vmem:[%s1260 + $0x18] sm:$0xff]
        %v1265 = vld [vmem:[%s1260 + $0x20] sm:$0xff]
        %v1266 = vld [vmem:[%s1260 + $0x28] sm:$0xff]
        %v1267 = vld [vmem:[%s1260 + $0x30] sm:$0xff]
        %v1268 = vld [vmem:[%s1260 + $0x38] sm:$0xff]
        %v1270 = vsel %vm502, %v1259, 0
        %1272 = vmatprep.subr.mxu0 0.0
        %1273 = vmatpush1.msra.mxu0 0.0
        %1274 = vmatprep.subr.mxu0 0.0
        %1275 = vmatpush1.msra.mxu0 0.0
        %1276 = vmatprep.subr.mxu0 0.0
        %1277 = vmatpush1.msra.mxu0 0.0
        %1278 = vmatprep.subr.mxu0 0.0
        %1279 = vmatpush1.msra.mxu0 0.0
        %1280 = vmatprep.subr.mxu0 0.0
        %1281 = vmatpush1.msra.mxu0 0.0
        %1282 = vmatprep.subr.mxu0 0.0
        %1283 = vmatpush1.msra.mxu0 0.0
        %1284 = vmatprep.subr.mxu0 0.0
        %1285 = vmatpush1.msra.mxu0 0.0
        %1286 = vmatprep.subr.mxu0 0.0
        %1287 = vmatpush1.msra.mxu0 0.0
        %1288 = vmatprep.subr.mxu0 0.0
        %1289 = vmatpush1.msra.mxu0 0.0
        %1290 = vmatprep.subr.mxu0 0.0
        %1291 = vmatpush1.msra.mxu0 0.0
        %1292 = vmatprep.subr.mxu0 0.0
        %1293 = vmatpush1.msra.mxu0 0.0
        %1294 = vmatprep.subr.mxu0 0.0
        %1295 = vmatpush1.msra.mxu0 0.0
        %1296 = vmatprep.subr.mxu0 %v1268
        %1297 = vmatpush1.msra.mxu0 %v1267
        %1298 = vmatprep.subr.mxu0 %v1266
        %1299 = vmatpush1.msra.mxu0 %v1265
        %1300 = vmatprep.subr.mxu0 %v1264
        %1301 = vmatpush1.msra.mxu0 %v1263
        %1302 = vmatprep.subr.mxu0 %v1262
        %1303 = vmatpush1.msra.mxu0 %v1261
        %1304 = vmatprep.subr.mxu0 0.0
        %1305 = vmatpush2.msra.mxu0 0.0
        %1306 = vmatprep.subr.mxu0 0.0
        %1307 = vmatpush2.msra.mxu0 0.0
        %1308 = vmatprep.subr.mxu0 0.0
        %1309 = vmatpush2.msra.mxu0 0.0
        %1310 = vmatprep.subr.mxu0 0.0
        %1311 = vmatpush2.msra.mxu0 0.0
        %1312 = vmatprep.subr.mxu0 0.0
        %1313 = vmatpush2.msra.mxu0 0.0
        %1314 = vmatprep.subr.mxu0 0.0
        %1315 = vmatpush2.msra.mxu0 0.0
        %1316 = vmatprep.subr.mxu0 0.0
        %1317 = vmatpush2.msra.mxu0 0.0
        %1318 = vmatprep.subr.mxu0 0.0
        %1319 = vmatpush2.msra.mxu0 0.0
        %1320 = vmatprep.subr.mxu0 0.0
        %1321 = vmatpush2.msra.mxu0 0.0
        %1322 = vmatprep.subr.mxu0 0.0
        %1323 = vmatpush2.msra.mxu0 0.0
        %1324 = vmatprep.subr.mxu0 0.0
        %1325 = vmatpush2.msra.mxu0 0.0
        %1326 = vmatprep.subr.mxu0 0.0
        %1327 = vmatpush2.msra.mxu0 0.0
        %1328 = vmatprep.subr.mxu0 0.0
        %1329 = vmatpush2.msra.mxu0 0.0
        %1330 = vmatprep.subr.mxu0 0.0
        %1331 = vmatpush2.msra.mxu0 0.0
        %1332 = vmatprep.subr.mxu0 0.0
        %1333 = vmatpush2.msra.mxu0 0.0
        %1334 = vmatprep.subr.mxu0 0.0
        %1335 = vmatpush2.msra.mxu0 0.0
        %1336 = vmatprep.mubr.f32.mxu0 0.0
        %1337 = vmatmul.mubr.f32.gmra.mxu0 %v1270
        %v1338 = vpop.f32.mrf.mxu0
        %v1339 = vadd.f32 0.0, %v1338
        %v1340 = vpop.f32.mrf.mxu0
        %v1341 = vadd.f32 0.0, %v1340
        %1342 = vdwg.mxu0
        %v1343 = vadd.f32 %v1155, %v1339
        %v1344 = vadd.f32 %v1156, %v1341
        %v1345 = vld [vmem:[%s346 + $0x4] sm:$0x1]
        %v1346 = vld [vmem:[%s346 + $0xc] sm:$0x1]
        %v1347 = vld [vmem:[%s346 + $0x14] sm:$0x1]
        %v1348 = vld [vmem:[%s346 + $0x1c] sm:$0x1]
        %v1349 = vld [vmem:[%s346 + $0x24] sm:$0x1]
        %v1350 = vld [vmem:[%s346 + $0x2c] sm:$0x1]
        %v1351 = vld [vmem:[%s346 + $0x34] sm:$0x1]
        %v1352 = vld [vmem:[%s346 + $0x3c] sm:$0x1]
        %v1361 = vrot.slane %v1346, 7
        %v1362 = vsel %vm603, %v1361, %v1345
        %v1363 = vrot.slane %v1347, 6
        %v1364 = vsel %vm606, %v1363, %v1362
        %v1365 = vrot.slane %v1348, 5
        %v1366 = vsel %vm609, %v1365, %v1364
        %v1367 = vrot.slane %v1349, 4
        %v1368 = vsel %vm612, %v1367, %v1366
        %v1369 = vrot.slane %v1350, 3
        %v1370 = vsel %vm615, %v1369, %v1368
        %v1371 = vrot.slane %v1351, 2
        %v1372 = vsel %vm618, %v1371, %v1370
        %v1373 = vrot.slane %v1352, 1
        %v1374 = vsel %vm621, %v1373, %v1372
        %v1375 = vsel %vm623, %v1374, 0
        %1377 = vmatprep.subr.mxu0 0.0
        %1378 = vmatpush1.msra.mxu0 0.0
        %1379 = vmatprep.subr.mxu0 0.0
        %1380 = vmatpush1.msra.mxu0 0.0
        %1381 = vmatprep.subr.mxu0 0.0
        %1382 = vmatpush1.msra.mxu0 0.0
        %1383 = vmatprep.subr.mxu0 0.0
        %1384 = vmatpush1.msra.mxu0 0.0
        %1385 = vmatprep.subr.mxu0 0.0
        %1386 = vmatpush1.msra.mxu0 0.0
        %1387 = vmatprep.subr.mxu0 0.0
        %1388 = vmatpush1.msra.mxu0 0.0
        %1389 = vmatprep.subr.mxu0 0.0
        %1390 = vmatpush1.msra.mxu0 0.0
        %1391 = vmatprep.subr.mxu0 0.0
        %1392 = vmatpush1.msra.mxu0 0.0
        %1393 = vmatprep.subr.mxu0 0.0
        %1394 = vmatpush1.msra.mxu0 0.0
        %1395 = vmatprep.subr.mxu0 0.0
        %1396 = vmatpush1.msra.mxu0 0.0
        %1397 = vmatprep.subr.mxu0 0.0
        %1398 = vmatpush1.msra.mxu0 0.0
        %1399 = vmatprep.subr.mxu0 0.0
        %1400 = vmatpush1.msra.mxu0 0.0
        %1401 = vmatprep.subr.mxu0 0.0
        %1402 = vmatpush1.msra.mxu0 0.0
        %1403 = vmatprep.subr.mxu0 0.0
        %1404 = vmatpush1.msra.mxu0 0.0
        %1405 = vmatprep.subr.mxu0 0.0
        %1406 = vmatpush1.msra.mxu0 %v578
        %1407 = vmatprep.subr.mxu0 0.0
        %1408 = vmatpush1.msra.mxu0 %v577
        %1409 = vmatprep.subr.mxu0 0.0
        %1410 = vmatpush2.msra.mxu0 0.0
        %1411 = vmatprep.subr.mxu0 0.0
        %1412 = vmatpush2.msra.mxu0 0.0
        %1413 = vmatprep.subr.mxu0 0.0
        %1414 = vmatpush2.msra.mxu0 0.0
        %1415 = vmatprep.subr.mxu0 0.0
        %1416 = vmatpush2.msra.mxu0 0.0
        %1417 = vmatprep.subr.mxu0 0.0
        %1418 = vmatpush2.msra.mxu0 0.0
        %1419 = vmatprep.subr.mxu0 0.0
        %1420 = vmatpush2.msra.mxu0 0.0
        %1421 = vmatprep.subr.mxu0 0.0
        %1422 = vmatpush2.msra.mxu0 0.0
        %1423 = vmatprep.subr.mxu0 0.0
        %1424 = vmatpush2.msra.mxu0 0.0
        %1425 = vmatprep.subr.mxu0 0.0
        %1426 = vmatpush2.msra.mxu0 0.0
        %1427 = vmatprep.subr.mxu0 0.0
        %1428 = vmatpush2.msra.mxu0 0.0
        %1429 = vmatprep.subr.mxu0 0.0
        %1430 = vmatpush2.msra.mxu0 0.0
        %1431 = vmatprep.subr.mxu0 0.0
        %1432 = vmatpush2.msra.mxu0 0.0
        %1433 = vmatprep.subr.mxu0 0.0
        %1434 = vmatpush2.msra.mxu0 0.0
        %1435 = vmatprep.subr.mxu0 0.0
        %1436 = vmatpush2.msra.mxu0 0.0
        %1437 = vmatprep.subr.mxu0 0.0
        %1438 = vmatpush2.msra.mxu0 0.0
        %1439 = vmatprep.subr.mxu0 0.0
        %1440 = vmatpush2.msra.mxu0 0.0
        %1441 = vmatprep.mubr.f32.mxu0 0.0
        %1442 = vmatmul.mubr.f32.gmra.mxu0 %v1375
        %v1443 = vpop.f32.mrf.mxu0
        %v1444 = vadd.f32 %v592, %v1443
        %v1445 = vpop.f32.mrf.mxu0
        %1446 = vdwg.mxu0
        %v1447 = vmax.f32 %v1444, 0.0
        %s1448 = scalar_lea.vmem [#allocation5], 256
        %v1449 = vld [vmem:[%s1448] sm:$0xff]
        %v1450 = vld [vmem:[%s1448 + $0x8] sm:$0xff]
        %v1451 = vld [vmem:[%s1448 + $0x10] sm:$0xff]
        %v1452 = vld [vmem:[%s1448 + $0x18] sm:$0xff]
        %v1453 = vld [vmem:[%s1448 + $0x20] sm:$0xff]
        %v1454 = vld [vmem:[%s1448 + $0x28] sm:$0xff]
        %v1455 = vld [vmem:[%s1448 + $0x30] sm:$0xff]
        %v1456 = vld [vmem:[%s1448 + $0x38] sm:$0xff]
        %v1458 = vsel %vm502, %v1447, 0
        %1460 = vmatprep.subr.mxu0 0.0
        %1461 = vmatpush1.msra.mxu0 0.0
        %1462 = vmatprep.subr.mxu0 0.0
        %1463 = vmatpush1.msra.mxu0 0.0
        %1464 = vmatprep.subr.mxu0 0.0
        %1465 = vmatpush1.msra.mxu0 0.0
        %1466 = vmatprep.subr.mxu0 0.0
        %1467 = vmatpush1.msra.mxu0 0.0
        %1468 = vmatprep.subr.mxu0 0.0
        %1469 = vmatpush1.msra.mxu0 0.0
        %1470 = vmatprep.subr.mxu0 0.0
        %1471 = vmatpush1.msra.mxu0 0.0
        %1472 = vmatprep.subr.mxu0 0.0
        %1473 = vmatpush1.msra.mxu0 0.0
        %1474 = vmatprep.subr.mxu0 0.0
        %1475 = vmatpush1.msra.mxu0 0.0
        %1476 = vmatprep.subr.mxu0 0.0
        %1477 = vmatpush1.msra.mxu0 0.0
        %1478 = vmatprep.subr.mxu0 0.0
        %1479 = vmatpush1.msra.mxu0 0.0
        %1480 = vmatprep.subr.mxu0 0.0
        %1481 = vmatpush1.msra.mxu0 0.0
        %1482 = vmatprep.subr.mxu0 0.0
        %1483 = vmatpush1.msra.mxu0 0.0
        %1484 = vmatprep.subr.mxu0 %v1456
        %1485 = vmatpush1.msra.mxu0 %v1455
        %1486 = vmatprep.subr.mxu0 %v1454
        %1487 = vmatpush1.msra.mxu0 %v1453
        %1488 = vmatprep.subr.mxu0 %v1452
        %1489 = vmatpush1.msra.mxu0 %v1451
        %1490 = vmatprep.subr.mxu0 %v1450
        %1491 = vmatpush1.msra.mxu0 %v1449
        %1492 = vmatprep.subr.mxu0 0.0
        %1493 = vmatpush2.msra.mxu0 0.0
        %1494 = vmatprep.subr.mxu0 0.0
        %1495 = vmatpush2.msra.mxu0 0.0
        %1496 = vmatprep.subr.mxu0 0.0
        %1497 = vmatpush2.msra.mxu0 0.0
        %1498 = vmatprep.subr.mxu0 0.0
        %1499 = vmatpush2.msra.mxu0 0.0
        %1500 = vmatprep.subr.mxu0 0.0
        %1501 = vmatpush2.msra.mxu0 0.0
        %1502 = vmatprep.subr.mxu0 0.0
        %1503 = vmatpush2.msra.mxu0 0.0
        %1504 = vmatprep.subr.mxu0 0.0
        %1505 = vmatpush2.msra.mxu0 0.0
        %1506 = vmatprep.subr.mxu0 0.0
        %1507 = vmatpush2.msra.mxu0 0.0
        %1508 = vmatprep.subr.mxu0 0.0
        %1509 = vmatpush2.msra.mxu0 0.0
        %1510 = vmatprep.subr.mxu0 0.0
        %1511 = vmatpush2.msra.mxu0 0.0
        %1512 = vmatprep.subr.mxu0 0.0
        %1513 = vmatpush2.msra.mxu0 0.0
        %1514 = vmatprep.subr.mxu0 0.0
        %1515 = vmatpush2.msra.mxu0 0.0
        %1516 = vmatprep.subr.mxu0 0.0
        %1517 = vmatpush2.msra.mxu0 0.0
        %1518 = vmatprep.subr.mxu0 0.0
        %1519 = vmatpush2.msra.mxu0 0.0
        %1520 = vmatprep.subr.mxu0 0.0
        %1521 = vmatpush2.msra.mxu0 0.0
        %1522 = vmatprep.subr.mxu0 0.0
        %1523 = vmatpush2.msra.mxu0 0.0
        %1524 = vmatprep.mubr.f32.mxu0 0.0
        %1525 = vmatmul.mubr.f32.gmra.mxu0 %v1458
        %v1526 = vpop.f32.mrf.mxu0
        %v1527 = vadd.f32 0.0, %v1526
        %v1528 = vpop.f32.mrf.mxu0
        %v1529 = vadd.f32 0.0, %v1528
        %1530 = vdwg.mxu0
        %v1531 = vadd.f32 %v1343, %v1527
        %v1532 = vadd.f32 %v1344, %v1529
        %v1533 = vld [vmem:[%s346 + $0x5] sm:$0x1]
        %v1534 = vld [vmem:[%s346 + $0xd] sm:$0x1]
        %v1535 = vld [vmem:[%s346 + $0x15] sm:$0x1]
        %v1536 = vld [vmem:[%s346 + $0x1d] sm:$0x1]
        %v1537 = vld [vmem:[%s346 + $0x25] sm:$0x1]
        %v1538 = vld [vmem:[%s346 + $0x2d] sm:$0x1]
        %v1539 = vld [vmem:[%s346 + $0x35] sm:$0x1]
        %v1540 = vld [vmem:[%s346 + $0x3d] sm:$0x1]
        %v1549 = vrot.slane %v1534, 7
        %v1550 = vsel %vm603, %v1549, %v1533
        %v1551 = vrot.slane %v1535, 6
        %v1552 = vsel %vm606, %v1551, %v1550
        %v1553 = vrot.slane %v1536, 5
        %v1554 = vsel %vm609, %v1553, %v1552
        %v1555 = vrot.slane %v1537, 4
        %v1556 = vsel %vm612, %v1555, %v1554
        %v1557 = vrot.slane %v1538, 3
        %v1558 = vsel %vm615, %v1557, %v1556
        %v1559 = vrot.slane %v1539, 2
        %v1560 = vsel %vm618, %v1559, %v1558
        %v1561 = vrot.slane %v1540, 1
        %v1562 = vsel %vm621, %v1561, %v1560
        %v1563 = vsel %vm623, %v1562, 0
        %1565 = vmatprep.subr.mxu0 0.0
        %1566 = vmatpush1.msra.mxu0 0.0
        %1567 = vmatprep.subr.mxu0 0.0
        %1568 = vmatpush1.msra.mxu0 0.0
        %1569 = vmatprep.subr.mxu0 0.0
        %1570 = vmatpush1.msra.mxu0 0.0
        %1571 = vmatprep.subr.mxu0 0.0
        %1572 = vmatpush1.msra.mxu0 0.0
        %1573 = vmatprep.subr.mxu0 0.0
        %1574 = vmatpush1.msra.mxu0 0.0
        %1575 = vmatprep.subr.mxu0 0.0
        %1576 = vmatpush1.msra.mxu0 0.0
        %1577 = vmatprep.subr.mxu0 0.0
        %1578 = vmatpush1.msra.mxu0 0.0
        %1579 = vmatprep.subr.mxu0 0.0
        %1580 = vmatpush1.msra.mxu0 0.0
        %1581 = vmatprep.subr.mxu0 0.0
        %1582 = vmatpush1.msra.mxu0 0.0
        %1583 = vmatprep.subr.mxu0 0.0
        %1584 = vmatpush1.msra.mxu0 0.0
        %1585 = vmatprep.subr.mxu0 0.0
        %1586 = vmatpush1.msra.mxu0 0.0
        %1587 = vmatprep.subr.mxu0 0.0
        %1588 = vmatpush1.msra.mxu0 0.0
        %1589 = vmatprep.subr.mxu0 0.0
        %1590 = vmatpush1.msra.mxu0 0.0
        %1591 = vmatprep.subr.mxu0 0.0
        %1592 = vmatpush1.msra.mxu0 0.0
        %1593 = vmatprep.subr.mxu0 0.0
        %1594 = vmatpush1.msra.mxu0 %v578
        %1595 = vmatprep.subr.mxu0 0.0
        %1596 = vmatpush1.msra.mxu0 %v577
        %1597 = vmatprep.subr.mxu0 0.0
        %1598 = vmatpush2.msra.mxu0 0.0
        %1599 = vmatprep.subr.mxu0 0.0
        %1600 = vmatpush2.msra.mxu0 0.0
        %1601 = vmatprep.subr.mxu0 0.0
        %1602 = vmatpush2.msra.mxu0 0.0
        %1603 = vmatprep.subr.mxu0 0.0
        %1604 = vmatpush2.msra.mxu0 0.0
        %1605 = vmatprep.subr.mxu0 0.0
        %1606 = vmatpush2.msra.mxu0 0.0
        %1607 = vmatprep.subr.mxu0 0.0
        %1608 = vmatpush2.msra.mxu0 0.0
        %1609 = vmatprep.subr.mxu0 0.0
        %1610 = vmatpush2.msra.mxu0 0.0
        %1611 = vmatprep.subr.mxu0 0.0
        %1612 = vmatpush2.msra.mxu0 0.0
        %1613 = vmatprep.subr.mxu0 0.0
        %1614 = vmatpush2.msra.mxu0 0.0
        %1615 = vmatprep.subr.mxu0 0.0
        %1616 = vmatpush2.msra.mxu0 0.0
        %1617 = vmatprep.subr.mxu0 0.0
        %1618 = vmatpush2.msra.mxu0 0.0
        %1619 = vmatprep.subr.mxu0 0.0
        %1620 = vmatpush2.msra.mxu0 0.0
        %1621 = vmatprep.subr.mxu0 0.0
        %1622 = vmatpush2.msra.mxu0 0.0
        %1623 = vmatprep.subr.mxu0 0.0
        %1624 = vmatpush2.msra.mxu0 0.0
        %1625 = vmatprep.subr.mxu0 0.0
        %1626 = vmatpush2.msra.mxu0 0.0
        %1627 = vmatprep.subr.mxu0 0.0
        %1628 = vmatpush2.msra.mxu0 0.0
        %1629 = vmatprep.mubr.f32.mxu0 0.0
        %1630 = vmatmul.mubr.f32.gmra.mxu0 %v1563
        %v1631 = vpop.f32.mrf.mxu0
        %v1632 = vadd.f32 %v592, %v1631
        %v1633 = vpop.f32.mrf.mxu0
        %1634 = vdwg.mxu0
        %v1635 = vmax.f32 %v1632, 0.0
        %s1636 = scalar_lea.vmem [#allocation5], 320
        %v1637 = vld [vmem:[%s1636] sm:$0xff]
        %v1638 = vld [vmem:[%s1636 + $0x8] sm:$0xff]
        %v1639 = vld [vmem:[%s1636 + $0x10] sm:$0xff]
        %v1640 = vld [vmem:[%s1636 + $0x18] sm:$0xff]
        %v1641 = vld [vmem:[%s1636 + $0x20] sm:$0xff]
        %v1642 = vld [vmem:[%s1636 + $0x28] sm:$0xff]
        %v1643 = vld [vmem:[%s1636 + $0x30] sm:$0xff]
        %v1644 = vld [vmem:[%s1636 + $0x38] sm:$0xff]
        %v1646 = vsel %vm502, %v1635, 0
        %1648 = vmatprep.subr.mxu0 0.0
        %1649 = vmatpush1.msra.mxu0 0.0
        %1650 = vmatprep.subr.mxu0 0.0
        %1651 = vmatpush1.msra.mxu0 0.0
        %1652 = vmatprep.subr.mxu0 0.0
        %1653 = vmatpush1.msra.mxu0 0.0
        %1654 = vmatprep.subr.mxu0 0.0
        %1655 = vmatpush1.msra.mxu0 0.0
        %1656 = vmatprep.subr.mxu0 0.0
        %1657 = vmatpush1.msra.mxu0 0.0
        %1658 = vmatprep.subr.mxu0 0.0
        %1659 = vmatpush1.msra.mxu0 0.0
        %1660 = vmatprep.subr.mxu0 0.0
        %1661 = vmatpush1.msra.mxu0 0.0
        %1662 = vmatprep.subr.mxu0 0.0
        %1663 = vmatpush1.msra.mxu0 0.0
        %1664 = vmatprep.subr.mxu0 0.0
        %1665 = vmatpush1.msra.mxu0 0.0
        %1666 = vmatprep.subr.mxu0 0.0
        %1667 = vmatpush1.msra.mxu0 0.0
        %1668 = vmatprep.subr.mxu0 0.0
        %1669 = vmatpush1.msra.mxu0 0.0
        %1670 = vmatprep.subr.mxu0 0.0
        %1671 = vmatpush1.msra.mxu0 0.0
        %1672 = vmatprep.subr.mxu0 %v1644
        %1673 = vmatpush1.msra.mxu0 %v1643
        %1674 = vmatprep.subr.mxu0 %v1642
        %1675 = vmatpush1.msra.mxu0 %v1641
        %1676 = vmatprep.subr.mxu0 %v1640
        %1677 = vmatpush1.msra.mxu0 %v1639
        %1678 = vmatprep.subr.mxu0 %v1638
        %1679 = vmatpush1.msra.mxu0 %v1637
        %1680 = vmatprep.subr.mxu0 0.0
        %1681 = vmatpush2.msra.mxu0 0.0
        %1682 = vmatprep.subr.mxu0 0.0
        %1683 = vmatpush2.msra.mxu0 0.0
        %1684 = vmatprep.subr.mxu0 0.0
        %1685 = vmatpush2.msra.mxu0 0.0
        %1686 = vmatprep.subr.mxu0 0.0
        %1687 = vmatpush2.msra.mxu0 0.0
        %1688 = vmatprep.subr.mxu0 0.0
        %1689 = vmatpush2.msra.mxu0 0.0
        %1690 = vmatprep.subr.mxu0 0.0
        %1691 = vmatpush2.msra.mxu0 0.0
        %1692 = vmatprep.subr.mxu0 0.0
        %1693 = vmatpush2.msra.mxu0 0.0
        %1694 = vmatprep.subr.mxu0 0.0
        %1695 = vmatpush2.msra.mxu0 0.0
        %1696 = vmatprep.subr.mxu0 0.0
        %1697 = vmatpush2.msra.mxu0 0.0
        %1698 = vmatprep.subr.mxu0 0.0
        %1699 = vmatpush2.msra.mxu0 0.0
        %1700 = vmatprep.subr.mxu0 0.0
        %1701 = vmatpush2.msra.mxu0 0.0
        %1702 = vmatprep.subr.mxu0 0.0
        %1703 = vmatpush2.msra.mxu0 0.0
        %1704 = vmatprep.subr.mxu0 0.0
        %1705 = vmatpush2.msra.mxu0 0.0
        %1706 = vmatprep.subr.mxu0 0.0
        %1707 = vmatpush2.msra.mxu0 0.0
        %1708 = vmatprep.subr.mxu0 0.0
        %1709 = vmatpush2.msra.mxu0 0.0
        %1710 = vmatprep.subr.mxu0 0.0
        %1711 = vmatpush2.msra.mxu0 0.0
        %1712 = vmatprep.mubr.f32.mxu0 0.0
        %1713 = vmatmul.mubr.f32.gmra.mxu0 %v1646
        %v1714 = vpop.f32.mrf.mxu0
        %v1715 = vadd.f32 0.0, %v1714
        %v1716 = vpop.f32.mrf.mxu0
        %v1717 = vadd.f32 0.0, %v1716
        %1718 = vdwg.mxu0
        %v1719 = vadd.f32 %v1531, %v1715
        %v1720 = vadd.f32 %v1532, %v1717
        %v1721 = vld [vmem:[%s346 + $0x6] sm:$0x1]
        %v1722 = vld [vmem:[%s346 + $0xe] sm:$0x1]
        %v1723 = vld [vmem:[%s346 + $0x16] sm:$0x1]
        %v1724 = vld [vmem:[%s346 + $0x1e] sm:$0x1]
        %v1725 = vld [vmem:[%s346 + $0x26] sm:$0x1]
        %v1726 = vld [vmem:[%s346 + $0x2e] sm:$0x1]
        %v1727 = vld [vmem:[%s346 + $0x36] sm:$0x1]
        %v1728 = vld [vmem:[%s346 + $0x3e] sm:$0x1]
        %v1737 = vrot.slane %v1722, 7
        %v1738 = vsel %vm603, %v1737, %v1721
        %v1739 = vrot.slane %v1723, 6
        %v1740 = vsel %vm606, %v1739, %v1738
        %v1741 = vrot.slane %v1724, 5
        %v1742 = vsel %vm609, %v1741, %v1740
        %v1743 = vrot.slane %v1725, 4
        %v1744 = vsel %vm612, %v1743, %v1742
        %v1745 = vrot.slane %v1726, 3
        %v1746 = vsel %vm615, %v1745, %v1744
        %v1747 = vrot.slane %v1727, 2
        %v1748 = vsel %vm618, %v1747, %v1746
        %v1749 = vrot.slane %v1728, 1
        %v1750 = vsel %vm621, %v1749, %v1748
        %v1751 = vsel %vm623, %v1750, 0
        %1753 = vmatprep.subr.mxu0 0.0
        %1754 = vmatpush1.msra.mxu0 0.0
        %1755 = vmatprep.subr.mxu0 0.0
        %1756 = vmatpush1.msra.mxu0 0.0
        %1757 = vmatprep.subr.mxu0 0.0
        %1758 = vmatpush1.msra.mxu0 0.0
        %1759 = vmatprep.subr.mxu0 0.0
        %1760 = vmatpush1.msra.mxu0 0.0
        %1761 = vmatprep.subr.mxu0 0.0
        %1762 = vmatpush1.msra.mxu0 0.0
        %1763 = vmatprep.subr.mxu0 0.0
        %1764 = vmatpush1.msra.mxu0 0.0
        %1765 = vmatprep.subr.mxu0 0.0
        %1766 = vmatpush1.msra.mxu0 0.0
        %1767 = vmatprep.subr.mxu0 0.0
        %1768 = vmatpush1.msra.mxu0 0.0
        %1769 = vmatprep.subr.mxu0 0.0
        %1770 = vmatpush1.msra.mxu0 0.0
        %1771 = vmatprep.subr.mxu0 0.0
        %1772 = vmatpush1.msra.mxu0 0.0
        %1773 = vmatprep.subr.mxu0 0.0
        %1774 = vmatpush1.msra.mxu0 0.0
        %1775 = vmatprep.subr.mxu0 0.0
        %1776 = vmatpush1.msra.mxu0 0.0
        %1777 = vmatprep.subr.mxu0 0.0
        %1778 = vmatpush1.msra.mxu0 0.0
        %1779 = vmatprep.subr.mxu0 0.0
        %1780 = vmatpush1.msra.mxu0 0.0
        %1781 = vmatprep.subr.mxu0 0.0
        %1782 = vmatpush1.msra.mxu0 %v578
        %1783 = vmatprep.subr.mxu0 0.0
        %1784 = vmatpush1.msra.mxu0 %v577
        %1785 = vmatprep.subr.mxu0 0.0
        %1786 = vmatpush2.msra.mxu0 0.0
        %1787 = vmatprep.subr.mxu0 0.0
        %1788 = vmatpush2.msra.mxu0 0.0
        %1789 = vmatprep.subr.mxu0 0.0
        %1790 = vmatpush2.msra.mxu0 0.0
        %1791 = vmatprep.subr.mxu0 0.0
        %1792 = vmatpush2.msra.mxu0 0.0
        %1793 = vmatprep.subr.mxu0 0.0
        %1794 = vmatpush2.msra.mxu0 0.0
        %1795 = vmatprep.subr.mxu0 0.0
        %1796 = vmatpush2.msra.mxu0 0.0
        %1797 = vmatprep.subr.mxu0 0.0
        %1798 = vmatpush2.msra.mxu0 0.0
        %1799 = vmatprep.subr.mxu0 0.0
        %1800 = vmatpush2.msra.mxu0 0.0
        %1801 = vmatprep.subr.mxu0 0.0
        %1802 = vmatpush2.msra.mxu0 0.0
        %1803 = vmatprep.subr.mxu0 0.0
        %1804 = vmatpush2.msra.mxu0 0.0
        %1805 = vmatprep.subr.mxu0 0.0
        %1806 = vmatpush2.msra.mxu0 0.0
        %1807 = vmatprep.subr.mxu0 0.0
        %1808 = vmatpush2.msra.mxu0 0.0
        %1809 = vmatprep.subr.mxu0 0.0
        %1810 = vmatpush2.msra.mxu0 0.0
        %1811 = vmatprep.subr.mxu0 0.0
        %1812 = vmatpush2.msra.mxu0 0.0
        %1813 = vmatprep.subr.mxu0 0.0
        %1814 = vmatpush2.msra.mxu0 0.0
        %1815 = vmatprep.subr.mxu0 0.0
        %1816 = vmatpush2.msra.mxu0 0.0
        %1817 = vmatprep.mubr.f32.mxu0 0.0
        %1818 = vmatmul.mubr.f32.gmra.mxu0 %v1751
        %v1819 = vpop.f32.mrf.mxu0
        %v1820 = vadd.f32 %v592, %v1819
        %v1821 = vpop.f32.mrf.mxu0
        %1822 = vdwg.mxu0
        %v1823 = vmax.f32 %v1820, 0.0
        %s1824 = scalar_lea.vmem [#allocation5], 384
        %v1825 = vld [vmem:[%s1824] sm:$0xff]
        %v1826 = vld [vmem:[%s1824 + $0x8] sm:$0xff]
        %v1827 = vld [vmem:[%s1824 + $0x10] sm:$0xff]
        %v1828 = vld [vmem:[%s1824 + $0x18] sm:$0xff]
        %v1829 = vld [vmem:[%s1824 + $0x20] sm:$0xff]
        %v1830 = vld [vmem:[%s1824 + $0x28] sm:$0xff]
        %v1831 = vld [vmem:[%s1824 + $0x30] sm:$0xff]
        %v1832 = vld [vmem:[%s1824 + $0x38] sm:$0xff]
        %v1834 = vsel %vm502, %v1823, 0
        %1836 = vmatprep.subr.mxu0 0.0
        %1837 = vmatpush1.msra.mxu0 0.0
        %1838 = vmatprep.subr.mxu0 0.0
        %1839 = vmatpush1.msra.mxu0 0.0
        %1840 = vmatprep.subr.mxu0 0.0
        %1841 = vmatpush1.msra.mxu0 0.0
        %1842 = vmatprep.subr.mxu0 0.0
        %1843 = vmatpush1.msra.mxu0 0.0
        %1844 = vmatprep.subr.mxu0 0.0
        %1845 = vmatpush1.msra.mxu0 0.0
        %1846 = vmatprep.subr.mxu0 0.0
        %1847 = vmatpush1.msra.mxu0 0.0
        %1848 = vmatprep.subr.mxu0 0.0
        %1849 = vmatpush1.msra.mxu0 0.0
        %1850 = vmatprep.subr.mxu0 0.0
        %1851 = vmatpush1.msra.mxu0 0.0
        %1852 = vmatprep.subr.mxu0 0.0
        %1853 = vmatpush1.msra.mxu0 0.0
        %1854 = vmatprep.subr.mxu0 0.0
        %1855 = vmatpush1.msra.mxu0 0.0
        %1856 = vmatprep.subr.mxu0 0.0
        %1857 = vmatpush1.msra.mxu0 0.0
        %1858 = vmatprep.subr.mxu0 0.0
        %1859 = vmatpush1.msra.mxu0 0.0
        %1860 = vmatprep.subr.mxu0 %v1832
        %1861 = vmatpush1.msra.mxu0 %v1831
        %1862 = vmatprep.subr.mxu0 %v1830
        %1863 = vmatpush1.msra.mxu0 %v1829
        %1864 = vmatprep.subr.mxu0 %v1828
        %1865 = vmatpush1.msra.mxu0 %v1827
        %1866 = vmatprep.subr.mxu0 %v1826
        %1867 = vmatpush1.msra.mxu0 %v1825
        %1868 = vmatprep.subr.mxu0 0.0
        %1869 = vmatpush2.msra.mxu0 0.0
        %1870 = vmatprep.subr.mxu0 0.0
        %1871 = vmatpush2.msra.mxu0 0.0
        %1872 = vmatprep.subr.mxu0 0.0
        %1873 = vmatpush2.msra.mxu0 0.0
        %1874 = vmatprep.subr.mxu0 0.0
        %1875 = vmatpush2.msra.mxu0 0.0
        %1876 = vmatprep.subr.mxu0 0.0
        %1877 = vmatpush2.msra.mxu0 0.0
        %1878 = vmatprep.subr.mxu0 0.0
        %1879 = vmatpush2.msra.mxu0 0.0
        %1880 = vmatprep.subr.mxu0 0.0
        %1881 = vmatpush2.msra.mxu0 0.0
        %1882 = vmatprep.subr.mxu0 0.0
        %1883 = vmatpush2.msra.mxu0 0.0
        %1884 = vmatprep.subr.mxu0 0.0
        %1885 = vmatpush2.msra.mxu0 0.0
        %1886 = vmatprep.subr.mxu0 0.0
        %1887 = vmatpush2.msra.mxu0 0.0
        %1888 = vmatprep.subr.mxu0 0.0
        %1889 = vmatpush2.msra.mxu0 0.0
        %1890 = vmatprep.subr.mxu0 0.0
        %1891 = vmatpush2.msra.mxu0 0.0
        %1892 = vmatprep.subr.mxu0 0.0
        %1893 = vmatpush2.msra.mxu0 0.0
        %1894 = vmatprep.subr.mxu0 0.0
        %1895 = vmatpush2.msra.mxu0 0.0
        %1896 = vmatprep.subr.mxu0 0.0
        %1897 = vmatpush2.msra.mxu0 0.0
        %1898 = vmatprep.subr.mxu0 0.0
        %1899 = vmatpush2.msra.mxu0 0.0
        %1900 = vmatprep.mubr.f32.mxu0 0.0
        %1901 = vmatmul.mubr.f32.gmra.mxu0 %v1834
        %v1902 = vpop.f32.mrf.mxu0
        %v1903 = vadd.f32 0.0, %v1902
        %v1904 = vpop.f32.mrf.mxu0
        %v1905 = vadd.f32 0.0, %v1904
        %1906 = vdwg.mxu0
        %v1907 = vadd.f32 %v1719, %v1903
        %v1908 = vadd.f32 %v1720, %v1905
        %v1909 = vld [vmem:[%s346 + $0x7] sm:$0x1]
        %v1910 = vld [vmem:[%s346 + $0xf] sm:$0x1]
        %v1911 = vld [vmem:[%s346 + $0x17] sm:$0x1]
        %v1912 = vld [vmem:[%s346 + $0x1f] sm:$0x1]
        %v1913 = vld [vmem:[%s346 + $0x27] sm:$0x1]
        %v1914 = vld [vmem:[%s346 + $0x2f] sm:$0x1]
        %v1915 = vld [vmem:[%s346 + $0x37] sm:$0x1]
        %v1916 = vld [vmem:[%s346 + $0x3f] sm:$0x1]
        %v1925 = vrot.slane %v1910, 7
        %v1926 = vsel %vm603, %v1925, %v1909
        %v1927 = vrot.slane %v1911, 6
        %v1928 = vsel %vm606, %v1927, %v1926
        %v1929 = vrot.slane %v1912, 5
        %v1930 = vsel %vm609, %v1929, %v1928
        %v1931 = vrot.slane %v1913, 4
        %v1932 = vsel %vm612, %v1931, %v1930
        %v1933 = vrot.slane %v1914, 3
        %v1934 = vsel %vm615, %v1933, %v1932
        %v1935 = vrot.slane %v1915, 2
        %v1936 = vsel %vm618, %v1935, %v1934
        %v1937 = vrot.slane %v1916, 1
        %v1938 = vsel %vm621, %v1937, %v1936
        %v1939 = vsel %vm623, %v1938, 0
        %1941 = vmatprep.subr.mxu0 0.0
        %1942 = vmatpush1.msra.mxu0 0.0
        %1943 = vmatprep.subr.mxu0 0.0
        %1944 = vmatpush1.msra.mxu0 0.0
        %1945 = vmatprep.subr.mxu0 0.0
        %1946 = vmatpush1.msra.mxu0 0.0
        %1947 = vmatprep.subr.mxu0 0.0
        %1948 = vmatpush1.msra.mxu0 0.0
        %1949 = vmatprep.subr.mxu0 0.0
        %1950 = vmatpush1.msra.mxu0 0.0
        %1951 = vmatprep.subr.mxu0 0.0
        %1952 = vmatpush1.msra.mxu0 0.0
        %1953 = vmatprep.subr.mxu0 0.0
        %1954 = vmatpush1.msra.mxu0 0.0
        %1955 = vmatprep.subr.mxu0 0.0
        %1956 = vmatpush1.msra.mxu0 0.0
        %1957 = vmatprep.subr.mxu0 0.0
        %1958 = vmatpush1.msra.mxu0 0.0
        %1959 = vmatprep.subr.mxu0 0.0
        %1960 = vmatpush1.msra.mxu0 0.0
        %1961 = vmatprep.subr.mxu0 0.0
        %1962 = vmatpush1.msra.mxu0 0.0
        %1963 = vmatprep.subr.mxu0 0.0
        %1964 = vmatpush1.msra.mxu0 0.0
        %1965 = vmatprep.subr.mxu0 0.0
        %1966 = vmatpush1.msra.mxu0 0.0
        %1967 = vmatprep.subr.mxu0 0.0
        %1968 = vmatpush1.msra.mxu0 0.0
        %1969 = vmatprep.subr.mxu0 0.0
        %1970 = vmatpush1.msra.mxu0 %v578
        %1971 = vmatprep.subr.mxu0 0.0
        %1972 = vmatpush1.msra.mxu0 %v577
        %1973 = vmatprep.subr.mxu0 0.0
        %1974 = vmatpush2.msra.mxu0 0.0
        %1975 = vmatprep.subr.mxu0 0.0
        %1976 = vmatpush2.msra.mxu0 0.0
        %1977 = vmatprep.subr.mxu0 0.0
        %1978 = vmatpush2.msra.mxu0 0.0
        %1979 = vmatprep.subr.mxu0 0.0
        %1980 = vmatpush2.msra.mxu0 0.0
        %1981 = vmatprep.subr.mxu0 0.0
        %1982 = vmatpush2.msra.mxu0 0.0
        %1983 = vmatprep.subr.mxu0 0.0
        %1984 = vmatpush2.msra.mxu0 0.0
        %1985 = vmatprep.subr.mxu0 0.0
        %1986 = vmatpush2.msra.mxu0 0.0
        %1987 = vmatprep.subr.mxu0 0.0
        %1988 = vmatpush2.msra.mxu0 0.0
        %1989 = vmatprep.subr.mxu0 0.0
        %1990 = vmatpush2.msra.mxu0 0.0
        %1991 = vmatprep.subr.mxu0 0.0
        %1992 = vmatpush2.msra.mxu0 0.0
        %1993 = vmatprep.subr.mxu0 0.0
        %1994 = vmatpush2.msra.mxu0 0.0
        %1995 = vmatprep.subr.mxu0 0.0
        %1996 = vmatpush2.msra.mxu0 0.0
        %1997 = vmatprep.subr.mxu0 0.0
        %1998 = vmatpush2.msra.mxu0 0.0
        %1999 = vmatprep.subr.mxu0 0.0
        %2000 = vmatpush2.msra.mxu0 0.0
        %2001 = vmatprep.subr.mxu0 0.0
        %2002 = vmatpush2.msra.mxu0 0.0
        %2003 = vmatprep.subr.mxu0 0.0
        %2004 = vmatpush2.msra.mxu0 0.0
        %2005 = vmatprep.mubr.f32.mxu0 0.0
        %2006 = vmatmul.mubr.f32.gmra.mxu0 %v1939
        %v2007 = vpop.f32.mrf.mxu0
        %v2008 = vadd.f32 %v592, %v2007
        %v2009 = vpop.f32.mrf.mxu0
        %2010 = vdwg.mxu0
        %v2011 = vmax.f32 %v2008, 0.0
        %s2012 = scalar_lea.vmem [#allocation5], 448
        %v2013 = vld [vmem:[%s2012] sm:$0xff]
        %v2014 = vld [vmem:[%s2012 + $0x8] sm:$0xff]
        %v2015 = vld [vmem:[%s2012 + $0x10] sm:$0xff]
        %v2016 = vld [vmem:[%s2012 + $0x18] sm:$0xff]
        %v2017 = vld [vmem:[%s2012 + $0x20] sm:$0xff]
        %v2018 = vld [vmem:[%s2012 + $0x28] sm:$0xff]
        %v2019 = vld [vmem:[%s2012 + $0x30] sm:$0xff]
        %v2020 = vld [vmem:[%s2012 + $0x38] sm:$0xff]
        %v2022 = vsel %vm502, %v2011, 0
        %2024 = vmatprep.subr.mxu0 0.0
        %2025 = vmatpush1.msra.mxu0 0.0
        %2026 = vmatprep.subr.mxu0 0.0
        %2027 = vmatpush1.msra.mxu0 0.0
        %2028 = vmatprep.subr.mxu0 0.0
        %2029 = vmatpush1.msra.mxu0 0.0
        %2030 = vmatprep.subr.mxu0 0.0
        %2031 = vmatpush1.msra.mxu0 0.0
        %2032 = vmatprep.subr.mxu0 0.0
        %2033 = vmatpush1.msra.mxu0 0.0
        %2034 = vmatprep.subr.mxu0 0.0
        %2035 = vmatpush1.msra.mxu0 0.0
        %2036 = vmatprep.subr.mxu0 0.0
        %2037 = vmatpush1.msra.mxu0 0.0
        %2038 = vmatprep.subr.mxu0 0.0
        %2039 = vmatpush1.msra.mxu0 0.0
        %2040 = vmatprep.subr.mxu0 0.0
        %2041 = vmatpush1.msra.mxu0 0.0
        %2042 = vmatprep.subr.mxu0 0.0
        %2043 = vmatpush1.msra.mxu0 0.0
        %2044 = vmatprep.subr.mxu0 0.0
        %2045 = vmatpush1.msra.mxu0 0.0
        %2046 = vmatprep.subr.mxu0 0.0
        %2047 = vmatpush1.msra.mxu0 0.0
        %2048 = vmatprep.subr.mxu0 %v2020
        %2049 = vmatpush1.msra.mxu0 %v2019
        %2050 = vmatprep.subr.mxu0 %v2018
        %2051 = vmatpush1.msra.mxu0 %v2017
        %2052 = vmatprep.subr.mxu0 %v2016
        %2053 = vmatpush1.msra.mxu0 %v2015
        %2054 = vmatprep.subr.mxu0 %v2014
        %2055 = vmatpush1.msra.mxu0 %v2013
        %2056 = vmatprep.subr.mxu0 0.0
        %2057 = vmatpush2.msra.mxu0 0.0
        %2058 = vmatprep.subr.mxu0 0.0
        %2059 = vmatpush2.msra.mxu0 0.0
        %2060 = vmatprep.subr.mxu0 0.0
        %2061 = vmatpush2.msra.mxu0 0.0
        %2062 = vmatprep.subr.mxu0 0.0
        %2063 = vmatpush2.msra.mxu0 0.0
        %2064 = vmatprep.subr.mxu0 0.0
        %2065 = vmatpush2.msra.mxu0 0.0
        %2066 = vmatprep.subr.mxu0 0.0
        %2067 = vmatpush2.msra.mxu0 0.0
        %2068 = vmatprep.subr.mxu0 0.0
        %2069 = vmatpush2.msra.mxu0 0.0
        %2070 = vmatprep.subr.mxu0 0.0
        %2071 = vmatpush2.msra.mxu0 0.0
        %2072 = vmatprep.subr.mxu0 0.0
        %2073 = vmatpush2.msra.mxu0 0.0
        %2074 = vmatprep.subr.mxu0 0.0
        %2075 = vmatpush2.msra.mxu0 0.0
        %2076 = vmatprep.subr.mxu0 0.0
        %2077 = vmatpush2.msra.mxu0 0.0
        %2078 = vmatprep.subr.mxu0 0.0
        %2079 = vmatpush2.msra.mxu0 0.0
        %2080 = vmatprep.subr.mxu0 0.0
        %2081 = vmatpush2.msra.mxu0 0.0
        %2082 = vmatprep.subr.mxu0 0.0
        %2083 = vmatpush2.msra.mxu0 0.0
        %2084 = vmatprep.subr.mxu0 0.0
        %2085 = vmatpush2.msra.mxu0 0.0
        %2086 = vmatprep.subr.mxu0 0.0
        %2087 = vmatpush2.msra.mxu0 0.0
        %2088 = vmatprep.mubr.f32.mxu0 0.0
        %2089 = vmatmul.mubr.f32.gmra.mxu0 %v2022
        %v2090 = vpop.f32.mrf.mxu0
        %v2091 = vadd.f32 0.0, %v2090
        %v2092 = vpop.f32.mrf.mxu0
        %v2093 = vadd.f32 0.0, %v2092
        %2094 = vdwg.mxu0
        %v2095 = vadd.f32 %v1907, %v2091
        %v2096 = vadd.f32 %v1908, %v2093
        %v2097 = vmax.f32 %v2095, 0.0
        %v2098 = vmax.f32 %v2096, 0.0
        %2099 = vst [vmem:[%s392] sm:$0xff] %v2097
        %2100 = vst [vmem:[%s392 + $0x8] sm:$0xff] %v2098
        %s2101 = sand.u32 %s234, 1
        %s2102 = scalar_lea.sflag [#allocation4], %s2101
        %s2103 = sand.u32 %s234, 1
        %s2104 = smul.addr %s2103, 16
        %s2105 = scalar_lea.vmem [#allocation8], %s2104
        // Predicated region
        $region69: #{tpu_custom_call.1} parent=55 // pred_check
          %p2106 = pneg %p244
        $region70: #{tpu_custom_call.1} parent=55 // pred_check_branch
          %2108 = sbr.rel (%p2106) target = $region72
        $region71: #{tpu_custom_call.1} parent=55 // pred_region
          %s2110 = ssub.s32 256, 256
          %2111 = vsyncadd %s2102, %s2110
          %s2112 = smul.addr %s27, 2
          %s2113 = smul.addr %s2112, 128
          %s2114 = scalar_lea.hbm %s9, %s2113
          %s2116 = sshll.u32 %s2105, 4
          %s2117 = int_to_ptr.vmem [resolvable:$true] %s2116
          %2119 = dma.vmem_to_hbm [thread:$0]  %s2117, 256, %s2114, %s2102
        $region72: #{tpu_custom_call.1} parent=55 // pred_fallthru
          _
      $region56: #{tpu_custom_call.1} parent=5 // pred_fallthru
        _
      %p2120 = scmp.le.s32.totalorder 2, %s22
      // Predicated region
      $region73: #{tpu_custom_call.1} parent=5 // pred_check
        %p2121 = pneg %p2120
      $region74: #{tpu_custom_call.1} parent=5 // pred_check_branch
        %2123 = sbr.rel (%p2121) target = $region76
      $region75: #{tpu_custom_call.1} parent=5 // pred_region
        %s2124 = ssub.s32 %s22, 2
        // Predicated region
        $region77: #{tpu_custom_call.1} parent=75 // pred_check
          %p2125 = pneg %p250
        $region78: #{tpu_custom_call.1} parent=75 // pred_check_branch
          %2127 = sbr.rel (%p2125) target = $region80
        $region79: #{tpu_custom_call.1} parent=75 // pred_region
          %s2128 = sand.u32 %s235, 1
          %s2129 = scalar_lea.sflag [#allocation4], %s2128
          %s2130 = sand.u32 %s235, 1
          %s2131 = smul.addr %s2130, 16
          %s2132 = scalar_lea.vmem [#allocation8], %s2131
          %2133 = dma.done %s2129, 256
        $region80: #{tpu_custom_call.1} parent=75 // pred_fallthru
          _
      $region76: #{tpu_custom_call.1} parent=5 // pred_fallthru
        _
    $region6: #{tpu_custom_call.1} parent=1 // loop_footer
      %s26 = sadd.s32 1, %s22
    $region7: #{tpu_custom_call.1} parent=1 // loop_footer_branch
      %21 = sbr.rel target = $region3
    $region8: #{tpu_custom_call.1} parent=1 // loop_exit
      _
    %2134 = vsyncpa [#allocation3], 1
    %s2135 = scalar_lea.sflag [#allocation3], 1
    %2136 = vsyncpa %s2135, 1
    %2137 = vsyncpa [#allocation6], 1
    %2138 = vsyncpa [#allocation4], 1
    %s2139 = scalar_lea.sflag [#allocation4], 1
    %2140 = vsyncpa %s2139, 1

</llo_original>
